<compile_context>
chip_gen: v7x
topology: tpu7x:2x2x1
jax: 0.10.0
libtpu: 0.0.40
codegen_flags: <defaults>
</compile_context>

<pallas_src>
import functools

import numpy as np
import jax
import jax.numpy as jnp
from jax.experimental import pallas as pl
from jax.experimental.pallas import tpu as pltpu

MEAN = jnp.array([104.0510072177276, 112.51448910834733, 116.67603893449996],
                 dtype=jnp.float32)

LANE = 128                               # pad output channels to full lanes
VMEM_LIMIT_BYTES = 32 * 1024 * 1024      # explicit scoped-VMEM cap (v5e..v7x safe)


def _round_up(n, m):
    return ((n + m - 1) // m) * m


# ----------------------------- Pallas kernels ------------------------------

def _conv3x3_relu_kernel(x_ref, off_ref, mask_ref, w_ref, b_ref, o_ref, *, width):
    """Fused (x - off) -> Conv3x3(pad=1) -> +bias -> ReLU for one image.

    x_ref   : (1, H*W, Cin)  flattened NHWC image rows (r = h*W + w)
    off_ref : (1, Cin)       per-channel offset (dataset mean for conv1, else 0)
    mask_ref: (9, H*W, 1)    per-tap validity mask (implements the zero padding)
    w_ref   : (9, Cin, Np)   per-tap weights, output channels padded to 128
    b_ref   : (1, Np)        bias, padded to Np
    o_ref   : (1, H*W, Np)   lane-dense conv output (pre-pool)

    Conv = 9 accumulating shifted matmuls: the image stays resident in VMEM,
    pltpu.roll supplies the (dy, dx) spatial shift in flattened row space, and
    the mask zeroes rows whose tap falls outside the image (== zero padding
    applied after the mean subtraction -> exact PyTorch semantics).
    """
    m = x_ref.shape[1]
    n_pad = w_ref.shape[2]
    x = x_ref[0] - off_ref[...]                         # (M, Cin) mean folded in
    acc = jnp.zeros((m, n_pad), jnp.float32)
    k = 0
    for dy in (-1, 0, 1):
        for dx in (-1, 0, 1):
            s = dy * width + dx                         # flattened-row shift
            xs = x if s == 0 else pltpu.roll(x, (-s) % m, 0)
            acc = acc + jnp.dot(xs * mask_ref[k], w_ref[k],
                                preferred_element_type=jnp.float32)
            k += 1
    o_ref[0] = jnp.maximum(acc + b_ref[...], 0.0)


def _matmul_bias_kernel(x_ref, w_ref, b_ref, o_ref):
    o_ref[...] = (jnp.dot(x_ref[...], w_ref[...],
                          preferred_element_type=jnp.float32) + b_ref[...])


# --------------------------- Pallas call wrappers ---------------------------

def conv3x3_relu(x_nhwc, w_taps, b_pad, off, masks):
    """Fused conv stage; grid over batch, 'parallel' so TCs split the images."""
    B, H, W, cin = x_nhwc.shape
    n_pad = w_taps.shape[2]
    m = H * W
    x_flat = x_nhwc.reshape(B, m, cin)                  # free layout glue
    return pl.pallas_call(
        functools.partial(_conv3x3_relu_kernel, width=W),
        out_shape=jax.ShapeDtypeStruct((B, m, n_pad), jnp.float32),
        grid=(B,),
        in_specs=[
            pl.BlockSpec((1, m, cin), lambda b: (b, 0, 0)),
            pl.BlockSpec((1, cin), lambda b: (0, 0)),
            pl.BlockSpec((9, m, 1), lambda b: (0, 0, 0)),
            pl.BlockSpec((9, cin, n_pad), lambda b: (0, 0, 0)),
            pl.BlockSpec((1, n_pad), lambda b: (0, 0)),
        ],
        out_specs=pl.BlockSpec((1, m, n_pad), lambda b: (b, 0, 0)),
        compiler_params=pltpu.CompilerParams(
            dimension_semantics=("parallel",),
            vmem_limit_bytes=VMEM_LIMIT_BYTES),
    )(x_flat, off, masks, w_taps, b_pad)


def _pick_tile_m(m, target=256):
    for t in (512, 256, 128, 64, 32, 16, 8):
        if t <= target and m % t == 0:
            return t
    return m


def matmul_bias(x, w_pad, b_pad):
    """x: (M, K), w_pad: (K, Np), b_pad: (1, Np); tiled over M, lane-dense N."""
    m, k = x.shape
    _, n_pad = w_pad.shape
    tm = _pick_tile_m(m)
    return pl.pallas_call(
        _matmul_bias_kernel,
        out_shape=jax.ShapeDtypeStruct((m, n_pad), jnp.float32),
        grid=(m // tm,),
        in_specs=[pl.BlockSpec((tm, k), lambda i: (i, 0)),
                  pl.BlockSpec((k, n_pad), lambda i: (0, 0)),
                  pl.BlockSpec((1, n_pad), lambda i: (0, 0))],
        out_specs=pl.BlockSpec((tm, n_pad), lambda i: (i, 0)),
        compiler_params=pltpu.CompilerParams(
            dimension_semantics=("parallel",),
            vmem_limit_bytes=VMEM_LIMIT_BYTES),
    )(x, w_pad, b_pad)


# ------------------------------ JAX glue ops --------------------------------

def maxpool2(x_nhwc):
    # TODO(synk): fuse the 2x2 pool into the conv kernel epilogue to skip one
    # HBM round trip of the pre-pool activation.
    B, H, W, C = x_nhwc.shape
    return x_nhwc.reshape(B, H // 2, 2, W // 2, 2, C).max(axis=(2, 4))


def _tap_masks(H, W):
    """(9, H*W, 1) validity mask per 3x3 tap; encodes the zero padding."""
    m = H * W
    r = np.arange(m)
    h, w = r // W, r % W
    masks = []
    for dy in (-1, 0, 1):
        for dx in (-1, 0, 1):
            valid = (h + dy >= 0) & (h + dy < H) & (w + dx >= 0) & (w + dx < W)
            masks.append(valid.astype(np.float32))
    return jnp.asarray(np.stack(masks, axis=0)[:, :, None])


def _prep_conv_weights(w_pt, b):
    """(out_c, in_c, 3, 3) PyTorch weight -> (9, in_c, Np) per-tap, lane-padded."""
    out_c, in_c, kh, kw = w_pt.shape
    n_pad = _round_up(max(out_c, LANE), LANE)
    w_taps = jnp.transpose(w_pt, (2, 3, 1, 0)).reshape(kh * kw, in_c, out_c)
    w_taps = jnp.pad(w_taps, ((0, 0), (0, 0), (0, n_pad - out_c)))
    b_pad = jnp.pad(b, (0, n_pad - out_c)).reshape(1, n_pad)
    return w_taps, b_pad


# ------------------------------ model params --------------------------------

def init_params(key, in_c=3, c1=16, c2=32, hw=16, n_out=10):
    k1, k2, k3, k4, k5, k6 = jax.random.split(key, 6)
    h4 = hw // 4
    return {
        "w1": 0.05 * jax.random.normal(k1, (c1, in_c, 3, 3), jnp.float32),
        "b1": 0.01 * jax.random.normal(k2, (c1,), jnp.float32),
        "w2": 0.05 * jax.random.normal(k3, (c2, c1, 3, 3), jnp.float32),
        "b2": 0.01 * jax.random.normal(k4, (c2,), jnp.float32),
        # rows in PyTorch NCHW-flatten order (c * h4 * w4 + h * w4 + w)
        "w3": 0.05 * jax.random.normal(k5, (c2 * h4 * h4, n_out), jnp.float32),
        "b3": 0.01 * jax.random.normal(k6, (n_out,), jnp.float32),
    }


def prepare_params(params, H, W):
    """One-time weight prep (done outside the hot path):
    per-tap lane-padded conv weights, tap masks, mean offset for conv1, and the
    linear weight with its rows permuted from NCHW-flatten to NHWC-flatten."""
    c1 = params["w1"].shape[0]
    c2 = params["w2"].shape[0]
    n_out = params["w3"].shape[1]
    h4, w4 = H // 4, W // 4

    w1_taps, b1_pad = _prep_conv_weights(params["w1"], params["b1"])
    w2_taps, b2_pad = _prep_conv_weights(params["w2"], params["b2"])

    # Fold the pre-linear NHWC->NCHW transpose into the weight (once).
    w3 = params["w3"].reshape(c2, h4, w4, n_out)
    w3 = jnp.transpose(w3, (1, 2, 0, 3)).reshape(h4 * w4 * c2, n_out)
    n3_pad = _round_up(max(n_out, LANE), LANE)
    w3_pad = jnp.pad(w3, ((0, 0), (0, n3_pad - n_out)))
    b3_pad = jnp.pad(params["b3"], (0, n3_pad - n_out)).reshape(1, n3_pad)

    return {
        "c1": c1, "c2": c2, "n_out": n_out,
        "w1_taps": w1_taps, "b1": b1_pad, "off1": MEAN.reshape(1, -1),
        "w2_taps": w2_taps, "b2": b2_pad,
        "off2": jnp.zeros((1, c1), jnp.float32),
        "masks1": _tap_masks(H, W), "masks2": _tap_masks(H // 2, W // 2),
        "w3": w3_pad, "b3": b3_pad,
    }


# ------------------------------ model forward -------------------------------

def v1_forward(x_nchw, prep):
    B, C, H, W = x_nchw.shape

    # NCHW -> NHWC layout glue.  The per-channel mean subtraction is fused into
    # the conv1 kernel, so there is no separate elementwise HBM pass here.
    x = jnp.transpose(x_nchw, (0, 2, 3, 1))

    # module_1: (x - mean) -> Conv(3->16, 3x3, pad 1) + ReLU  (one fused kernel)
    y1 = conv3x3_relu(x, prep["w1_taps"], prep["b1"], prep["off1"], prep["masks1"])
    y1 = y1[:, :, :prep["c1"]].reshape(B, H, W, prep["c1"])
    out_1 = maxpool2(y1)                                   # (B, H/2, W/2, 16)

    # module_2: Conv(16->32, 3x3, pad 1) + ReLU + MaxPool(2)
    H2, W2 = H // 2, W // 2
    y2 = conv3x3_relu(out_1, prep["w2_taps"], prep["b2"], prep["off2"], prep["masks2"])
    y2 = y2[:, :, :prep["c2"]].reshape(B, H2, W2, prep["c2"])
    out_2 = maxpool2(y2)                                   # (B, H/4, W/4, 32)

    # module_3: Flatten + Linear (w3 rows pre-permuted to NHWC -> no transpose)
    flat = out_2.reshape(B, -1)
    out_3 = matmul_bias(flat, prep["w3"], prep["b3"])[:, :prep["n_out"]]
    return out_3


# ---------------------------------- main ------------------------------------

if __name__ == "__main__":
    key = jax.random.PRNGKey(0)
    kx, kp = jax.random.split(key)

    B, C, H, W = 2, 3, 16, 16          # NCHW, 3 channels to match the 3-value mean
    x = jax.random.uniform(kx, (B, C, H, W), jnp.float32, 0.0, 255.0)

    params = init_params(kp, in_c=C, c1=16, c2=32, hw=H, n_out=10)
    prep = prepare_params(params, H, W)

    out = v1_forward(x, prep)
    jax.block_until_ready(out)
    assert out.shape == (B, 10) and out.dtype == jnp.float32
    print("KERNEL_OK")
</pallas_src>

<mosaic_0001>
module attributes {stable_mosaic.version = 11 : i64} {
  func.func @_conv3x3_relu_kernel(%arg0: i32, %arg1: memref<1x256x3xf32, #tpu.memory_space<vmem>>, %arg2: memref<1x3xf32, #tpu.memory_space<vmem>>, %arg3: memref<9x256x1xf32, #tpu.memory_space<vmem>>, %arg4: memref<9x3x128xf32, #tpu.memory_space<vmem>>, %arg5: memref<1x128xf32, #tpu.memory_space<vmem>>, %arg6: memref<1x256x128xf32, #tpu.memory_space<vmem>>) attributes {dimension_semantics = [#tpu.dimension_semantics<parallel>], iteration_bounds = array<i64: 2>, scalar_prefetch = 0 : i64, scratch_operands = 0 : i64, tpu.core_type = #tpu.core_type<tc>, window_params = [{transform_indices = @transform_0, window_bounds = array<i64: 1, 256, 3>}, {pipeline_mode = #tpu.pipeline_mode<synchronous>, transform_indices = @transform_1, window_bounds = array<i64: 1, 3>}, {pipeline_mode = #tpu.pipeline_mode<synchronous>, transform_indices = @transform_2, window_bounds = array<i64: 9, 256, 1>}, {pipeline_mode = #tpu.pipeline_mode<synchronous>, transform_indices = @transform_3, window_bounds = array<i64: 9, 3, 128>}, {pipeline_mode = #tpu.pipeline_mode<synchronous>, transform_indices = @transform_4, window_bounds = array<i64: 1, 128>}, {transform_indices = @transform_5, window_bounds = array<i64: 1, 256, 128>}]} {
    %c0 = arith.constant 0 : index
    %c0_0 = arith.constant 0 : index
    %c0_1 = arith.constant 0 : index
    %0 = vector.load %arg1[%c0, %c0_0, %c0_1] : memref<1x256x3xf32, #tpu.memory_space<vmem>>, vector<1x256x3xf32>
    %1 = vector.shape_cast %0 : vector<1x256x3xf32> to vector<256x3xf32>
    %c0_2 = arith.constant 0 : index
    %c0_3 = arith.constant 0 : index
    %2 = vector.load %arg2[%c0_2, %c0_3] : memref<1x3xf32, #tpu.memory_space<vmem>>, vector<1x3xf32>
    %3 = vector.broadcast %2 : vector<1x3xf32> to vector<256x3xf32>
    %4 = arith.subf %1, %3 : vector<256x3xf32>
    %cst = arith.constant 0.000000e+00 : f32
    %5 = vector.broadcast %cst : f32 to vector<256x128xf32>
    %c17_i32 = arith.constant 17 : i32
    %6 = tpu.dynamic_rotate %4 by %c17_i32 dim 0 : vector<256x3xf32>, i32 -> vector<256x3xf32>
    %c0_4 = arith.constant 0 : index
    %c0_5 = arith.constant 0 : index
    %c0_6 = arith.constant 0 : index
    %7 = vector.load %arg3[%c0_4, %c0_5, %c0_6] : memref<9x256x1xf32, #tpu.memory_space<vmem>>, vector<1x256x1xf32>
    %8 = vector.shape_cast %7 : vector<1x256x1xf32> to vector<256x1xf32>
    %9 = vector.broadcast %8 : vector<256x1xf32> to vector<256x3xf32>
    %10 = arith.mulf %6, %9 : vector<256x3xf32>
    %c0_7 = arith.constant 0 : index
    %c0_8 = arith.constant 0 : index
    %c0_9 = arith.constant 0 : index
    %11 = vector.load %arg4[%c0_7, %c0_8, %c0_9] : memref<9x3x128xf32, #tpu.memory_space<vmem>>, vector<1x3x128xf32>
    %12 = vector.shape_cast %11 : vector<1x3x128xf32> to vector<3x128xf32>
    %cst_10 = arith.constant dense<0.000000e+00> : vector<256x128xf32>
    %13 = tpu.matmul %10, %12, %cst_10 {dimension_numbers = #tpu.dot_dimension_numbers<[1], [0], [0], [1], [0, 0, 1, 1], [], []>} : vector<256x3xf32>, vector<3x128xf32>, vector<256x128xf32> -> vector<256x128xf32>
    %14 = arith.addf %5, %13 : vector<256x128xf32>
    %c16_i32 = arith.constant 16 : i32
    %15 = tpu.dynamic_rotate %4 by %c16_i32 dim 0 : vector<256x3xf32>, i32 -> vector<256x3xf32>
    %c1 = arith.constant 1 : index
    %c0_11 = arith.constant 0 : index
    %c0_12 = arith.constant 0 : index
    %16 = vector.load %arg3[%c1, %c0_11, %c0_12] : memref<9x256x1xf32, #tpu.memory_space<vmem>>, vector<1x256x1xf32>
    %17 = vector.shape_cast %16 : vector<1x256x1xf32> to vector<256x1xf32>
    %18 = vector.broadcast %17 : vector<256x1xf32> to vector<256x3xf32>
    %19 = arith.mulf %15, %18 : vector<256x3xf32>
    %c1_13 = arith.constant 1 : index
    %c0_14 = arith.constant 0 : index
    %c0_15 = arith.constant 0 : index
    %20 = vector.load %arg4[%c1_13, %c0_14, %c0_15] : memref<9x3x128xf32, #tpu.memory_space<vmem>>, vector<1x3x128xf32>
    %21 = vector.shape_cast %20 : vector<1x3x128xf32> to vector<3x128xf32>
    %cst_16 = arith.constant dense<0.000000e+00> : vector<256x128xf32>
    %22 = tpu.matmul %19, %21, %cst_16 {dimension_numbers = #tpu.dot_dimension_numbers<[1], [0], [0], [1], [0, 0, 1, 1], [], []>} : vector<256x3xf32>, vector<3x128xf32>, vector<256x128xf32> -> vector<256x128xf32>
    %23 = arith.addf %14, %22 : vector<256x128xf32>
    %c15_i32 = arith.constant 15 : i32
    %24 = tpu.dynamic_rotate %4 by %c15_i32 dim 0 : vector<256x3xf32>, i32 -> vector<256x3xf32>
    %c2 = arith.constant 2 : index
    %c0_17 = arith.constant 0 : index
    %c0_18 = arith.constant 0 : index
    %25 = vector.load %arg3[%c2, %c0_17, %c0_18] : memref<9x256x1xf32, #tpu.memory_space<vmem>>, vector<1x256x1xf32>
    %26 = vector.shape_cast %25 : vector<1x256x1xf32> to vector<256x1xf32>
    %27 = vector.broadcast %26 : vector<256x1xf32> to vector<256x3xf32>
    %28 = arith.mulf %24, %27 : vector<256x3xf32>
    %c2_19 = arith.constant 2 : index
    %c0_20 = arith.constant 0 : index
    %c0_21 = arith.constant 0 : index
    %29 = vector.load %arg4[%c2_19, %c0_20, %c0_21] : memref<9x3x128xf32, #tpu.memory_space<vmem>>, vector<1x3x128xf32>
    %30 = vector.shape_cast %29 : vector<1x3x128xf32> to vector<3x128xf32>
    %cst_22 = arith.constant dense<0.000000e+00> : vector<256x128xf32>
    %31 = tpu.matmul %28, %30, %cst_22 {dimension_numbers = #tpu.dot_dimension_numbers<[1], [0], [0], [1], [0, 0, 1, 1], [], []>} : vector<256x3xf32>, vector<3x128xf32>, vector<256x128xf32> -> vector<256x128xf32>
    %32 = arith.addf %23, %31 : vector<256x128xf32>
    %c1_i32 = arith.constant 1 : i32
    %33 = tpu.dynamic_rotate %4 by %c1_i32 dim 0 : vector<256x3xf32>, i32 -> vector<256x3xf32>
    %c3 = arith.constant 3 : index
    %c0_23 = arith.constant 0 : index
    %c0_24 = arith.constant 0 : index
    %34 = vector.load %arg3[%c3, %c0_23, %c0_24] : memref<9x256x1xf32, #tpu.memory_space<vmem>>, vector<1x256x1xf32>
    %35 = vector.shape_cast %34 : vector<1x256x1xf32> to vector<256x1xf32>
    %36 = vector.broadcast %35 : vector<256x1xf32> to vector<256x3xf32>
    %37 = arith.mulf %33, %36 : vector<256x3xf32>
    %c3_25 = arith.constant 3 : index
    %c0_26 = arith.constant 0 : index
    %c0_27 = arith.constant 0 : index
    %38 = vector.load %arg4[%c3_25, %c0_26, %c0_27] : memref<9x3x128xf32, #tpu.memory_space<vmem>>, vector<1x3x128xf32>
    %39 = vector.shape_cast %38 : vector<1x3x128xf32> to vector<3x128xf32>
    %cst_28 = arith.constant dense<0.000000e+00> : vector<256x128xf32>
    %40 = tpu.matmul %37, %39, %cst_28 {dimension_numbers = #tpu.dot_dimension_numbers<[1], [0], [0], [1], [0, 0, 1, 1], [], []>} : vector<256x3xf32>, vector<3x128xf32>, vector<256x128xf32> -> vector<256x128xf32>
    %41 = arith.addf %32, %40 : vector<256x128xf32>
    %c4 = arith.constant 4 : index
    %c0_29 = arith.constant 0 : index
    %c0_30 = arith.constant 0 : index
    %42 = vector.load %arg3[%c4, %c0_29, %c0_30] : memref<9x256x1xf32, #tpu.memory_space<vmem>>, vector<1x256x1xf32>
    %43 = vector.shape_cast %42 : vector<1x256x1xf32> to vector<256x1xf32>
    %44 = vector.broadcast %43 : vector<256x1xf32> to vector<256x3xf32>
    %45 = arith.mulf %4, %44 : vector<256x3xf32>
    %c4_31 = arith.constant 4 : index
    %c0_32 = arith.constant 0 : index
    %c0_33 = arith.constant 0 : index
    %46 = vector.load %arg4[%c4_31, %c0_32, %c0_33] : memref<9x3x128xf32, #tpu.memory_space<vmem>>, vector<1x3x128xf32>
    %47 = vector.shape_cast %46 : vector<1x3x128xf32> to vector<3x128xf32>
    %cst_34 = arith.constant dense<0.000000e+00> : vector<256x128xf32>
    %48 = tpu.matmul %45, %47, %cst_34 {dimension_numbers = #tpu.dot_dimension_numbers<[1], [0], [0], [1], [0, 0, 1, 1], [], []>} : vector<256x3xf32>, vector<3x128xf32>, vector<256x128xf32> -> vector<256x128xf32>
    %49 = arith.addf %41, %48 : vector<256x128xf32>
    %c255_i32 = arith.constant 255 : i32
    %50 = tpu.dynamic_rotate %4 by %c255_i32 dim 0 : vector<256x3xf32>, i32 -> vector<256x3xf32>
    %c5 = arith.constant 5 : index
    %c0_35 = arith.constant 0 : index
    %c0_36 = arith.constant 0 : index
    %51 = vector.load %arg3[%c5, %c0_35, %c0_36] : memref<9x256x1xf32, #tpu.memory_space<vmem>>, vector<1x256x1xf32>
    %52 = vector.shape_cast %51 : vector<1x256x1xf32> to vector<256x1xf32>
    %53 = vector.broadcast %52 : vector<256x1xf32> to vector<256x3xf32>
    %54 = arith.mulf %50, %53 : vector<256x3xf32>
    %c5_37 = arith.constant 5 : index
    %c0_38 = arith.constant 0 : index
    %c0_39 = arith.constant 0 : index
    %55 = vector.load %arg4[%c5_37, %c0_38, %c0_39] : memref<9x3x128xf32, #tpu.memory_space<vmem>>, vector<1x3x128xf32>
    %56 = vector.shape_cast %55 : vector<1x3x128xf32> to vector<3x128xf32>
    %cst_40 = arith.constant dense<0.000000e+00> : vector<256x128xf32>
    %57 = tpu.matmul %54, %56, %cst_40 {dimension_numbers = #tpu.dot_dimension_numbers<[1], [0], [0], [1], [0, 0, 1, 1], [], []>} : vector<256x3xf32>, vector<3x128xf32>, vector<256x128xf32> -> vector<256x128xf32>
    %58 = arith.addf %49, %57 : vector<256x128xf32>
    %c241_i32 = arith.constant 241 : i32
    %59 = tpu.dynamic_rotate %4 by %c241_i32 dim 0 : vector<256x3xf32>, i32 -> vector<256x3xf32>
    %c6 = arith.constant 6 : index
    %c0_41 = arith.constant 0 : index
    %c0_42 = arith.constant 0 : index
    %60 = vector.load %arg3[%c6, %c0_41, %c0_42] : memref<9x256x1xf32, #tpu.memory_space<vmem>>, vector<1x256x1xf32>
    %61 = vector.shape_cast %60 : vector<1x256x1xf32> to vector<256x1xf32>
    %62 = vector.broadcast %61 : vector<256x1xf32> to vector<256x3xf32>
    %63 = arith.mulf %59, %62 : vector<256x3xf32>
    %c6_43 = arith.constant 6 : index
    %c0_44 = arith.constant 0 : index
    %c0_45 = arith.constant 0 : index
    %64 = vector.load %arg4[%c6_43, %c0_44, %c0_45] : memref<9x3x128xf32, #tpu.memory_space<vmem>>, vector<1x3x128xf32>
    %65 = vector.shape_cast %64 : vector<1x3x128xf32> to vector<3x128xf32>
    %cst_46 = arith.constant dense<0.000000e+00> : vector<256x128xf32>
    %66 = tpu.matmul %63, %65, %cst_46 {dimension_numbers = #tpu.dot_dimension_numbers<[1], [0], [0], [1], [0, 0, 1, 1], [], []>} : vector<256x3xf32>, vector<3x128xf32>, vector<256x128xf32> -> vector<256x128xf32>
    %67 = arith.addf %58, %66 : vector<256x128xf32>
    %c240_i32 = arith.constant 240 : i32
    %68 = tpu.dynamic_rotate %4 by %c240_i32 dim 0 : vector<256x3xf32>, i32 -> vector<256x3xf32>
    %c7 = arith.constant 7 : index
    %c0_47 = arith.constant 0 : index
    %c0_48 = arith.constant 0 : index
    %69 = vector.load %arg3[%c7, %c0_47, %c0_48] : memref<9x256x1xf32, #tpu.memory_space<vmem>>, vector<1x256x1xf32>
    %70 = vector.shape_cast %69 : vector<1x256x1xf32> to vector<256x1xf32>
    %71 = vector.broadcast %70 : vector<256x1xf32> to vector<256x3xf32>
    %72 = arith.mulf %68, %71 : vector<256x3xf32>
    %c7_49 = arith.constant 7 : index
    %c0_50 = arith.constant 0 : index
    %c0_51 = arith.constant 0 : index
    %73 = vector.load %arg4[%c7_49, %c0_50, %c0_51] : memref<9x3x128xf32, #tpu.memory_space<vmem>>, vector<1x3x128xf32>
    %74 = vector.shape_cast %73 : vector<1x3x128xf32> to vector<3x128xf32>
    %cst_52 = arith.constant dense<0.000000e+00> : vector<256x128xf32>
    %75 = tpu.matmul %72, %74, %cst_52 {dimension_numbers = #tpu.dot_dimension_numbers<[1], [0], [0], [1], [0, 0, 1, 1], [], []>} : vector<256x3xf32>, vector<3x128xf32>, vector<256x128xf32> -> vector<256x128xf32>
    %76 = arith.addf %67, %75 : vector<256x128xf32>
    %c239_i32 = arith.constant 239 : i32
    %77 = tpu.dynamic_rotate %4 by %c239_i32 dim 0 : vector<256x3xf32>, i32 -> vector<256x3xf32>
    %c8 = arith.constant 8 : index
    %c0_53 = arith.constant 0 : index
    %c0_54 = arith.constant 0 : index
    %78 = vector.load %arg3[%c8, %c0_53, %c0_54] : memref<9x256x1xf32, #tpu.memory_space<vmem>>, vector<1x256x1xf32>
    %79 = vector.shape_cast %78 : vector<1x256x1xf32> to vector<256x1xf32>
    %80 = vector.broadcast %79 : vector<256x1xf32> to vector<256x3xf32>
    %81 = arith.mulf %77, %80 : vector<256x3xf32>
    %c8_55 = arith.constant 8 : index
    %c0_56 = arith.constant 0 : index
    %c0_57 = arith.constant 0 : index
    %82 = vector.load %arg4[%c8_55, %c0_56, %c0_57] : memref<9x3x128xf32, #tpu.memory_space<vmem>>, vector<1x3x128xf32>
    %83 = vector.shape_cast %82 : vector<1x3x128xf32> to vector<3x128xf32>
    %cst_58 = arith.constant dense<0.000000e+00> : vector<256x128xf32>
    %84 = tpu.matmul %81, %83, %cst_58 {dimension_numbers = #tpu.dot_dimension_numbers<[1], [0], [0], [1], [0, 0, 1, 1], [], []>} : vector<256x3xf32>, vector<3x128xf32>, vector<256x128xf32> -> vector<256x128xf32>
    %85 = arith.addf %76, %84 : vector<256x128xf32>
    %c0_59 = arith.constant 0 : index
    %c0_60 = arith.constant 0 : index
    %86 = vector.load %arg5[%c0_59, %c0_60] : memref<1x128xf32, #tpu.memory_space<vmem>>, vector<1x128xf32>
    %87 = vector.broadcast %86 : vector<1x128xf32> to vector<256x128xf32>
    %88 = arith.addf %85, %87 : vector<256x128xf32>
    %cst_61 = arith.constant 0.000000e+00 : f32
    %89 = vector.broadcast %cst_61 : f32 to vector<256x128xf32>
    %90 = arith.maximumf %88, %89 : vector<256x128xf32>
    %c0_62 = arith.constant 0 : index
    %c0_63 = arith.constant 0 : index
    %c0_64 = arith.constant 0 : index
    %91 = vector.load %arg6[%c0_62, %c0_63, %c0_64] : memref<1x256x128xf32, #tpu.memory_space<vmem>>, vector<1x256x128xf32>
    %92 = vector.shape_cast %91 : vector<1x256x128xf32> to vector<256x128xf32>
    %93 = vector.shape_cast %90 : vector<256x128xf32> to vector<1x256x128xf32>
    tpu.vector_store %arg6[%c0_62, %c0_63, %c0_64], %93 {strides = array<i32>} : memref<1x256x128xf32, #tpu.memory_space<vmem>>, vector<1x256x128xf32>,
    return
  }
  func.func @transform_0(%arg0: i32) -> (i32, i32, i32) {
    %c0_i32 = arith.constant 0 : i32
    %c0_i32_0 = arith.constant 0 : i32
    %c0_i32_1 = arith.constant 0 : i32
    return %arg0, %c0_i32, %c0_i32_0 : i32, i32, i32
  }
  func.func @transform_1(%arg0: i32) -> (i32, i32) {
    %c0_i32 = arith.constant 0 : i32
    %c0_i32_0 = arith.constant 0 : i32
    %c0_i32_1 = arith.constant 0 : i32
    return %c0_i32, %c0_i32_0 : i32, i32
  }
  func.func @transform_2(%arg0: i32) -> (i32, i32, i32) {
    %c0_i32 = arith.constant 0 : i32
    %c0_i32_0 = arith.constant 0 : i32
    %c0_i32_1 = arith.constant 0 : i32
    %c0_i32_2 = arith.constant 0 : i32
    return %c0_i32, %c0_i32_0, %c0_i32_1 : i32, i32, i32
  }
  func.func @transform_3(%arg0: i32) -> (i32, i32, i32) {
    %c0_i32 = arith.constant 0 : i32
    %c0_i32_0 = arith.constant 0 : i32
    %c0_i32_1 = arith.constant 0 : i32
    %c0_i32_2 = arith.constant 0 : i32
    return %c0_i32, %c0_i32_0, %c0_i32_1 : i32, i32, i32
  }
  func.func @transform_4(%arg0: i32) -> (i32, i32) {
    %c0_i32 = arith.constant 0 : i32
    %c0_i32_0 = arith.constant 0 : i32
    %c0_i32_1 = arith.constant 0 : i32
    return %c0_i32, %c0_i32_0 : i32, i32
  }
  func.func @transform_5(%arg0: i32) -> (i32, i32, i32) {
    %c0_i32 = arith.constant 0 : i32
    %c0_i32_0 = arith.constant 0 : i32
    %c0_i32_1 = arith.constant 0 : i32
    return %arg0, %c0_i32, %c0_i32_0 : i32, i32, i32
  }
}

</mosaic_0001>

<llo_original>
// kernel: tpu_custom_call.1
$region0: #{tpu_custom_call.1}
  #allocation0 [shape = 'u32[]', space=smem, size = 0x4, offset = 0x4, fixed_abs, tag = 'smem constant byte address 0x4 - core index']
  #allocation1 [shape = 'u32[144,128]{1,0:T(1,128)}', space=vmem, size = 0x12000, scoped, tag = 'internal scratch']
  %s0 = inlined_call_operand.vmem [shape: f32[2,256,3], index: 0, kind: input, shape index: {}]
  %s1 = inlined_call_operand.vmem [shape: f32[1,3], index: 1, kind: input, shape index: {}]
  %s2 = inlined_call_operand.vmem [shape: f32[9,256,1], index: 2, kind: input, shape index: {}]
  %s3 = inlined_call_operand.vmem [shape: f32[9,3,128], index: 3, kind: input, shape index: {}]
  %s4 = inlined_call_operand.vmem [shape: f32[1,128], index: 4, kind: input, shape index: {}]
  %s5 = inlined_call_operand.hbm [shape: f32[2,256,128], index: 5, kind: output, shape index: {}]
  %s6 = sld [smem:[#allocation0]]
  $region53: #{tpu_custom_call.1} parent=0
    _
  %s8 = ssub.s32 1, %s6
  %s9 = scalar_select 0, %s8, %s6
  $region1: #{tpu_custom_call.1} parent=0
    #allocation2 [shape = 'u8[262144]{0}', space=vmem, size = 0x40000, scoped, tag = 'output window, operand 0']
    #allocation3 [shape = 's32[2]{0}', space=sflag, size = 0x8, scoped, tag = 'scoped memory for tpu_custom_call.1']
    %10 = vsyncpa [#allocation3], 0
    %s11 = scalar_lea.sflag [#allocation3], 1
    %12 = vsyncpa %s11, 0
    loop: start=0, step=1, limit=4
    $region2: #{tpu_custom_call.1} parent=1 // loop_pre_header
      _
    $region3: #{tpu_custom_call.1} parent=1 // loop_header
      %s14 = sphi 0, %s18
      %p15 = scmp.ge.s32.totalorder %s14, 4
      %s24 = sphi 0, %s26
      %s27 = sphi 0, %s24
      %s28 = sphi 0, %s27
      %s44 = sphi 0, %s28
      %s48 = sphi 0, %s48
      %s50 = sphi 0, %s48
      %s51 = sphi 0, %s50
      %s65 = sphi 0, %s51
      %s69 = sphi 0, %s69
      %s71 = sphi 0, %s69
      %s72 = sphi 0, %s71
      %s86 = sphi 0, %s72
      %s90 = sphi 0, %s90
      %s92 = sphi 0, %s90
      %s93 = sphi 0, %s92
      %s107 = sphi 0, %s93
      %s111 = sphi 0, %s111
      %s113 = sphi 0, %s111
      %s114 = sphi 0, %s113
      %s128 = sphi 0, %s114
      %s134 = sphi 0, %s136
      %s137 = sphi 0, %s134
      %s138 = sphi 0, %s137
      %s154 = sphi 0, %s138
    $region4: #{tpu_custom_call.1} parent=1 // loop_header_branch
      %17 = sbr.rel (%p15) target = $region8
    $region5: #{tpu_custom_call.1} parent=1 // loop_body
      %s19 = ssub.s32 %s14, 1
      %s20 = ssub.s32 %s14, 2
      %s21 = sadd.s32 %s14, 1
      %s22 = ssub.s32 %s14, %s21
      %p23 = scmp.eq.s32.totalorder %s22, 0
      %s25 = sadd.s32 %s24, 1
      %s26 = scalar_select %p23, %s24, %s25
      %p29 = pneg %p23
      %p30 = scmp.eq.s32.totalorder %s14, 1
      %p31 = por %p29, %p30
      %p32 = scmp.ne.s32.totalorder %s24, %s27
      %p33 = scmp.eq.s32.totalorder %s14, 0
      %p34 = por %p32, %p33
      %p35 = scmp.ne.s32.totalorder %s24, %s27
      %p36 = scmp.eq.s32.totalorder %s19, 1
      %p37 = por %p35, %p36
      %p38 = scmp.ne.s32.totalorder %s27, %s28
      %p39 = scmp.eq.s32.totalorder %s19, 0
      %p40 = por %p38, %p39
      %p41 = scmp.ne.s32.totalorder %s27, %s28
      %p42 = scmp.eq.s32.totalorder %s20, 1
      %p43 = por %p41, %p42
      %p45 = scmp.ne.s32.totalorder %s28, %s44
      %p46 = scmp.eq.s32.totalorder %s20, 0
      %p47 = por %p45, %p46
      %s49 = sadd.s32 %s48, 1
      %p52 = scmp.eq.s32.totalorder %s14, 1
      %p53 = scmp.ne.s32.totalorder %s48, %s50
      %p54 = scmp.eq.s32.totalorder %s14, 0
      %p55 = por %p53, %p54
      %p56 = scmp.ne.s32.totalorder %s48, %s50
      %p57 = scmp.eq.s32.totalorder %s19, 1
      %p58 = por %p56, %p57
      %p59 = scmp.ne.s32.totalorder %s50, %s51
      %p60 = scmp.eq.s32.totalorder %s19, 0
      %p61 = por %p59, %p60
      %p62 = scmp.ne.s32.totalorder %s50, %s51
      %p63 = scmp.eq.s32.totalorder %s20, 1
      %p64 = por %p62, %p63
      %p66 = scmp.ne.s32.totalorder %s51, %s65
      %p67 = scmp.eq.s32.totalorder %s20, 0
      %p68 = por %p66, %p67
      %s70 = sadd.s32 %s69, 1
      %p73 = scmp.eq.s32.totalorder %s14, 1
      %p74 = scmp.ne.s32.totalorder %s69, %s71
      %p75 = scmp.eq.s32.totalorder %s14, 0
      %p76 = por %p74, %p75
      %p77 = scmp.ne.s32.totalorder %s69, %s71
      %p78 = scmp.eq.s32.totalorder %s19, 1
      %p79 = por %p77, %p78
      %p80 = scmp.ne.s32.totalorder %s71, %s72
      %p81 = scmp.eq.s32.totalorder %s19, 0
      %p82 = por %p80, %p81
      %p83 = scmp.ne.s32.totalorder %s71, %s72
      %p84 = scmp.eq.s32.totalorder %s20, 1
      %p85 = por %p83, %p84
      %p87 = scmp.ne.s32.totalorder %s72, %s86
      %p88 = scmp.eq.s32.totalorder %s20, 0
      %p89 = por %p87, %p88
      %s91 = sadd.s32 %s90, 1
      %p94 = scmp.eq.s32.totalorder %s14, 1
      %p95 = scmp.ne.s32.totalorder %s90, %s92
      %p96 = scmp.eq.s32.totalorder %s14, 0
      %p97 = por %p95, %p96
      %p98 = scmp.ne.s32.totalorder %s90, %s92
      %p99 = scmp.eq.s32.totalorder %s19, 1
      %p100 = por %p98, %p99
      %p101 = scmp.ne.s32.totalorder %s92, %s93
      %p102 = scmp.eq.s32.totalorder %s19, 0
      %p103 = por %p101, %p102
      %p104 = scmp.ne.s32.totalorder %s92, %s93
      %p105 = scmp.eq.s32.totalorder %s20, 1
      %p106 = por %p104, %p105
      %p108 = scmp.ne.s32.totalorder %s93, %s107
      %p109 = scmp.eq.s32.totalorder %s20, 0
      %p110 = por %p108, %p109
      %s112 = sadd.s32 %s111, 1
      %p115 = scmp.eq.s32.totalorder %s14, 1
      %p116 = scmp.ne.s32.totalorder %s111, %s113
      %p117 = scmp.eq.s32.totalorder %s14, 0
      %p118 = por %p116, %p117
      %p119 = scmp.ne.s32.totalorder %s111, %s113
      %p120 = scmp.eq.s32.totalorder %s19, 1
      %p121 = por %p119, %p120
      %p122 = scmp.ne.s32.totalorder %s113, %s114
      %p123 = scmp.eq.s32.totalorder %s19, 0
      %p124 = por %p122, %p123
      %p125 = scmp.ne.s32.totalorder %s113, %s114
      %p126 = scmp.eq.s32.totalorder %s20, 1
      %p127 = por %p125, %p126
      %p129 = scmp.ne.s32.totalorder %s114, %s128
      %p130 = scmp.eq.s32.totalorder %s20, 0
      %p131 = por %p129, %p130
      %s132 = ssub.s32 %s14, %s21
      %p133 = scmp.eq.s32.totalorder %s132, 0
      %s135 = sadd.s32 %s134, 1
      %s136 = scalar_select %p133, %s134, %s135
      %p139 = pneg %p133
      %p140 = scmp.eq.s32.totalorder %s14, 1
      %p141 = por %p139, %p140
      %p142 = scmp.ne.s32.totalorder %s134, %s137
      %p143 = scmp.eq.s32.totalorder %s14, 0
      %p144 = por %p142, %p143
      %p145 = scmp.ne.s32.totalorder %s134, %s137
      %p146 = scmp.eq.s32.totalorder %s19, 1
      %p147 = por %p145, %p146
      %p148 = scmp.ne.s32.totalorder %s137, %s138
      %p149 = scmp.eq.s32.totalorder %s19, 0
      %p150 = por %p148, %p149
      %p151 = scmp.ne.s32.totalorder %s137, %s138
      %p152 = scmp.eq.s32.totalorder %s20, 1
      %p153 = por %p151, %p152
      %p155 = scmp.ne.s32.totalorder %s138, %s154
      %p156 = scmp.eq.s32.totalorder %s20, 0
      %p157 = por %p155, %p156
      %p158 = scmp.le.s32.totalorder 1, %s14
      %p159 = scmp.lt.s32.totalorder %s14, 3
      %p160 = pnand %p158, %p159
      %p161 = pneg %p160
      // Predicated region
      $region9: #{tpu_custom_call.1} parent=5 // pred_check
        _
      $region10: #{tpu_custom_call.1} parent=5 // pred_check_branch
        %163 = sbr.rel (%p160) target = $region12
      $region11: #{tpu_custom_call.1} parent=5 // pred_region
        %s164 = ssub.s32 %s14, 1
        // Predicated region
        $region13: #{tpu_custom_call.1} parent=11 // pred_check
          %p165 = pneg %p61
        $region14: #{tpu_custom_call.1} parent=11 // pred_check_branch
          %167 = sbr.rel (%p165) target = $region16
        $region15: #{tpu_custom_call.1} parent=11 // pred_region
          _
        $region16: #{tpu_custom_call.1} parent=11 // pred_fallthru
          _
        // Predicated region
        $region17: #{tpu_custom_call.1} parent=11 // pred_check
          %p168 = pneg %p82
        $region18: #{tpu_custom_call.1} parent=11 // pred_check_branch
          %170 = sbr.rel (%p168) target = $region20
        $region19: #{tpu_custom_call.1} parent=11 // pred_region
          _
        $region20: #{tpu_custom_call.1} parent=11 // pred_fallthru
          _
        // Predicated region
        $region21: #{tpu_custom_call.1} parent=11 // pred_check
          %p171 = pneg %p103
        $region22: #{tpu_custom_call.1} parent=11 // pred_check_branch
          %173 = sbr.rel (%p171) target = $region24
        $region23: #{tpu_custom_call.1} parent=11 // pred_region
          _
        $region24: #{tpu_custom_call.1} parent=11 // pred_fallthru
          _
        // Predicated region
        $region25: #{tpu_custom_call.1} parent=11 // pred_check
          %p174 = pneg %p124
        $region26: #{tpu_custom_call.1} parent=11 // pred_check_branch
          %176 = sbr.rel (%p174) target = $region28
        $region27: #{tpu_custom_call.1} parent=11 // pred_region
          _
        $region28: #{tpu_custom_call.1} parent=11 // pred_fallthru
          _
      $region12: #{tpu_custom_call.1} parent=5 // pred_fallthru
        _
      %p177 = scmp.lt.s32.totalorder %s14, 2
      // Predicated region
      $region29: #{tpu_custom_call.1} parent=5 // pred_check
        %p178 = pneg %p177
      $region30: #{tpu_custom_call.1} parent=5 // pred_check_branch
        %180 = sbr.rel (%p178) target = $region32
      $region31: #{tpu_custom_call.1} parent=5 // pred_region
        // Predicated region
        $region33: #{tpu_custom_call.1} parent=31 // pred_check
          %p181 = pneg %p34
        $region34: #{tpu_custom_call.1} parent=31 // pred_check_branch
          %183 = sbr.rel (%p181) target = $region36
        $region35: #{tpu_custom_call.1} parent=31 // pred_region
          %p184 = scmp.lt.s32.totalorder %s14, 1
          %s185 = scalar_select %p184, %s14, 1
          %s186 = smul.addr %s185, 32
          %s187 = smul.addr %s186, 8
          %s188 = scalar_lea.vmem %s0, %s187
        $region36: #{tpu_custom_call.1} parent=31 // pred_fallthru
          _
      $region32: #{tpu_custom_call.1} parent=5 // pred_fallthru
        _
      %p189 = scmp.le.s32.totalorder 1, %s14
      %p190 = scmp.lt.s32.totalorder %s14, 3
      %p191 = pnand %p189, %p190
      %p192 = pneg %p191
      // Predicated region
      $region37: #{tpu_custom_call.1} parent=5 // pred_check
        _
      $region38: #{tpu_custom_call.1} parent=5 // pred_check_branch
        %194 = sbr.rel (%p191) target = $region40
      $region39: #{tpu_custom_call.1} parent=5 // pred_region
        %s195 = ssub.s32 %s14, 1
        %p196 = scmp.lt.s32.totalorder %s19, 1
        %s197 = scalar_select %p196, %s19, 1
        %s198 = smul.addr %s197, 32
        %s199 = smul.addr %s198, 8
        %s200 = scalar_lea.vmem %s0, %s199
        %p201 = pneg %p40
        %p202 = pneg %p37
        %p203 = pneg %p61
        %p204 = pneg %p58
        %p205 = pneg %p82
        %p206 = pneg %p79
        %p207 = pneg %p103
        %p208 = pneg %p100
        %p209 = pneg %p124
        %p210 = pneg %p121
        %p211 = pneg %p150
        %p212 = pneg %p147
        %s213 = sand.u32 %s137, 1
        %s214 = scalar_lea.sflag [#allocation3], %s213
        %s215 = sand.u32 %s137, 1
        %s216 = smul.addr %s215, 256
        %s217 = scalar_lea.vmem [#allocation2], %s216
        %p218 = scmp.lt.s32.totalorder %s19, 1
        %s219 = scalar_select %p218, %s19, 1
        %s220 = smul.addr %s219, 32
        %s221 = smul.addr %s220, 8
        %s222 = scalar_lea.vmem %s0, %s221
        %v223 = vld [vmem:[%s222] sm:$0xff]
        %v224 = vld [vmem:[%s222 + $0x8] sm:$0xff]
        %v225 = vld [vmem:[%s222 + $0x10] sm:$0xff]
        %v226 = vld [vmem:[%s222 + $0x18] sm:$0xff]
        %v227 = vld [vmem:[%s222 + $0x20] sm:$0xff]
        %v228 = vld [vmem:[%s222 + $0x28] sm:$0xff]
        %v229 = vld [vmem:[%s222 + $0x30] sm:$0xff]
        %v230 = vld [vmem:[%s222 + $0x38] sm:$0xff]
        %v231 = vld [vmem:[%s222 + $0x40] sm:$0xff]
        %v232 = vld [vmem:[%s222 + $0x48] sm:$0xff]
        %v233 = vld [vmem:[%s222 + $0x50] sm:$0xff]
        %v234 = vld [vmem:[%s222 + $0x58] sm:$0xff]
        %v235 = vld [vmem:[%s222 + $0x60] sm:$0xff]
        %v236 = vld [vmem:[%s222 + $0x68] sm:$0xff]
        %v237 = vld [vmem:[%s222 + $0x70] sm:$0xff]
        %v238 = vld [vmem:[%s222 + $0x78] sm:$0xff]
        %v239 = vld [vmem:[%s222 + $0x80] sm:$0xff]
        %v240 = vld [vmem:[%s222 + $0x88] sm:$0xff]
        %v241 = vld [vmem:[%s222 + $0x90] sm:$0xff]
        %v242 = vld [vmem:[%s222 + $0x98] sm:$0xff]
        %v243 = vld [vmem:[%s222 + $0xa0] sm:$0xff]
        %v244 = vld [vmem:[%s222 + $0xa8] sm:$0xff]
        %v245 = vld [vmem:[%s222 + $0xb0] sm:$0xff]
        %v246 = vld [vmem:[%s222 + $0xb8] sm:$0xff]
        %v247 = vld [vmem:[%s222 + $0xc0] sm:$0xff]
        %v248 = vld [vmem:[%s222 + $0xc8] sm:$0xff]
        %v249 = vld [vmem:[%s222 + $0xd0] sm:$0xff]
        %v250 = vld [vmem:[%s222 + $0xd8] sm:$0xff]
        %v251 = vld [vmem:[%s222 + $0xe0] sm:$0xff]
        %v252 = vld [vmem:[%s222 + $0xe8] sm:$0xff]
        %v253 = vld [vmem:[%s222 + $0xf0] sm:$0xff]
        %v254 = vld [vmem:[%s222 + $0xf8] sm:$0xff]
        %v255 = vld [vmem:[%s1] sm:$0x1]
        %v257 = vlaneseq
        %v258 = vshrl.u32 %v257, 7
        %v259 = vsub.s32 0, %v258
        %v260 = vrot.slane %v255, %v259
        %v262 = vsub.f32 %v223, %v260
        %v263 = vsub.f32 %v224, %v260
        %v264 = vsub.f32 %v225, %v260
        %v265 = vsub.f32 %v226, %v260
        %v266 = vsub.f32 %v227, %v260
        %v267 = vsub.f32 %v228, %v260
        %v268 = vsub.f32 %v229, %v260
        %v269 = vsub.f32 %v230, %v260
        %v270 = vsub.f32 %v231, %v260
        %v271 = vsub.f32 %v232, %v260
        %v272 = vsub.f32 %v233, %v260
        %v273 = vsub.f32 %v234, %v260
        %v274 = vsub.f32 %v235, %v260
        %v275 = vsub.f32 %v236, %v260
        %v276 = vsub.f32 %v237, %v260
        %v277 = vsub.f32 %v238, %v260
        %v278 = vsub.f32 %v239, %v260
        %v279 = vsub.f32 %v240, %v260
        %v280 = vsub.f32 %v241, %v260
        %v281 = vsub.f32 %v242, %v260
        %v282 = vsub.f32 %v243, %v260
        %v283 = vsub.f32 %v244, %v260
        %v284 = vsub.f32 %v245, %v260
        %v285 = vsub.f32 %v246, %v260
        %v286 = vsub.f32 %v247, %v260
        %v287 = vsub.f32 %v248, %v260
        %v288 = vsub.f32 %v249, %v260
        %v289 = vsub.f32 %v250, %v260
        %v290 = vsub.f32 %v251, %v260
        %v291 = vsub.f32 %v252, %v260
        %v292 = vsub.f32 %v253, %v260
        %v293 = vsub.f32 %v254, %v260
        %v294 = vrot.slane %v262, 7
        %v295 = vrot.slane %v263, 7
        %v296 = vrot.slane %v264, 7
        %v297 = vrot.slane %v265, 7
        %v298 = vrot.slane %v266, 7
        %v299 = vrot.slane %v267, 7
        %v300 = vrot.slane %v268, 7
        %v301 = vrot.slane %v269, 7
        %v302 = vrot.slane %v270, 7
        %v303 = vrot.slane %v271, 7
        %v304 = vrot.slane %v272, 7
        %v305 = vrot.slane %v273, 7
        %v306 = vrot.slane %v274, 7
        %v307 = vrot.slane %v275, 7
        %v308 = vrot.slane %v276, 7
        %v309 = vrot.slane %v277, 7
        %v310 = vrot.slane %v278, 7
        %v311 = vrot.slane %v279, 7
        %v312 = vrot.slane %v280, 7
        %v313 = vrot.slane %v281, 7
        %v314 = vrot.slane %v282, 7
        %v315 = vrot.slane %v283, 7
        %v316 = vrot.slane %v284, 7
        %v317 = vrot.slane %v285, 7
        %v318 = vrot.slane %v286, 7
        %v319 = vrot.slane %v287, 7
        %v320 = vrot.slane %v288, 7
        %v321 = vrot.slane %v289, 7
        %v322 = vrot.slane %v290, 7
        %v323 = vrot.slane %v291, 7
        %v324 = vrot.slane %v292, 7
        %v325 = vrot.slane %v293, 7
        %v326 = vlaneseq
        %v327 = vshrl.u32 %v326, 7
        %vm328 = vcmp.lt.s32.totalorder %v327, 1
        %v329 = vsel %vm328, %v324, %v325
        %v330 = vsel %vm328, %v323, %v324
        %v331 = vsel %vm328, %v322, %v323
        %v332 = vsel %vm328, %v321, %v322
        %v333 = vsel %vm328, %v320, %v321
        %v334 = vsel %vm328, %v319, %v320
        %v335 = vsel %vm328, %v318, %v319
        %v336 = vsel %vm328, %v317, %v318
        %v337 = vsel %vm328, %v316, %v317
        %v338 = vsel %vm328, %v315, %v316
        %v339 = vsel %vm328, %v314, %v315
        %v340 = vsel %vm328, %v313, %v314
        %v341 = vsel %vm328, %v312, %v313
        %v342 = vsel %vm328, %v311, %v312
        %v343 = vsel %vm328, %v310, %v311
        %v344 = vsel %vm328, %v309, %v310
        %v345 = vsel %vm328, %v308, %v309
        %v346 = vsel %vm328, %v307, %v308
        %v347 = vsel %vm328, %v306, %v307
        %v348 = vsel %vm328, %v305, %v306
        %v349 = vsel %vm328, %v304, %v305
        %v350 = vsel %vm328, %v303, %v304
        %v351 = vsel %vm328, %v302, %v303
        %v352 = vsel %vm328, %v301, %v302
        %v353 = vsel %vm328, %v300, %v301
        %v354 = vsel %vm328, %v299, %v300
        %v355 = vsel %vm328, %v298, %v299
        %v356 = vsel %vm328, %v297, %v298
        %v357 = vsel %vm328, %v296, %v297
        %v358 = vsel %vm328, %v295, %v296
        %v359 = vsel %vm328, %v294, %v295
        %v360 = vsel %vm328, %v325, %v294
        %v361 = vld [vmem:[%s2] sm:$0xff]
        %v362 = vld [vmem:[%s2 + $0x8] sm:$0xff]
        %v363 = vld [vmem:[%s2 + $0x10] sm:$0xff]
        %v364 = vld [vmem:[%s2 + $0x18] sm:$0xff]
        %v365 = vld [vmem:[%s2 + $0x20] sm:$0xff]
        %v366 = vld [vmem:[%s2 + $0x28] sm:$0xff]
        %v367 = vld [vmem:[%s2 + $0x30] sm:$0xff]
        %v368 = vld [vmem:[%s2 + $0x38] sm:$0xff]
        %v369 = vld [vmem:[%s2 + $0x40] sm:$0xff]
        %v370 = vld [vmem:[%s2 + $0x48] sm:$0xff]
        %v371 = vld [vmem:[%s2 + $0x50] sm:$0xff]
        %v372 = vld [vmem:[%s2 + $0x58] sm:$0xff]
        %v373 = vld [vmem:[%s2 + $0x60] sm:$0xff]
        %v374 = vld [vmem:[%s2 + $0x68] sm:$0xff]
        %v375 = vld [vmem:[%s2 + $0x70] sm:$0xff]
        %v376 = vld [vmem:[%s2 + $0x78] sm:$0xff]
        %v377 = vld [vmem:[%s2 + $0x80] sm:$0xff]
        %v378 = vld [vmem:[%s2 + $0x88] sm:$0xff]
        %v379 = vld [vmem:[%s2 + $0x90] sm:$0xff]
        %v380 = vld [vmem:[%s2 + $0x98] sm:$0xff]
        %v381 = vld [vmem:[%s2 + $0xa0] sm:$0xff]
        %v382 = vld [vmem:[%s2 + $0xa8] sm:$0xff]
        %v383 = vld [vmem:[%s2 + $0xb0] sm:$0xff]
        %v384 = vld [vmem:[%s2 + $0xb8] sm:$0xff]
        %v385 = vld [vmem:[%s2 + $0xc0] sm:$0xff]
        %v386 = vld [vmem:[%s2 + $0xc8] sm:$0xff]
        %v387 = vld [vmem:[%s2 + $0xd0] sm:$0xff]
        %v388 = vld [vmem:[%s2 + $0xd8] sm:$0xff]
        %v389 = vld [vmem:[%s2 + $0xe0] sm:$0xff]
        %v390 = vld [vmem:[%s2 + $0xe8] sm:$0xff]
        %v391 = vld [vmem:[%s2 + $0xf0] sm:$0xff]
        %v392 = vld [vmem:[%s2 + $0xf8] sm:$0xff]
        %394 = vset.pattern.permute.xlu0 0
        %395 = vperm.xlu0 %394, %v361
        %v396 = vpop.permute.xlu0 %395
        %399 = vset.pattern.permute.xlu0 0
        %400 = vperm.xlu0 %399, %v362
        %v401 = vpop.permute.xlu0 %400
        %404 = vset.pattern.permute.xlu0 0
        %405 = vperm.xlu0 %404, %v363
        %v406 = vpop.permute.xlu0 %405
        %409 = vset.pattern.permute.xlu0 0
        %410 = vperm.xlu0 %409, %v364
        %v411 = vpop.permute.xlu0 %410
        %414 = vset.pattern.permute.xlu0 0
        %415 = vperm.xlu0 %414, %v365
        %v416 = vpop.permute.xlu0 %415
        %419 = vset.pattern.permute.xlu0 0
        %420 = vperm.xlu0 %419, %v366
        %v421 = vpop.permute.xlu0 %420
        %424 = vset.pattern.permute.xlu0 0
        %425 = vperm.xlu0 %424, %v367
        %v426 = vpop.permute.xlu0 %425
        %429 = vset.pattern.permute.xlu0 0
        %430 = vperm.xlu0 %429, %v368
        %v431 = vpop.permute.xlu0 %430
        %434 = vset.pattern.permute.xlu0 0
        %435 = vperm.xlu0 %434, %v369
        %v436 = vpop.permute.xlu0 %435
        %439 = vset.pattern.permute.xlu0 0
        %440 = vperm.xlu0 %439, %v370
        %v441 = vpop.permute.xlu0 %440
        %444 = vset.pattern.permute.xlu0 0
        %445 = vperm.xlu0 %444, %v371
        %v446 = vpop.permute.xlu0 %445
        %449 = vset.pattern.permute.xlu0 0
        %450 = vperm.xlu0 %449, %v372
        %v451 = vpop.permute.xlu0 %450
        %454 = vset.pattern.permute.xlu0 0
        %455 = vperm.xlu0 %454, %v373
        %v456 = vpop.permute.xlu0 %455
        %459 = vset.pattern.permute.xlu0 0
        %460 = vperm.xlu0 %459, %v374
        %v461 = vpop.permute.xlu0 %460
        %464 = vset.pattern.permute.xlu0 0
        %465 = vperm.xlu0 %464, %v375
        %v466 = vpop.permute.xlu0 %465
        %469 = vset.pattern.permute.xlu0 0
        %470 = vperm.xlu0 %469, %v376
        %v471 = vpop.permute.xlu0 %470
        %474 = vset.pattern.permute.xlu0 0
        %475 = vperm.xlu0 %474, %v377
        %v476 = vpop.permute.xlu0 %475
        %479 = vset.pattern.permute.xlu0 0
        %480 = vperm.xlu0 %479, %v378
        %v481 = vpop.permute.xlu0 %480
        %484 = vset.pattern.permute.xlu0 0
        %485 = vperm.xlu0 %484, %v379
        %v486 = vpop.permute.xlu0 %485
        %489 = vset.pattern.permute.xlu0 0
        %490 = vperm.xlu0 %489, %v380
        %v491 = vpop.permute.xlu0 %490
        %494 = vset.pattern.permute.xlu0 0
        %495 = vperm.xlu0 %494, %v381
        %v496 = vpop.permute.xlu0 %495
        %499 = vset.pattern.permute.xlu0 0
        %500 = vperm.xlu0 %499, %v382
        %v501 = vpop.permute.xlu0 %500
        %504 = vset.pattern.permute.xlu0 0
        %505 = vperm.xlu0 %504, %v383
        %v506 = vpop.permute.xlu0 %505
        %509 = vset.pattern.permute.xlu0 0
        %510 = vperm.xlu0 %509, %v384
        %v511 = vpop.permute.xlu0 %510
        %514 = vset.pattern.permute.xlu0 0
        %515 = vperm.xlu0 %514, %v385
        %v516 = vpop.permute.xlu0 %515
        %519 = vset.pattern.permute.xlu0 0
        %520 = vperm.xlu0 %519, %v386
        %v521 = vpop.permute.xlu0 %520
        %524 = vset.pattern.permute.xlu0 0
        %525 = vperm.xlu0 %524, %v387
        %v526 = vpop.permute.xlu0 %525
        %529 = vset.pattern.permute.xlu0 0
        %530 = vperm.xlu0 %529, %v388
        %v531 = vpop.permute.xlu0 %530
        %534 = vset.pattern.permute.xlu0 0
        %535 = vperm.xlu0 %534, %v389
        %v536 = vpop.permute.xlu0 %535
        %539 = vset.pattern.permute.xlu0 0
        %540 = vperm.xlu0 %539, %v390
        %v541 = vpop.permute.xlu0 %540
        %544 = vset.pattern.permute.xlu0 0
        %545 = vperm.xlu0 %544, %v391
        %v546 = vpop.permute.xlu0 %545
        %549 = vset.pattern.permute.xlu0 0
        %550 = vperm.xlu0 %549, %v392
        %v551 = vpop.permute.xlu0 %550
        %v553 = vmul.f32 %v330, %v396
        %v554 = vmul.f32 %v329, %v401
        %v555 = vmul.f32 %v360, %v406
        %v556 = vmul.f32 %v359, %v411
        %v557 = vmul.f32 %v358, %v416
        %v558 = vmul.f32 %v357, %v421
        %v559 = vmul.f32 %v356, %v426
        %v560 = vmul.f32 %v355, %v431
        %v561 = vmul.f32 %v354, %v436
        %v562 = vmul.f32 %v353, %v441
        %v563 = vmul.f32 %v352, %v446
        %v564 = vmul.f32 %v351, %v451
        %v565 = vmul.f32 %v350, %v456
        %v566 = vmul.f32 %v349, %v461
        %v567 = vmul.f32 %v348, %v466
        %v568 = vmul.f32 %v347, %v471
        %v569 = vmul.f32 %v346, %v476
        %v570 = vmul.f32 %v345, %v481
        %v571 = vmul.f32 %v344, %v486
        %v572 = vmul.f32 %v343, %v491
        %v573 = vmul.f32 %v342, %v496
        %v574 = vmul.f32 %v341, %v501
        %v575 = vmul.f32 %v340, %v506
        %v576 = vmul.f32 %v339, %v511
        %v577 = vmul.f32 %v338, %v516
        %v578 = vmul.f32 %v337, %v521
        %v579 = vmul.f32 %v336, %v526
        %v580 = vmul.f32 %v335, %v531
        %v581 = vmul.f32 %v334, %v536
        %v582 = vmul.f32 %v333, %v541
        %v583 = vmul.f32 %v332, %v546
        %v584 = vmul.f32 %v331, %v551
        %v585 = vld [vmem:[%s3] sm:$0x7]
        %s586 = scalar_lea.vmem %s2, 256
        %v587 = vld [vmem:[%s586] sm:$0xff]
        %v588 = vld [vmem:[%s586 + $0x8] sm:$0xff]
        %v589 = vld [vmem:[%s586 + $0x10] sm:$0xff]
        %v590 = vld [vmem:[%s586 + $0x18] sm:$0xff]
        %v591 = vld [vmem:[%s586 + $0x20] sm:$0xff]
        %v592 = vld [vmem:[%s586 + $0x28] sm:$0xff]
        %v593 = vld [vmem:[%s586 + $0x30] sm:$0xff]
        %v594 = vld [vmem:[%s586 + $0x38] sm:$0xff]
        %v595 = vld [vmem:[%s586 + $0x40] sm:$0xff]
        %v596 = vld [vmem:[%s586 + $0x48] sm:$0xff]
        %v597 = vld [vmem:[%s586 + $0x50] sm:$0xff]
        %v598 = vld [vmem:[%s586 + $0x58] sm:$0xff]
        %v599 = vld [vmem:[%s586 + $0x60] sm:$0xff]
        %v600 = vld [vmem:[%s586 + $0x68] sm:$0xff]
        %v601 = vld [vmem:[%s586 + $0x70] sm:$0xff]
        %v602 = vld [vmem:[%s586 + $0x78] sm:$0xff]
        %v603 = vld [vmem:[%s586 + $0x80] sm:$0xff]
        %v604 = vld [vmem:[%s586 + $0x88] sm:$0xff]
        %v605 = vld [vmem:[%s586 + $0x90] sm:$0xff]
        %v606 = vld [vmem:[%s586 + $0x98] sm:$0xff]
        %v607 = vld [vmem:[%s586 + $0xa0] sm:$0xff]
        %v608 = vld [vmem:[%s586 + $0xa8] sm:$0xff]
        %v609 = vld [vmem:[%s586 + $0xb0] sm:$0xff]
        %v610 = vld [vmem:[%s586 + $0xb8] sm:$0xff]
        %v611 = vld [vmem:[%s586 + $0xc0] sm:$0xff]
        %v612 = vld [vmem:[%s586 + $0xc8] sm:$0xff]
        %v613 = vld [vmem:[%s586 + $0xd0] sm:$0xff]
        %v614 = vld [vmem:[%s586 + $0xd8] sm:$0xff]
        %v615 = vld [vmem:[%s586 + $0xe0] sm:$0xff]
        %v616 = vld [vmem:[%s586 + $0xe8] sm:$0xff]
        %v617 = vld [vmem:[%s586 + $0xf0] sm:$0xff]
        %v618 = vld [vmem:[%s586 + $0xf8] sm:$0xff]
        %620 = vset.pattern.permute.xlu0 0
        %621 = vperm.xlu0 %620, %v587
        %v622 = vpop.permute.xlu0 %621
        %625 = vset.pattern.permute.xlu0 0
        %626 = vperm.xlu0 %625, %v588
        %v627 = vpop.permute.xlu0 %626
        %630 = vset.pattern.permute.xlu0 0
        %631 = vperm.xlu0 %630, %v589
        %v632 = vpop.permute.xlu0 %631
        %635 = vset.pattern.permute.xlu0 0
        %636 = vperm.xlu0 %635, %v590
        %v637 = vpop.permute.xlu0 %636
        %640 = vset.pattern.permute.xlu0 0
        %641 = vperm.xlu0 %640, %v591
        %v642 = vpop.permute.xlu0 %641
        %645 = vset.pattern.permute.xlu0 0
        %646 = vperm.xlu0 %645, %v592
        %v647 = vpop.permute.xlu0 %646
        %650 = vset.pattern.permute.xlu0 0
        %651 = vperm.xlu0 %650, %v593
        %v652 = vpop.permute.xlu0 %651
        %655 = vset.pattern.permute.xlu0 0
        %656 = vperm.xlu0 %655, %v594
        %v657 = vpop.permute.xlu0 %656
        %660 = vset.pattern.permute.xlu0 0
        %661 = vperm.xlu0 %660, %v595
        %v662 = vpop.permute.xlu0 %661
        %665 = vset.pattern.permute.xlu0 0
        %666 = vperm.xlu0 %665, %v596
        %v667 = vpop.permute.xlu0 %666
        %670 = vset.pattern.permute.xlu0 0
        %671 = vperm.xlu0 %670, %v597
        %v672 = vpop.permute.xlu0 %671
        %675 = vset.pattern.permute.xlu0 0
        %676 = vperm.xlu0 %675, %v598
        %v677 = vpop.permute.xlu0 %676
        %680 = vset.pattern.permute.xlu0 0
        %681 = vperm.xlu0 %680, %v599
        %v682 = vpop.permute.xlu0 %681
        %685 = vset.pattern.permute.xlu0 0
        %686 = vperm.xlu0 %685, %v600
        %v687 = vpop.permute.xlu0 %686
        %690 = vset.pattern.permute.xlu0 0
        %691 = vperm.xlu0 %690, %v601
        %v692 = vpop.permute.xlu0 %691
        %695 = vset.pattern.permute.xlu0 0
        %696 = vperm.xlu0 %695, %v602
        %v697 = vpop.permute.xlu0 %696
        %700 = vset.pattern.permute.xlu0 0
        %701 = vperm.xlu0 %700, %v603
        %v702 = vpop.permute.xlu0 %701
        %705 = vset.pattern.permute.xlu0 0
        %706 = vperm.xlu0 %705, %v604
        %v707 = vpop.permute.xlu0 %706
        %710 = vset.pattern.permute.xlu0 0
        %711 = vperm.xlu0 %710, %v605
        %v712 = vpop.permute.xlu0 %711
        %715 = vset.pattern.permute.xlu0 0
        %716 = vperm.xlu0 %715, %v606
        %v717 = vpop.permute.xlu0 %716
        %720 = vset.pattern.permute.xlu0 0
        %721 = vperm.xlu0 %720, %v607
        %v722 = vpop.permute.xlu0 %721
        %725 = vset.pattern.permute.xlu0 0
        %726 = vperm.xlu0 %725, %v608
        %v727 = vpop.permute.xlu0 %726
        %730 = vset.pattern.permute.xlu0 0
        %731 = vperm.xlu0 %730, %v609
        %v732 = vpop.permute.xlu0 %731
        %735 = vset.pattern.permute.xlu0 0
        %736 = vperm.xlu0 %735, %v610
        %v737 = vpop.permute.xlu0 %736
        %740 = vset.pattern.permute.xlu0 0
        %741 = vperm.xlu0 %740, %v611
        %v742 = vpop.permute.xlu0 %741
        %745 = vset.pattern.permute.xlu0 0
        %746 = vperm.xlu0 %745, %v612
        %v747 = vpop.permute.xlu0 %746
        %750 = vset.pattern.permute.xlu0 0
        %751 = vperm.xlu0 %750, %v613
        %v752 = vpop.permute.xlu0 %751
        %755 = vset.pattern.permute.xlu0 0
        %756 = vperm.xlu0 %755, %v614
        %v757 = vpop.permute.xlu0 %756
        %760 = vset.pattern.permute.xlu0 0
        %761 = vperm.xlu0 %760, %v615
        %v762 = vpop.permute.xlu0 %761
        %765 = vset.pattern.permute.xlu0 0
        %766 = vperm.xlu0 %765, %v616
        %v767 = vpop.permute.xlu0 %766
        %770 = vset.pattern.permute.xlu0 0
        %771 = vperm.xlu0 %770, %v617
        %v772 = vpop.permute.xlu0 %771
        %775 = vset.pattern.permute.xlu0 0
        %776 = vperm.xlu0 %775, %v618
        %v777 = vpop.permute.xlu0 %776
        %v779 = vmul.f32 %v292, %v622
        %v780 = vmul.f32 %v293, %v627
        %v781 = vmul.f32 %v262, %v632
        %v782 = vmul.f32 %v263, %v637
        %v783 = vmul.f32 %v264, %v642
        %v784 = vmul.f32 %v265, %v647
        %v785 = vmul.f32 %v266, %v652
        %v786 = vmul.f32 %v267, %v657
        %v787 = vmul.f32 %v268, %v662
        %v788 = vmul.f32 %v269, %v667
        %v789 = vmul.f32 %v270, %v672
        %v790 = vmul.f32 %v271, %v677
        %v791 = vmul.f32 %v272, %v682
        %v792 = vmul.f32 %v273, %v687
        %v793 = vmul.f32 %v274, %v692
        %v794 = vmul.f32 %v275, %v697
        %v795 = vmul.f32 %v276, %v702
        %v796 = vmul.f32 %v277, %v707
        %v797 = vmul.f32 %v278, %v712
        %v798 = vmul.f32 %v279, %v717
        %v799 = vmul.f32 %v280, %v722
        %v800 = vmul.f32 %v281, %v727
        %v801 = vmul.f32 %v282, %v732
        %v802 = vmul.f32 %v283, %v737
        %v803 = vmul.f32 %v284, %v742
        %v804 = vmul.f32 %v285, %v747
        %v805 = vmul.f32 %v286, %v752
        %v806 = vmul.f32 %v287, %v757
        %v807 = vmul.f32 %v288, %v762
        %v808 = vmul.f32 %v289, %v767
        %v809 = vmul.f32 %v290, %v772
        %v810 = vmul.f32 %v291, %v777
        %s811 = scalar_lea.vmem %s3, 4
        %v812 = vld [vmem:[%s811] sm:$0x7]
        %vm813 = vcmask 23552
        %v815 = vsel %vm813, %v779, 0
        %v818 = vsel %vm813, %v780, 0
        %v821 = vsel %vm813, %v781, 0
        %v824 = vsel %vm813, %v782, 0
        %v827 = vsel %vm813, %v783, 0
        %v830 = vsel %vm813, %v784, 0
        %v833 = vsel %vm813, %v785, 0
        %v836 = vsel %vm813, %v786, 0
        %v839 = vsel %vm813, %v787, 0
        %v842 = vsel %vm813, %v788, 0
        %v845 = vsel %vm813, %v789, 0
        %v848 = vsel %vm813, %v790, 0
        %v851 = vsel %vm813, %v791, 0
        %v854 = vsel %vm813, %v792, 0
        %v857 = vsel %vm813, %v793, 0
        %v860 = vsel %vm813, %v794, 0
        %v863 = vsel %vm813, %v795, 0
        %v866 = vsel %vm813, %v796, 0
        %v869 = vsel %vm813, %v797, 0
        %v872 = vsel %vm813, %v798, 0
        %v875 = vsel %vm813, %v799, 0
        %v878 = vsel %vm813, %v800, 0
        %v881 = vsel %vm813, %v801, 0
        %v884 = vsel %vm813, %v802, 0
        %v887 = vsel %vm813, %v803, 0
        %v890 = vsel %vm813, %v804, 0
        %v893 = vsel %vm813, %v805, 0
        %v896 = vsel %vm813, %v806, 0
        %v899 = vsel %vm813, %v807, 0
        %v902 = vsel %vm813, %v808, 0
        %v905 = vsel %vm813, %v809, 0
        %v908 = vsel %vm813, %v810, 0
        %vm910 = vcmask 1042432
        %v912 = vsel %vm910, %v812, 0
        %914 = vmatprep.subr.mxu0 0.0
        %915 = vmatpush1.msra.mxu0 %v912
        %916 = vmatprep.subr.mxu0 0.0
        %917 = vmatpush1.msra.mxu0 0.0
        %918 = vmatprep.subr.mxu0 0.0
        %919 = vmatpush1.msra.mxu0 0.0
        %920 = vmatprep.subr.mxu0 0.0
        %921 = vmatpush1.msra.mxu0 0.0
        %922 = vmatprep.subr.mxu0 0.0
        %923 = vmatpush1.msra.mxu0 0.0
        %924 = vmatprep.subr.mxu0 0.0
        %925 = vmatpush1.msra.mxu0 0.0
        %926 = vmatprep.subr.mxu0 0.0
        %927 = vmatpush1.msra.mxu0 0.0
        %928 = vmatprep.subr.mxu0 0.0
        %929 = vmatpush1.msra.mxu0 0.0
        %930 = vmatprep.subr.mxu0 0.0
        %931 = vmatpush1.msra.mxu0 0.0
        %932 = vmatprep.subr.mxu0 0.0
        %933 = vmatpush1.msra.mxu0 0.0
        %934 = vmatprep.subr.mxu0 0.0
        %935 = vmatpush1.msra.mxu0 0.0
        %936 = vmatprep.subr.mxu0 0.0
        %937 = vmatpush1.msra.mxu0 0.0
        %938 = vmatprep.subr.mxu0 0.0
        %939 = vmatpush1.msra.mxu0 0.0
        %940 = vmatprep.subr.mxu0 0.0
        %941 = vmatpush1.msra.mxu0 0.0
        %942 = vmatprep.subr.mxu0 0.0
        %943 = vmatpush1.msra.mxu0 0.0
        %944 = vmatprep.subr.mxu0 0.0
        %945 = vmatpush1.msra.mxu0 0.0
        %946 = vmatprep.subr.mxu0 0.0
        %947 = vmatpush1.msra.mxu0 0.0
        %948 = vmatprep.subr.mxu0 0.0
        %949 = vmatpush1.msra.mxu0 0.0
        %950 = vmatprep.subr.mxu0 0.0
        %951 = vmatpush1.msra.mxu0 0.0
        %952 = vmatprep.subr.mxu0 0.0
        %953 = vmatpush1.msra.mxu0 0.0
        %954 = vmatprep.subr.mxu0 0.0
        %955 = vmatpush1.msra.mxu0 0.0
        %956 = vmatprep.subr.mxu0 0.0
        %957 = vmatpush1.msra.mxu0 0.0
        %958 = vmatprep.subr.mxu0 0.0
        %959 = vmatpush1.msra.mxu0 0.0
        %960 = vmatprep.subr.mxu0 0.0
        %961 = vmatpush1.msra.mxu0 0.0
        %962 = vmatprep.subr.mxu0 0.0
        %963 = vmatpush1.msra.mxu0 0.0
        %964 = vmatprep.subr.mxu0 0.0
        %965 = vmatpush1.msra.mxu0 0.0
        %966 = vmatprep.subr.mxu0 0.0
        %967 = vmatpush1.msra.mxu0 0.0
        %968 = vmatprep.subr.mxu0 0.0
        %969 = vmatpush1.msra.mxu0 0.0
        %970 = vmatprep.subr.mxu0 0.0
        %971 = vmatpush1.msra.mxu0 0.0
        %972 = vmatprep.subr.mxu0 0.0
        %973 = vmatpush1.msra.mxu0 0.0
        %974 = vmatprep.subr.mxu0 0.0
        %975 = vmatpush1.msra.mxu0 0.0
        %976 = vmatprep.subr.mxu0 0.0
        %977 = vmatpush1.msra.mxu0 0.0
        %978 = vmatprep.mubr.f32.mxu0 0.0
        %979 = vmatmul.mubr.f32.gmra.mrb[0].mxu0 %v815
        %v980 = vpop.f32.mrb[0].mxu0
        %v981 = vadd.f32 0.0, %v980
        %v982 = vpop.f32.mrb[0].mxu0
        %983 = vmatprep.mubr.f32.mxu0 0.0
        %984 = vmatmul.mubr.f32.gmra.mrb[0].mxu0 %v818
        %v985 = vpop.f32.mrb[0].mxu0
        %v986 = vadd.f32 0.0, %v985
        %v987 = vpop.f32.mrb[0].mxu0
        %988 = vmatprep.mubr.f32.mxu0 0.0
        %989 = vmatmul.mubr.f32.gmra.mrb[0].mxu0 %v821
        %v990 = vpop.f32.mrb[0].mxu0
        %v991 = vadd.f32 0.0, %v990
        %v992 = vpop.f32.mrb[0].mxu0
        %993 = vmatprep.mubr.f32.mxu0 0.0
        %994 = vmatmul.mubr.f32.gmra.mrb[0].mxu0 %v824
        %v995 = vpop.f32.mrb[0].mxu0
        %v996 = vadd.f32 0.0, %v995
        %v997 = vpop.f32.mrb[0].mxu0
        %998 = vmatprep.mubr.f32.mxu0 0.0
        %999 = vmatmul.mubr.f32.gmra.mrb[0].mxu0 %v827
        %v1000 = vpop.f32.mrb[0].mxu0
        %v1001 = vadd.f32 0.0, %v1000
        %v1002 = vpop.f32.mrb[0].mxu0
        %1003 = vmatprep.mubr.f32.mxu0 0.0
        %1004 = vmatmul.mubr.f32.gmra.mrb[0].mxu0 %v830
        %v1005 = vpop.f32.mrb[0].mxu0
        %v1006 = vadd.f32 0.0, %v1005
        %v1007 = vpop.f32.mrb[0].mxu0
        %1008 = vmatprep.mubr.f32.mxu0 0.0
        %1009 = vmatmul.mubr.f32.gmra.mrb[0].mxu0 %v833
        %v1010 = vpop.f32.mrb[0].mxu0
        %v1011 = vadd.f32 0.0, %v1010
        %v1012 = vpop.f32.mrb[0].mxu0
        %1013 = vmatprep.mubr.f32.mxu0 0.0
        %1014 = vmatmul.mubr.f32.gmra.mrb[0].mxu0 %v836
        %v1015 = vpop.f32.mrb[0].mxu0
        %v1016 = vadd.f32 0.0, %v1015
        %v1017 = vpop.f32.mrb[0].mxu0
        %1018 = vmatprep.mubr.f32.mxu0 0.0
        %1019 = vmatmul.mubr.f32.gmra.mrb[0].mxu0 %v839
        %v1020 = vpop.f32.mrb[0].mxu0
        %v1021 = vadd.f32 0.0, %v1020
        %v1022 = vpop.f32.mrb[0].mxu0
        %1023 = vmatprep.mubr.f32.mxu0 0.0
        %1024 = vmatmul.mubr.f32.gmra.mrb[0].mxu0 %v842
        %v1025 = vpop.f32.mrb[0].mxu0
        %v1026 = vadd.f32 0.0, %v1025
        %v1027 = vpop.f32.mrb[0].mxu0
        %1028 = vmatprep.mubr.f32.mxu0 0.0
        %1029 = vmatmul.mubr.f32.gmra.mrb[0].mxu0 %v845
        %v1030 = vpop.f32.mrb[0].mxu0
        %v1031 = vadd.f32 0.0, %v1030
        %v1032 = vpop.f32.mrb[0].mxu0
        %1033 = vmatprep.mubr.f32.mxu0 0.0
        %1034 = vmatmul.mubr.f32.gmra.mrb[0].mxu0 %v848
        %v1035 = vpop.f32.mrb[0].mxu0
        %v1036 = vadd.f32 0.0, %v1035
        %v1037 = vpop.f32.mrb[0].mxu0
        %1038 = vmatprep.mubr.f32.mxu0 0.0
        %1039 = vmatmul.mubr.f32.gmra.mrb[0].mxu0 %v851
        %v1040 = vpop.f32.mrb[0].mxu0
        %v1041 = vadd.f32 0.0, %v1040
        %v1042 = vpop.f32.mrb[0].mxu0
        %1043 = vmatprep.mubr.f32.mxu0 0.0
        %1044 = vmatmul.mubr.f32.gmra.mrb[0].mxu0 %v854
        %v1045 = vpop.f32.mrb[0].mxu0
        %v1046 = vadd.f32 0.0, %v1045
        %v1047 = vpop.f32.mrb[0].mxu0
        %1048 = vmatprep.mubr.f32.mxu0 0.0
        %1049 = vmatmul.mubr.f32.gmra.mrb[0].mxu0 %v857
        %v1050 = vpop.f32.mrb[0].mxu0
        %v1051 = vadd.f32 0.0, %v1050
        %v1052 = vpop.f32.mrb[0].mxu0
        %1053 = vmatprep.mubr.f32.mxu0 0.0
        %1054 = vmatmul.mubr.f32.gmra.mrb[0].mxu0 %v860
        %v1055 = vpop.f32.mrb[0].mxu0
        %v1056 = vadd.f32 0.0, %v1055
        %v1057 = vpop.f32.mrb[0].mxu0
        %1058 = vmatprep.mubr.f32.mxu0 0.0
        %1059 = vmatmul.mubr.f32.gmra.mrb[0].mxu0 %v863
        %v1060 = vpop.f32.mrb[0].mxu0
        %v1061 = vadd.f32 0.0, %v1060
        %v1062 = vpop.f32.mrb[0].mxu0
        %1063 = vmatprep.mubr.f32.mxu0 0.0
        %1064 = vmatmul.mubr.f32.gmra.mrb[0].mxu0 %v866
        %v1065 = vpop.f32.mrb[0].mxu0
        %v1066 = vadd.f32 0.0, %v1065
        %v1067 = vpop.f32.mrb[0].mxu0
        %1068 = vmatprep.mubr.f32.mxu0 0.0
        %1069 = vmatmul.mubr.f32.gmra.mrb[0].mxu0 %v869
        %v1070 = vpop.f32.mrb[0].mxu0
        %v1071 = vadd.f32 0.0, %v1070
        %v1072 = vpop.f32.mrb[0].mxu0
        %1073 = vmatprep.mubr.f32.mxu0 0.0
        %1074 = vmatmul.mubr.f32.gmra.mrb[0].mxu0 %v872
        %v1075 = vpop.f32.mrb[0].mxu0
        %v1076 = vadd.f32 0.0, %v1075
        %v1077 = vpop.f32.mrb[0].mxu0
        %1078 = vmatprep.mubr.f32.mxu0 0.0
        %1079 = vmatmul.mubr.f32.gmra.mrb[0].mxu0 %v875
        %v1080 = vpop.f32.mrb[0].mxu0
        %v1081 = vadd.f32 0.0, %v1080
        %v1082 = vpop.f32.mrb[0].mxu0
        %1083 = vmatprep.mubr.f32.mxu0 0.0
        %1084 = vmatmul.mubr.f32.gmra.mrb[0].mxu0 %v878
        %v1085 = vpop.f32.mrb[0].mxu0
        %v1086 = vadd.f32 0.0, %v1085
        %v1087 = vpop.f32.mrb[0].mxu0
        %1088 = vmatprep.mubr.f32.mxu0 0.0
        %1089 = vmatmul.mubr.f32.gmra.mrb[0].mxu0 %v881
        %v1090 = vpop.f32.mrb[0].mxu0
        %v1091 = vadd.f32 0.0, %v1090
        %v1092 = vpop.f32.mrb[0].mxu0
        %1093 = vmatprep.mubr.f32.mxu0 0.0
        %1094 = vmatmul.mubr.f32.gmra.mrb[0].mxu0 %v884
        %v1095 = vpop.f32.mrb[0].mxu0
        %v1096 = vadd.f32 0.0, %v1095
        %v1097 = vpop.f32.mrb[0].mxu0
        %1098 = vmatprep.mubr.f32.mxu0 0.0
        %1099 = vmatmul.mubr.f32.gmra.mrb[0].mxu0 %v887
        %v1100 = vpop.f32.mrb[0].mxu0
        %v1101 = vadd.f32 0.0, %v1100
        %v1102 = vpop.f32.mrb[0].mxu0
        %1103 = vmatprep.mubr.f32.mxu0 0.0
        %1104 = vmatmul.mubr.f32.gmra.mrb[0].mxu0 %v890
        %v1105 = vpop.f32.mrb[0].mxu0
        %v1106 = vadd.f32 0.0, %v1105
        %v1107 = vpop.f32.mrb[0].mxu0
        %1108 = vmatprep.mubr.f32.mxu0 0.0
        %1109 = vmatmul.mubr.f32.gmra.mrb[0].mxu0 %v893
        %v1110 = vpop.f32.mrb[0].mxu0
        %v1111 = vadd.f32 0.0, %v1110
        %v1112 = vpop.f32.mrb[0].mxu0
        %1113 = vmatprep.mubr.f32.mxu0 0.0
        %1114 = vmatmul.mubr.f32.gmra.mrb[0].mxu0 %v896
        %v1115 = vpop.f32.mrb[0].mxu0
        %v1116 = vadd.f32 0.0, %v1115
        %v1117 = vpop.f32.mrb[0].mxu0
        %1118 = vmatprep.mubr.f32.mxu0 0.0
        %1119 = vmatmul.mubr.f32.gmra.mrb[0].mxu0 %v899
        %v1120 = vpop.f32.mrb[0].mxu0
        %v1121 = vadd.f32 0.0, %v1120
        %v1122 = vpop.f32.mrb[0].mxu0
        %1123 = vmatprep.mubr.f32.mxu0 0.0
        %1124 = vmatmul.mubr.f32.gmra.mrb[0].mxu0 %v902
        %v1125 = vpop.f32.mrb[0].mxu0
        %v1126 = vadd.f32 0.0, %v1125
        %v1127 = vpop.f32.mrb[0].mxu0
        %1128 = vmatprep.mubr.f32.mxu0 0.0
        %1129 = vmatmul.mubr.f32.gmra.mrb[0].mxu0 %v905
        %v1130 = vpop.f32.mrb[0].mxu0
        %v1131 = vadd.f32 0.0, %v1130
        %v1132 = vpop.f32.mrb[0].mxu0
        %1133 = vmatprep.mubr.f32.mxu0 0.0
        %1134 = vmatmul.mubr.f32.gmra.mrb[0].mxu0 %v908
        %v1135 = vpop.f32.mrb[0].mxu0
        %v1136 = vadd.f32 0.0, %v1135
        %v1137 = vpop.f32.mrb[0].mxu0
        %1138 = vdwg.mxu0
        %v1140 = vsel %vm813, %v553, 0
        %v1143 = vsel %vm813, %v554, 0
        %v1146 = vsel %vm813, %v555, 0
        %v1149 = vsel %vm813, %v556, 0
        %v1152 = vsel %vm813, %v557, 0
        %v1155 = vsel %vm813, %v558, 0
        %v1158 = vsel %vm813, %v559, 0
        %v1161 = vsel %vm813, %v560, 0
        %v1164 = vsel %vm813, %v561, 0
        %v1167 = vsel %vm813, %v562, 0
        %v1170 = vsel %vm813, %v563, 0
        %v1173 = vsel %vm813, %v564, 0
        %v1176 = vsel %vm813, %v565, 0
        %v1179 = vsel %vm813, %v566, 0
        %v1182 = vsel %vm813, %v567, 0
        %v1185 = vsel %vm813, %v568, 0
        %v1188 = vsel %vm813, %v569, 0
        %v1191 = vsel %vm813, %v570, 0
        %v1194 = vsel %vm813, %v571, 0
        %v1197 = vsel %vm813, %v572, 0
        %v1200 = vsel %vm813, %v573, 0
        %v1203 = vsel %vm813, %v574, 0
        %v1206 = vsel %vm813, %v575, 0
        %v1209 = vsel %vm813, %v576, 0
        %v1212 = vsel %vm813, %v577, 0
        %v1215 = vsel %vm813, %v578, 0
        %v1218 = vsel %vm813, %v579, 0
        %v1221 = vsel %vm813, %v580, 0
        %v1224 = vsel %vm813, %v581, 0
        %v1227 = vsel %vm813, %v582, 0
        %v1230 = vsel %vm813, %v583, 0
        %v1233 = vsel %vm813, %v584, 0
        %v1236 = vsel %vm910, %v585, 0
        %1238 = vmatprep.subr.mxu0 0.0
        %1239 = vmatpush1.msra.mxu0 %v1236
        %1240 = vmatprep.subr.mxu0 0.0
        %1241 = vmatpush1.msra.mxu0 0.0
        %1242 = vmatprep.subr.mxu0 0.0
        %1243 = vmatpush1.msra.mxu0 0.0
        %1244 = vmatprep.subr.mxu0 0.0
        %1245 = vmatpush1.msra.mxu0 0.0
        %1246 = vmatprep.subr.mxu0 0.0
        %1247 = vmatpush1.msra.mxu0 0.0
        %1248 = vmatprep.subr.mxu0 0.0
        %1249 = vmatpush1.msra.mxu0 0.0
        %1250 = vmatprep.subr.mxu0 0.0
        %1251 = vmatpush1.msra.mxu0 0.0
        %1252 = vmatprep.subr.mxu0 0.0
        %1253 = vmatpush1.msra.mxu0 0.0
        %1254 = vmatprep.subr.mxu0 0.0
        %1255 = vmatpush1.msra.mxu0 0.0
        %1256 = vmatprep.subr.mxu0 0.0
        %1257 = vmatpush1.msra.mxu0 0.0
        %1258 = vmatprep.subr.mxu0 0.0
        %1259 = vmatpush1.msra.mxu0 0.0
        %1260 = vmatprep.subr.mxu0 0.0
        %1261 = vmatpush1.msra.mxu0 0.0
        %1262 = vmatprep.subr.mxu0 0.0
        %1263 = vmatpush1.msra.mxu0 0.0
        %1264 = vmatprep.subr.mxu0 0.0
        %1265 = vmatpush1.msra.mxu0 0.0
        %1266 = vmatprep.subr.mxu0 0.0
        %1267 = vmatpush1.msra.mxu0 0.0
        %1268 = vmatprep.subr.mxu0 0.0
        %1269 = vmatpush1.msra.mxu0 0.0
        %1270 = vmatprep.subr.mxu0 0.0
        %1271 = vmatpush1.msra.mxu0 0.0
        %1272 = vmatprep.subr.mxu0 0.0
        %1273 = vmatpush1.msra.mxu0 0.0
        %1274 = vmatprep.subr.mxu0 0.0
        %1275 = vmatpush1.msra.mxu0 0.0
        %1276 = vmatprep.subr.mxu0 0.0
        %1277 = vmatpush1.msra.mxu0 0.0
        %1278 = vmatprep.subr.mxu0 0.0
        %1279 = vmatpush1.msra.mxu0 0.0
        %1280 = vmatprep.subr.mxu0 0.0
        %1281 = vmatpush1.msra.mxu0 0.0
        %1282 = vmatprep.subr.mxu0 0.0
        %1283 = vmatpush1.msra.mxu0 0.0
        %1284 = vmatprep.subr.mxu0 0.0
        %1285 = vmatpush1.msra.mxu0 0.0
        %1286 = vmatprep.subr.mxu0 0.0
        %1287 = vmatpush1.msra.mxu0 0.0
        %1288 = vmatprep.subr.mxu0 0.0
        %1289 = vmatpush1.msra.mxu0 0.0
        %1290 = vmatprep.subr.mxu0 0.0
        %1291 = vmatpush1.msra.mxu0 0.0
        %1292 = vmatprep.subr.mxu0 0.0
        %1293 = vmatpush1.msra.mxu0 0.0
        %1294 = vmatprep.subr.mxu0 0.0
        %1295 = vmatpush1.msra.mxu0 0.0
        %1296 = vmatprep.subr.mxu0 0.0
        %1297 = vmatpush1.msra.mxu0 0.0
        %1298 = vmatprep.subr.mxu0 0.0
        %1299 = vmatpush1.msra.mxu0 0.0
        %1300 = vmatprep.subr.mxu0 0.0
        %1301 = vmatpush1.msra.mxu0 0.0
        %1302 = vmatprep.mubr.f32.mxu0 0.0
        %1303 = vmatmul.mubr.f32.gmra.mrb[0].mxu0 %v1140
        %v1304 = vpop.f32.mrb[0].mxu0
        %v1305 = vadd.f32 %v981, %v1304
        %v1306 = vpop.f32.mrb[0].mxu0
        %1307 = vmatprep.mubr.f32.mxu0 0.0
        %1308 = vmatmul.mubr.f32.gmra.mrb[0].mxu0 %v1143
        %v1309 = vpop.f32.mrb[0].mxu0
        %v1310 = vadd.f32 %v986, %v1309
        %v1311 = vpop.f32.mrb[0].mxu0
        %1312 = vmatprep.mubr.f32.mxu0 0.0
        %1313 = vmatmul.mubr.f32.gmra.mrb[0].mxu0 %v1146
        %v1314 = vpop.f32.mrb[0].mxu0
        %v1315 = vadd.f32 %v991, %v1314
        %v1316 = vpop.f32.mrb[0].mxu0
        %1317 = vmatprep.mubr.f32.mxu0 0.0
        %1318 = vmatmul.mubr.f32.gmra.mrb[0].mxu0 %v1149
        %v1319 = vpop.f32.mrb[0].mxu0
        %v1320 = vadd.f32 %v996, %v1319
        %v1321 = vpop.f32.mrb[0].mxu0
        %1322 = vmatprep.mubr.f32.mxu0 0.0
        %1323 = vmatmul.mubr.f32.gmra.mrb[0].mxu0 %v1152
        %v1324 = vpop.f32.mrb[0].mxu0
        %v1325 = vadd.f32 %v1001, %v1324
        %v1326 = vpop.f32.mrb[0].mxu0
        %1327 = vmatprep.mubr.f32.mxu0 0.0
        %1328 = vmatmul.mubr.f32.gmra.mrb[0].mxu0 %v1155
        %v1329 = vpop.f32.mrb[0].mxu0
        %v1330 = vadd.f32 %v1006, %v1329
        %v1331 = vpop.f32.mrb[0].mxu0
        %1332 = vmatprep.mubr.f32.mxu0 0.0
        %1333 = vmatmul.mubr.f32.gmra.mrb[0].mxu0 %v1158
        %v1334 = vpop.f32.mrb[0].mxu0
        %v1335 = vadd.f32 %v1011, %v1334
        %v1336 = vpop.f32.mrb[0].mxu0
        %1337 = vmatprep.mubr.f32.mxu0 0.0
        %1338 = vmatmul.mubr.f32.gmra.mrb[0].mxu0 %v1161
        %v1339 = vpop.f32.mrb[0].mxu0
        %v1340 = vadd.f32 %v1016, %v1339
        %v1341 = vpop.f32.mrb[0].mxu0
        %1342 = vmatprep.mubr.f32.mxu0 0.0
        %1343 = vmatmul.mubr.f32.gmra.mrb[0].mxu0 %v1164
        %v1344 = vpop.f32.mrb[0].mxu0
        %v1345 = vadd.f32 %v1021, %v1344
        %v1346 = vpop.f32.mrb[0].mxu0
        %1347 = vmatprep.mubr.f32.mxu0 0.0
        %1348 = vmatmul.mubr.f32.gmra.mrb[0].mxu0 %v1167
        %v1349 = vpop.f32.mrb[0].mxu0
        %v1350 = vadd.f32 %v1026, %v1349
        %v1351 = vpop.f32.mrb[0].mxu0
        %1352 = vmatprep.mubr.f32.mxu0 0.0
        %1353 = vmatmul.mubr.f32.gmra.mrb[0].mxu0 %v1170
        %v1354 = vpop.f32.mrb[0].mxu0
        %v1355 = vadd.f32 %v1031, %v1354
        %v1356 = vpop.f32.mrb[0].mxu0
        %1357 = vmatprep.mubr.f32.mxu0 0.0
        %1358 = vmatmul.mubr.f32.gmra.mrb[0].mxu0 %v1173
        %v1359 = vpop.f32.mrb[0].mxu0
        %v1360 = vadd.f32 %v1036, %v1359
        %v1361 = vpop.f32.mrb[0].mxu0
        %1362 = vmatprep.mubr.f32.mxu0 0.0
        %1363 = vmatmul.mubr.f32.gmra.mrb[0].mxu0 %v1176
        %v1364 = vpop.f32.mrb[0].mxu0
        %v1365 = vadd.f32 %v1041, %v1364
        %v1366 = vpop.f32.mrb[0].mxu0
        %1367 = vmatprep.mubr.f32.mxu0 0.0
        %1368 = vmatmul.mubr.f32.gmra.mrb[0].mxu0 %v1179
        %v1369 = vpop.f32.mrb[0].mxu0
        %v1370 = vadd.f32 %v1046, %v1369
        %v1371 = vpop.f32.mrb[0].mxu0
        %1372 = vmatprep.mubr.f32.mxu0 0.0
        %1373 = vmatmul.mubr.f32.gmra.mrb[0].mxu0 %v1182
        %v1374 = vpop.f32.mrb[0].mxu0
        %v1375 = vadd.f32 %v1051, %v1374
        %v1376 = vpop.f32.mrb[0].mxu0
        %1377 = vmatprep.mubr.f32.mxu0 0.0
        %1378 = vmatmul.mubr.f32.gmra.mrb[0].mxu0 %v1185
        %v1379 = vpop.f32.mrb[0].mxu0
        %v1380 = vadd.f32 %v1056, %v1379
        %v1381 = vpop.f32.mrb[0].mxu0
        %1382 = vmatprep.mubr.f32.mxu0 0.0
        %1383 = vmatmul.mubr.f32.gmra.mrb[0].mxu0 %v1188
        %v1384 = vpop.f32.mrb[0].mxu0
        %v1385 = vadd.f32 %v1061, %v1384
        %v1386 = vpop.f32.mrb[0].mxu0
        %1387 = vmatprep.mubr.f32.mxu0 0.0
        %1388 = vmatmul.mubr.f32.gmra.mrb[0].mxu0 %v1191
        %v1389 = vpop.f32.mrb[0].mxu0
        %v1390 = vadd.f32 %v1066, %v1389
        %v1391 = vpop.f32.mrb[0].mxu0
        %1392 = vmatprep.mubr.f32.mxu0 0.0
        %1393 = vmatmul.mubr.f32.gmra.mrb[0].mxu0 %v1194
        %v1394 = vpop.f32.mrb[0].mxu0
        %v1395 = vadd.f32 %v1071, %v1394
        %v1396 = vpop.f32.mrb[0].mxu0
        %1397 = vmatprep.mubr.f32.mxu0 0.0
        %1398 = vmatmul.mubr.f32.gmra.mrb[0].mxu0 %v1197
        %v1399 = vpop.f32.mrb[0].mxu0
        %v1400 = vadd.f32 %v1076, %v1399
        %v1401 = vpop.f32.mrb[0].mxu0
        %1402 = vmatprep.mubr.f32.mxu0 0.0
        %1403 = vmatmul.mubr.f32.gmra.mrb[0].mxu0 %v1200
        %v1404 = vpop.f32.mrb[0].mxu0
        %v1405 = vadd.f32 %v1081, %v1404
        %v1406 = vpop.f32.mrb[0].mxu0
        %1407 = vmatprep.mubr.f32.mxu0 0.0
        %1408 = vmatmul.mubr.f32.gmra.mrb[0].mxu0 %v1203
        %v1409 = vpop.f32.mrb[0].mxu0
        %v1410 = vadd.f32 %v1086, %v1409
        %v1411 = vpop.f32.mrb[0].mxu0
        %1412 = vmatprep.mubr.f32.mxu0 0.0
        %1413 = vmatmul.mubr.f32.gmra.mrb[0].mxu0 %v1206
        %v1414 = vpop.f32.mrb[0].mxu0
        %v1415 = vadd.f32 %v1091, %v1414
        %v1416 = vpop.f32.mrb[0].mxu0
        %1417 = vmatprep.mubr.f32.mxu0 0.0
        %1418 = vmatmul.mubr.f32.gmra.mrb[0].mxu0 %v1209
        %v1419 = vpop.f32.mrb[0].mxu0
        %v1420 = vadd.f32 %v1096, %v1419
        %v1421 = vpop.f32.mrb[0].mxu0
        %1422 = vmatprep.mubr.f32.mxu0 0.0
        %1423 = vmatmul.mubr.f32.gmra.mrb[0].mxu0 %v1212
        %v1424 = vpop.f32.mrb[0].mxu0
        %v1425 = vadd.f32 %v1101, %v1424
        %v1426 = vpop.f32.mrb[0].mxu0
        %1427 = vmatprep.mubr.f32.mxu0 0.0
        %1428 = vmatmul.mubr.f32.gmra.mrb[0].mxu0 %v1215
        %v1429 = vpop.f32.mrb[0].mxu0
        %v1430 = vadd.f32 %v1106, %v1429
        %v1431 = vpop.f32.mrb[0].mxu0
        %1432 = vmatprep.mubr.f32.mxu0 0.0
        %1433 = vmatmul.mubr.f32.gmra.mrb[0].mxu0 %v1218
        %v1434 = vpop.f32.mrb[0].mxu0
        %v1435 = vadd.f32 %v1111, %v1434
        %v1436 = vpop.f32.mrb[0].mxu0
        %1437 = vmatprep.mubr.f32.mxu0 0.0
        %1438 = vmatmul.mubr.f32.gmra.mrb[0].mxu0 %v1221
        %v1439 = vpop.f32.mrb[0].mxu0
        %v1440 = vadd.f32 %v1116, %v1439
        %v1441 = vpop.f32.mrb[0].mxu0
        %1442 = vmatprep.mubr.f32.mxu0 0.0
        %1443 = vmatmul.mubr.f32.gmra.mrb[0].mxu0 %v1224
        %v1444 = vpop.f32.mrb[0].mxu0
        %v1445 = vadd.f32 %v1121, %v1444
        %v1446 = vpop.f32.mrb[0].mxu0
        %1447 = vmatprep.mubr.f32.mxu0 0.0
        %1448 = vmatmul.mubr.f32.gmra.mrb[0].mxu0 %v1227
        %v1449 = vpop.f32.mrb[0].mxu0
        %v1450 = vadd.f32 %v1126, %v1449
        %v1451 = vpop.f32.mrb[0].mxu0
        %1452 = vmatprep.mubr.f32.mxu0 0.0
        %1453 = vmatmul.mubr.f32.gmra.mrb[0].mxu0 %v1230
        %v1454 = vpop.f32.mrb[0].mxu0
        %v1455 = vadd.f32 %v1131, %v1454
        %v1456 = vpop.f32.mrb[0].mxu0
        %1457 = vmatprep.mubr.f32.mxu0 0.0
        %1458 = vmatmul.mubr.f32.gmra.mrb[0].mxu0 %v1233
        %v1459 = vpop.f32.mrb[0].mxu0
        %v1460 = vadd.f32 %v1136, %v1459
        %v1461 = vpop.f32.mrb[0].mxu0
        %1462 = vdwg.mxu0
        %v1463 = vrot.slane %v262, 1
        %v1464 = vrot.slane %v263, 1
        %v1465 = vrot.slane %v264, 1
        %v1466 = vrot.slane %v265, 1
        %v1467 = vrot.slane %v266, 1
        %v1468 = vrot.slane %v267, 1
        %v1469 = vrot.slane %v268, 1
        %v1470 = vrot.slane %v269, 1
        %v1471 = vrot.slane %v270, 1
        %v1472 = vrot.slane %v271, 1
        %v1473 = vrot.slane %v272, 1
        %v1474 = vrot.slane %v273, 1
        %v1475 = vrot.slane %v274, 1
        %v1476 = vrot.slane %v275, 1
        %v1477 = vrot.slane %v276, 1
        %v1478 = vrot.slane %v277, 1
        %v1479 = vrot.slane %v278, 1
        %v1480 = vrot.slane %v279, 1
        %v1481 = vrot.slane %v280, 1
        %v1482 = vrot.slane %v281, 1
        %v1483 = vrot.slane %v282, 1
        %v1484 = vrot.slane %v283, 1
        %v1485 = vrot.slane %v284, 1
        %v1486 = vrot.slane %v285, 1
        %v1487 = vrot.slane %v286, 1
        %v1488 = vrot.slane %v287, 1
        %v1489 = vrot.slane %v288, 1
        %v1490 = vrot.slane %v289, 1
        %v1491 = vrot.slane %v290, 1
        %v1492 = vrot.slane %v291, 1
        %v1493 = vrot.slane %v292, 1
        %v1494 = vrot.slane %v293, 1
        %vm1495 = vcmp.lt.s32.totalorder %v327, 7
        %v1496 = vsel %vm1495, %v1493, %v1494
        %v1497 = vsel %vm1495, %v1492, %v1493
        %v1498 = vsel %vm1495, %v1491, %v1492
        %v1499 = vsel %vm1495, %v1490, %v1491
        %v1500 = vsel %vm1495, %v1489, %v1490
        %v1501 = vsel %vm1495, %v1488, %v1489
        %v1502 = vsel %vm1495, %v1487, %v1488
        %v1503 = vsel %vm1495, %v1486, %v1487
        %v1504 = vsel %vm1495, %v1485, %v1486
        %v1505 = vsel %vm1495, %v1484, %v1485
        %v1506 = vsel %vm1495, %v1483, %v1484
        %v1507 = vsel %vm1495, %v1482, %v1483
        %v1508 = vsel %vm1495, %v1481, %v1482
        %v1509 = vsel %vm1495, %v1480, %v1481
        %v1510 = vsel %vm1495, %v1479, %v1480
        %v1511 = vsel %vm1495, %v1478, %v1479
        %v1512 = vsel %vm1495, %v1477, %v1478
        %v1513 = vsel %vm1495, %v1476, %v1477
        %v1514 = vsel %vm1495, %v1475, %v1476
        %v1515 = vsel %vm1495, %v1474, %v1475
        %v1516 = vsel %vm1495, %v1473, %v1474
        %v1517 = vsel %vm1495, %v1472, %v1473
        %v1518 = vsel %vm1495, %v1471, %v1472
        %v1519 = vsel %vm1495, %v1470, %v1471
        %v1520 = vsel %vm1495, %v1469, %v1470
        %v1521 = vsel %vm1495, %v1468, %v1469
        %v1522 = vsel %vm1495, %v1467, %v1468
        %v1523 = vsel %vm1495, %v1466, %v1467
        %v1524 = vsel %vm1495, %v1465, %v1466
        %v1525 = vsel %vm1495, %v1464, %v1465
        %v1526 = vsel %vm1495, %v1463, %v1464
        %v1527 = vsel %vm1495, %v1494, %v1463
        %s1528 = scalar_lea.vmem %s2, 512
        %v1529 = vld [vmem:[%s1528] sm:$0xff]
        %v1530 = vld [vmem:[%s1528 + $0x8] sm:$0xff]
        %v1531 = vld [vmem:[%s1528 + $0x10] sm:$0xff]
        %v1532 = vld [vmem:[%s1528 + $0x18] sm:$0xff]
        %v1533 = vld [vmem:[%s1528 + $0x20] sm:$0xff]
        %v1534 = vld [vmem:[%s1528 + $0x28] sm:$0xff]
        %v1535 = vld [vmem:[%s1528 + $0x30] sm:$0xff]
        %v1536 = vld [vmem:[%s1528 + $0x38] sm:$0xff]
        %v1537 = vld [vmem:[%s1528 + $0x40] sm:$0xff]
        %v1538 = vld [vmem:[%s1528 + $0x48] sm:$0xff]
        %v1539 = vld [vmem:[%s1528 + $0x50] sm:$0xff]
        %v1540 = vld [vmem:[%s1528 + $0x58] sm:$0xff]
        %v1541 = vld [vmem:[%s1528 + $0x60] sm:$0xff]
        %v1542 = vld [vmem:[%s1528 + $0x68] sm:$0xff]
        %v1543 = vld [vmem:[%s1528 + $0x70] sm:$0xff]
        %v1544 = vld [vmem:[%s1528 + $0x78] sm:$0xff]
        %v1545 = vld [vmem:[%s1528 + $0x80] sm:$0xff]
        %v1546 = vld [vmem:[%s1528 + $0x88] sm:$0xff]
        %v1547 = vld [vmem:[%s1528 + $0x90] sm:$0xff]
        %v1548 = vld [vmem:[%s1528 + $0x98] sm:$0xff]
        %v1549 = vld [vmem:[%s1528 + $0xa0] sm:$0xff]
        %v1550 = vld [vmem:[%s1528 + $0xa8] sm:$0xff]
        %v1551 = vld [vmem:[%s1528 + $0xb0] sm:$0xff]
        %v1552 = vld [vmem:[%s1528 + $0xb8] sm:$0xff]
        %v1553 = vld [vmem:[%s1528 + $0xc0] sm:$0xff]
        %v1554 = vld [vmem:[%s1528 + $0xc8] sm:$0xff]
        %v1555 = vld [vmem:[%s1528 + $0xd0] sm:$0xff]
        %v1556 = vld [vmem:[%s1528 + $0xd8] sm:$0xff]
        %v1557 = vld [vmem:[%s1528 + $0xe0] sm:$0xff]
        %v1558 = vld [vmem:[%s1528 + $0xe8] sm:$0xff]
        %v1559 = vld [vmem:[%s1528 + $0xf0] sm:$0xff]
        %v1560 = vld [vmem:[%s1528 + $0xf8] sm:$0xff]
        %1562 = vset.pattern.permute.xlu0 0
        %1563 = vperm.xlu0 %1562, %v1529
        %v1564 = vpop.permute.xlu0 %1563
        %1567 = vset.pattern.permute.xlu0 0
        %1568 = vperm.xlu0 %1567, %v1530
        %v1569 = vpop.permute.xlu0 %1568
        %1572 = vset.pattern.permute.xlu0 0
        %1573 = vperm.xlu0 %1572, %v1531
        %v1574 = vpop.permute.xlu0 %1573
        %1577 = vset.pattern.permute.xlu0 0
        %1578 = vperm.xlu0 %1577, %v1532
        %v1579 = vpop.permute.xlu0 %1578
        %1582 = vset.pattern.permute.xlu0 0
        %1583 = vperm.xlu0 %1582, %v1533
        %v1584 = vpop.permute.xlu0 %1583
        %1587 = vset.pattern.permute.xlu0 0
        %1588 = vperm.xlu0 %1587, %v1534
        %v1589 = vpop.permute.xlu0 %1588
        %1592 = vset.pattern.permute.xlu0 0
        %1593 = vperm.xlu0 %1592, %v1535
        %v1594 = vpop.permute.xlu0 %1593
        %1597 = vset.pattern.permute.xlu0 0
        %1598 = vperm.xlu0 %1597, %v1536
        %v1599 = vpop.permute.xlu0 %1598
        %1602 = vset.pattern.permute.xlu0 0
        %1603 = vperm.xlu0 %1602, %v1537
        %v1604 = vpop.permute.xlu0 %1603
        %1607 = vset.pattern.permute.xlu0 0
        %1608 = vperm.xlu0 %1607, %v1538
        %v1609 = vpop.permute.xlu0 %1608
        %1612 = vset.pattern.permute.xlu0 0
        %1613 = vperm.xlu0 %1612, %v1539
        %v1614 = vpop.permute.xlu0 %1613
        %1617 = vset.pattern.permute.xlu0 0
        %1618 = vperm.xlu0 %1617, %v1540
        %v1619 = vpop.permute.xlu0 %1618
        %1622 = vset.pattern.permute.xlu0 0
        %1623 = vperm.xlu0 %1622, %v1541
        %v1624 = vpop.permute.xlu0 %1623
        %1627 = vset.pattern.permute.xlu0 0
        %1628 = vperm.xlu0 %1627, %v1542
        %v1629 = vpop.permute.xlu0 %1628
        %1632 = vset.pattern.permute.xlu0 0
        %1633 = vperm.xlu0 %1632, %v1543
        %v1634 = vpop.permute.xlu0 %1633
        %1637 = vset.pattern.permute.xlu0 0
        %1638 = vperm.xlu0 %1637, %v1544
        %v1639 = vpop.permute.xlu0 %1638
        %1642 = vset.pattern.permute.xlu0 0
        %1643 = vperm.xlu0 %1642, %v1545
        %v1644 = vpop.permute.xlu0 %1643
        %1647 = vset.pattern.permute.xlu0 0
        %1648 = vperm.xlu0 %1647, %v1546
        %v1649 = vpop.permute.xlu0 %1648
        %1652 = vset.pattern.permute.xlu0 0
        %1653 = vperm.xlu0 %1652, %v1547
        %v1654 = vpop.permute.xlu0 %1653
        %1657 = vset.pattern.permute.xlu0 0
        %1658 = vperm.xlu0 %1657, %v1548
        %v1659 = vpop.permute.xlu0 %1658
        %1662 = vset.pattern.permute.xlu0 0
        %1663 = vperm.xlu0 %1662, %v1549
        %v1664 = vpop.permute.xlu0 %1663
        %1667 = vset.pattern.permute.xlu0 0
        %1668 = vperm.xlu0 %1667, %v1550
        %v1669 = vpop.permute.xlu0 %1668
        %1672 = vset.pattern.permute.xlu0 0
        %1673 = vperm.xlu0 %1672, %v1551
        %v1674 = vpop.permute.xlu0 %1673
        %1677 = vset.pattern.permute.xlu0 0
        %1678 = vperm.xlu0 %1677, %v1552
        %v1679 = vpop.permute.xlu0 %1678
        %1682 = vset.pattern.permute.xlu0 0
        %1683 = vperm.xlu0 %1682, %v1553
        %v1684 = vpop.permute.xlu0 %1683
        %1687 = vset.pattern.permute.xlu0 0
        %1688 = vperm.xlu0 %1687, %v1554
        %v1689 = vpop.permute.xlu0 %1688
        %1692 = vset.pattern.permute.xlu0 0
        %1693 = vperm.xlu0 %1692, %v1555
        %v1694 = vpop.permute.xlu0 %1693
        %1697 = vset.pattern.permute.xlu0 0
        %1698 = vperm.xlu0 %1697, %v1556
        %v1699 = vpop.permute.xlu0 %1698
        %1702 = vset.pattern.permute.xlu0 0
        %1703 = vperm.xlu0 %1702, %v1557
        %v1704 = vpop.permute.xlu0 %1703
        %1707 = vset.pattern.permute.xlu0 0
        %1708 = vperm.xlu0 %1707, %v1558
        %v1709 = vpop.permute.xlu0 %1708
        %1712 = vset.pattern.permute.xlu0 0
        %1713 = vperm.xlu0 %1712, %v1559
        %v1714 = vpop.permute.xlu0 %1713
        %1717 = vset.pattern.permute.xlu0 0
        %1718 = vperm.xlu0 %1717, %v1560
        %v1719 = vpop.permute.xlu0 %1718
        %v1721 = vmul.f32 %v1496, %v1564
        %v1722 = vmul.f32 %v1527, %v1569
        %v1723 = vmul.f32 %v1526, %v1574
        %v1724 = vmul.f32 %v1525, %v1579
        %v1725 = vmul.f32 %v1524, %v1584
        %v1726 = vmul.f32 %v1523, %v1589
        %v1727 = vmul.f32 %v1522, %v1594
        %v1728 = vmul.f32 %v1521, %v1599
        %v1729 = vmul.f32 %v1520, %v1604
        %v1730 = vmul.f32 %v1519, %v1609
        %v1731 = vmul.f32 %v1518, %v1614
        %v1732 = vmul.f32 %v1517, %v1619
        %v1733 = vmul.f32 %v1516, %v1624
        %v1734 = vmul.f32 %v1515, %v1629
        %v1735 = vmul.f32 %v1514, %v1634
        %v1736 = vmul.f32 %v1513, %v1639
        %v1737 = vmul.f32 %v1512, %v1644
        %v1738 = vmul.f32 %v1511, %v1649
        %v1739 = vmul.f32 %v1510, %v1654
        %v1740 = vmul.f32 %v1509, %v1659
        %v1741 = vmul.f32 %v1508, %v1664
        %v1742 = vmul.f32 %v1507, %v1669
        %v1743 = vmul.f32 %v1506, %v1674
        %v1744 = vmul.f32 %v1505, %v1679
        %v1745 = vmul.f32 %v1504, %v1684
        %v1746 = vmul.f32 %v1503, %v1689
        %v1747 = vmul.f32 %v1502, %v1694
        %v1748 = vmul.f32 %v1501, %v1699
        %v1749 = vmul.f32 %v1500, %v1704
        %v1750 = vmul.f32 %v1499, %v1709
        %v1751 = vmul.f32 %v1498, %v1714
        %v1752 = vmul.f32 %v1497, %v1719
        %s1753 = scalar_lea.vmem %s3, 8
        %v1754 = vld [vmem:[%s1753] sm:$0x7]
        %v1756 = vsel %vm813, %v1721, 0
        %v1759 = vsel %vm813, %v1722, 0
        %v1762 = vsel %vm813, %v1723, 0
        %v1765 = vsel %vm813, %v1724, 0
        %v1768 = vsel %vm813, %v1725, 0
        %v1771 = vsel %vm813, %v1726, 0
        %v1774 = vsel %vm813, %v1727, 0
        %v1777 = vsel %vm813, %v1728, 0
        %v1780 = vsel %vm813, %v1729, 0
        %v1783 = vsel %vm813, %v1730, 0
        %v1786 = vsel %vm813, %v1731, 0
        %v1789 = vsel %vm813, %v1732, 0
        %v1792 = vsel %vm813, %v1733, 0
        %v1795 = vsel %vm813, %v1734, 0
        %v1798 = vsel %vm813, %v1735, 0
        %v1801 = vsel %vm813, %v1736, 0
        %v1804 = vsel %vm813, %v1737, 0
        %v1807 = vsel %vm813, %v1738, 0
        %v1810 = vsel %vm813, %v1739, 0
        %v1813 = vsel %vm813, %v1740, 0
        %v1816 = vsel %vm813, %v1741, 0
        %v1819 = vsel %vm813, %v1742, 0
        %v1822 = vsel %vm813, %v1743, 0
        %v1825 = vsel %vm813, %v1744, 0
        %v1828 = vsel %vm813, %v1745, 0
        %v1831 = vsel %vm813, %v1746, 0
        %v1834 = vsel %vm813, %v1747, 0
        %v1837 = vsel %vm813, %v1748, 0
        %v1840 = vsel %vm813, %v1749, 0
        %v1843 = vsel %vm813, %v1750, 0
        %v1846 = vsel %vm813, %v1751, 0
        %v1849 = vsel %vm813, %v1752, 0
        %v1852 = vsel %vm910, %v1754, 0
        %1854 = vmatprep.subr.mxu0 0.0
        %1855 = vmatpush1.msra.mxu0 %v1852
        %1856 = vmatprep.subr.mxu0 0.0
        %1857 = vmatpush1.msra.mxu0 0.0
        %1858 = vmatprep.subr.mxu0 0.0
        %1859 = vmatpush1.msra.mxu0 0.0
        %1860 = vmatprep.subr.mxu0 0.0
        %1861 = vmatpush1.msra.mxu0 0.0
        %1862 = vmatprep.subr.mxu0 0.0
        %1863 = vmatpush1.msra.mxu0 0.0
        %1864 = vmatprep.subr.mxu0 0.0
        %1865 = vmatpush1.msra.mxu0 0.0
        %1866 = vmatprep.subr.mxu0 0.0
        %1867 = vmatpush1.msra.mxu0 0.0
        %1868 = vmatprep.subr.mxu0 0.0
        %1869 = vmatpush1.msra.mxu0 0.0
        %1870 = vmatprep.subr.mxu0 0.0
        %1871 = vmatpush1.msra.mxu0 0.0
        %1872 = vmatprep.subr.mxu0 0.0
        %1873 = vmatpush1.msra.mxu0 0.0
        %1874 = vmatprep.subr.mxu0 0.0
        %1875 = vmatpush1.msra.mxu0 0.0
        %1876 = vmatprep.subr.mxu0 0.0
        %1877 = vmatpush1.msra.mxu0 0.0
        %1878 = vmatprep.subr.mxu0 0.0
        %1879 = vmatpush1.msra.mxu0 0.0
        %1880 = vmatprep.subr.mxu0 0.0
        %1881 = vmatpush1.msra.mxu0 0.0
        %1882 = vmatprep.subr.mxu0 0.0
        %1883 = vmatpush1.msra.mxu0 0.0
        %1884 = vmatprep.subr.mxu0 0.0
        %1885 = vmatpush1.msra.mxu0 0.0
        %1886 = vmatprep.subr.mxu0 0.0
        %1887 = vmatpush1.msra.mxu0 0.0
        %1888 = vmatprep.subr.mxu0 0.0
        %1889 = vmatpush1.msra.mxu0 0.0
        %1890 = vmatprep.subr.mxu0 0.0
        %1891 = vmatpush1.msra.mxu0 0.0
        %1892 = vmatprep.subr.mxu0 0.0
        %1893 = vmatpush1.msra.mxu0 0.0
        %1894 = vmatprep.subr.mxu0 0.0
        %1895 = vmatpush1.msra.mxu0 0.0
        %1896 = vmatprep.subr.mxu0 0.0
        %1897 = vmatpush1.msra.mxu0 0.0
        %1898 = vmatprep.subr.mxu0 0.0
        %1899 = vmatpush1.msra.mxu0 0.0
        %1900 = vmatprep.subr.mxu0 0.0
        %1901 = vmatpush1.msra.mxu0 0.0
        %1902 = vmatprep.subr.mxu0 0.0
        %1903 = vmatpush1.msra.mxu0 0.0
        %1904 = vmatprep.subr.mxu0 0.0
        %1905 = vmatpush1.msra.mxu0 0.0
        %1906 = vmatprep.subr.mxu0 0.0
        %1907 = vmatpush1.msra.mxu0 0.0
        %1908 = vmatprep.subr.mxu0 0.0
        %1909 = vmatpush1.msra.mxu0 0.0
        %1910 = vmatprep.subr.mxu0 0.0
        %1911 = vmatpush1.msra.mxu0 0.0
        %1912 = vmatprep.subr.mxu0 0.0
        %1913 = vmatpush1.msra.mxu0 0.0
        %1914 = vmatprep.subr.mxu0 0.0
        %1915 = vmatpush1.msra.mxu0 0.0
        %1916 = vmatprep.subr.mxu0 0.0
        %1917 = vmatpush1.msra.mxu0 0.0
        %1918 = vmatprep.mubr.f32.mxu0 0.0
        %1919 = vmatmul.mubr.f32.gmra.mrb[0].mxu0 %v1756
        %v1920 = vpop.f32.mrb[0].mxu0
        %v1921 = vadd.f32 0.0, %v1920
        %v1922 = vpop.f32.mrb[0].mxu0
        %1923 = vmatprep.mubr.f32.mxu0 0.0
        %1924 = vmatmul.mubr.f32.gmra.mrb[0].mxu0 %v1759
        %v1925 = vpop.f32.mrb[0].mxu0
        %v1926 = vadd.f32 0.0, %v1925
        %v1927 = vpop.f32.mrb[0].mxu0
        %1928 = vmatprep.mubr.f32.mxu0 0.0
        %1929 = vmatmul.mubr.f32.gmra.mrb[0].mxu0 %v1762
        %v1930 = vpop.f32.mrb[0].mxu0
        %v1931 = vadd.f32 0.0, %v1930
        %v1932 = vpop.f32.mrb[0].mxu0
        %1933 = vmatprep.mubr.f32.mxu0 0.0
        %1934 = vmatmul.mubr.f32.gmra.mrb[0].mxu0 %v1765
        %v1935 = vpop.f32.mrb[0].mxu0
        %v1936 = vadd.f32 0.0, %v1935
        %v1937 = vpop.f32.mrb[0].mxu0
        %1938 = vmatprep.mubr.f32.mxu0 0.0
        %1939 = vmatmul.mubr.f32.gmra.mrb[0].mxu0 %v1768
        %v1940 = vpop.f32.mrb[0].mxu0
        %v1941 = vadd.f32 0.0, %v1940
        %v1942 = vpop.f32.mrb[0].mxu0
        %1943 = vmatprep.mubr.f32.mxu0 0.0
        %1944 = vmatmul.mubr.f32.gmra.mrb[0].mxu0 %v1771
        %v1945 = vpop.f32.mrb[0].mxu0
        %v1946 = vadd.f32 0.0, %v1945
        %v1947 = vpop.f32.mrb[0].mxu0
        %1948 = vmatprep.mubr.f32.mxu0 0.0
        %1949 = vmatmul.mubr.f32.gmra.mrb[0].mxu0 %v1774
        %v1950 = vpop.f32.mrb[0].mxu0
        %v1951 = vadd.f32 0.0, %v1950
        %v1952 = vpop.f32.mrb[0].mxu0
        %1953 = vmatprep.mubr.f32.mxu0 0.0
        %1954 = vmatmul.mubr.f32.gmra.mrb[0].mxu0 %v1777
        %v1955 = vpop.f32.mrb[0].mxu0
        %v1956 = vadd.f32 0.0, %v1955
        %v1957 = vpop.f32.mrb[0].mxu0
        %1958 = vmatprep.mubr.f32.mxu0 0.0
        %1959 = vmatmul.mubr.f32.gmra.mrb[0].mxu0 %v1780
        %v1960 = vpop.f32.mrb[0].mxu0
        %v1961 = vadd.f32 0.0, %v1960
        %v1962 = vpop.f32.mrb[0].mxu0
        %1963 = vmatprep.mubr.f32.mxu0 0.0
        %1964 = vmatmul.mubr.f32.gmra.mrb[0].mxu0 %v1783
        %v1965 = vpop.f32.mrb[0].mxu0
        %v1966 = vadd.f32 0.0, %v1965
        %v1967 = vpop.f32.mrb[0].mxu0
        %1968 = vmatprep.mubr.f32.mxu0 0.0
        %1969 = vmatmul.mubr.f32.gmra.mrb[0].mxu0 %v1786
        %v1970 = vpop.f32.mrb[0].mxu0
        %v1971 = vadd.f32 0.0, %v1970
        %v1972 = vpop.f32.mrb[0].mxu0
        %1973 = vmatprep.mubr.f32.mxu0 0.0
        %1974 = vmatmul.mubr.f32.gmra.mrb[0].mxu0 %v1789
        %v1975 = vpop.f32.mrb[0].mxu0
        %v1976 = vadd.f32 0.0, %v1975
        %v1977 = vpop.f32.mrb[0].mxu0
        %1978 = vmatprep.mubr.f32.mxu0 0.0
        %1979 = vmatmul.mubr.f32.gmra.mrb[0].mxu0 %v1792
        %v1980 = vpop.f32.mrb[0].mxu0
        %v1981 = vadd.f32 0.0, %v1980
        %v1982 = vpop.f32.mrb[0].mxu0
        %1983 = vmatprep.mubr.f32.mxu0 0.0
        %1984 = vmatmul.mubr.f32.gmra.mrb[0].mxu0 %v1795
        %v1985 = vpop.f32.mrb[0].mxu0
        %v1986 = vadd.f32 0.0, %v1985
        %v1987 = vpop.f32.mrb[0].mxu0
        %1988 = vmatprep.mubr.f32.mxu0 0.0
        %1989 = vmatmul.mubr.f32.gmra.mrb[0].mxu0 %v1798
        %v1990 = vpop.f32.mrb[0].mxu0
        %v1991 = vadd.f32 0.0, %v1990
        %v1992 = vpop.f32.mrb[0].mxu0
        %1993 = vmatprep.mubr.f32.mxu0 0.0
        %1994 = vmatmul.mubr.f32.gmra.mrb[0].mxu0 %v1801
        %v1995 = vpop.f32.mrb[0].mxu0
        %v1996 = vadd.f32 0.0, %v1995
        %v1997 = vpop.f32.mrb[0].mxu0
        %1998 = vmatprep.mubr.f32.mxu0 0.0
        %1999 = vmatmul.mubr.f32.gmra.mrb[0].mxu0 %v1804
        %v2000 = vpop.f32.mrb[0].mxu0
        %v2001 = vadd.f32 0.0, %v2000
        %v2002 = vpop.f32.mrb[0].mxu0
        %2003 = vmatprep.mubr.f32.mxu0 0.0
        %2004 = vmatmul.mubr.f32.gmra.mrb[0].mxu0 %v1807
        %v2005 = vpop.f32.mrb[0].mxu0
        %v2006 = vadd.f32 0.0, %v2005
        %v2007 = vpop.f32.mrb[0].mxu0
        %2008 = vmatprep.mubr.f32.mxu0 0.0
        %2009 = vmatmul.mubr.f32.gmra.mrb[0].mxu0 %v1810
        %v2010 = vpop.f32.mrb[0].mxu0
        %v2011 = vadd.f32 0.0, %v2010
        %v2012 = vpop.f32.mrb[0].mxu0
        %2013 = vmatprep.mubr.f32.mxu0 0.0
        %2014 = vmatmul.mubr.f32.gmra.mrb[0].mxu0 %v1813
        %v2015 = vpop.f32.mrb[0].mxu0
        %v2016 = vadd.f32 0.0, %v2015
        %v2017 = vpop.f32.mrb[0].mxu0
        %2018 = vmatprep.mubr.f32.mxu0 0.0
        %2019 = vmatmul.mubr.f32.gmra.mrb[0].mxu0 %v1816
        %v2020 = vpop.f32.mrb[0].mxu0
        %v2021 = vadd.f32 0.0, %v2020
        %v2022 = vpop.f32.mrb[0].mxu0
        %2023 = vmatprep.mubr.f32.mxu0 0.0
        %2024 = vmatmul.mubr.f32.gmra.mrb[0].mxu0 %v1819
        %v2025 = vpop.f32.mrb[0].mxu0
        %v2026 = vadd.f32 0.0, %v2025
        %v2027 = vpop.f32.mrb[0].mxu0
        %2028 = vmatprep.mubr.f32.mxu0 0.0
        %2029 = vmatmul.mubr.f32.gmra.mrb[0].mxu0 %v1822
        %v2030 = vpop.f32.mrb[0].mxu0
        %v2031 = vadd.f32 0.0, %v2030
        %v2032 = vpop.f32.mrb[0].mxu0
        %2033 = vmatprep.mubr.f32.mxu0 0.0
        %2034 = vmatmul.mubr.f32.gmra.mrb[0].mxu0 %v1825
        %v2035 = vpop.f32.mrb[0].mxu0
        %v2036 = vadd.f32 0.0, %v2035
        %v2037 = vpop.f32.mrb[0].mxu0
        %2038 = vmatprep.mubr.f32.mxu0 0.0
        %2039 = vmatmul.mubr.f32.gmra.mrb[0].mxu0 %v1828
        %v2040 = vpop.f32.mrb[0].mxu0
        %v2041 = vadd.f32 0.0, %v2040
        %v2042 = vpop.f32.mrb[0].mxu0
        %2043 = vmatprep.mubr.f32.mxu0 0.0
        %2044 = vmatmul.mubr.f32.gmra.mrb[0].mxu0 %v1831
        %v2045 = vpop.f32.mrb[0].mxu0
        %v2046 = vadd.f32 0.0, %v2045
        %v2047 = vpop.f32.mrb[0].mxu0
        %2048 = vmatprep.mubr.f32.mxu0 0.0
        %2049 = vmatmul.mubr.f32.gmra.mrb[0].mxu0 %v1834
        %v2050 = vpop.f32.mrb[0].mxu0
        %v2051 = vadd.f32 0.0, %v2050
        %v2052 = vpop.f32.mrb[0].mxu0
        %2053 = vmatprep.mubr.f32.mxu0 0.0
        %2054 = vmatmul.mubr.f32.gmra.mrb[0].mxu0 %v1837
        %v2055 = vpop.f32.mrb[0].mxu0
        %v2056 = vadd.f32 0.0, %v2055
        %v2057 = vpop.f32.mrb[0].mxu0
        %2058 = vmatprep.mubr.f32.mxu0 0.0
        %2059 = vmatmul.mubr.f32.gmra.mrb[0].mxu0 %v1840
        %v2060 = vpop.f32.mrb[0].mxu0
        %v2061 = vadd.f32 0.0, %v2060
        %v2062 = vpop.f32.mrb[0].mxu0
        %2063 = vmatprep.mubr.f32.mxu0 0.0
        %2064 = vmatmul.mubr.f32.gmra.mrb[0].mxu0 %v1843
        %v2065 = vpop.f32.mrb[0].mxu0
        %v2066 = vadd.f32 0.0, %v2065
        %v2067 = vpop.f32.mrb[0].mxu0
        %2068 = vmatprep.mubr.f32.mxu0 0.0
        %2069 = vmatmul.mubr.f32.gmra.mrb[0].mxu0 %v1846
        %v2070 = vpop.f32.mrb[0].mxu0
        %v2071 = vadd.f32 0.0, %v2070
        %v2072 = vpop.f32.mrb[0].mxu0
        %2073 = vmatprep.mubr.f32.mxu0 0.0
        %2074 = vmatmul.mubr.f32.gmra.mrb[0].mxu0 %v1849
        %v2075 = vpop.f32.mrb[0].mxu0
        %v2076 = vadd.f32 0.0, %v2075
        %v2077 = vpop.f32.mrb[0].mxu0
        %2078 = vdwg.mxu0
        %v2079 = vadd.f32 %v1305, %v1921
        %v2080 = vadd.f32 %v1310, %v1926
        %v2081 = vadd.f32 %v1315, %v1931
        %v2082 = vadd.f32 %v1320, %v1936
        %v2083 = vadd.f32 %v1325, %v1941
        %v2084 = vadd.f32 %v1330, %v1946
        %v2085 = vadd.f32 %v1335, %v1951
        %v2086 = vadd.f32 %v1340, %v1956
        %v2087 = vadd.f32 %v1345, %v1961
        %v2088 = vadd.f32 %v1350, %v1966
        %v2089 = vadd.f32 %v1355, %v1971
        %v2090 = vadd.f32 %v1360, %v1976
        %v2091 = vadd.f32 %v1365, %v1981
        %v2092 = vadd.f32 %v1370, %v1986
        %v2093 = vadd.f32 %v1375, %v1991
        %v2094 = vadd.f32 %v1380, %v1996
        %v2095 = vadd.f32 %v1385, %v2001
        %v2096 = vadd.f32 %v1390, %v2006
        %v2097 = vadd.f32 %v1395, %v2011
        %v2098 = vadd.f32 %v1400, %v2016
        %v2099 = vadd.f32 %v1405, %v2021
        %v2100 = vadd.f32 %v1410, %v2026
        %v2101 = vadd.f32 %v1415, %v2031
        %v2102 = vadd.f32 %v1420, %v2036
        %v2103 = vadd.f32 %v1425, %v2041
        %v2104 = vadd.f32 %v1430, %v2046
        %v2105 = vadd.f32 %v1435, %v2051
        %v2106 = vadd.f32 %v1440, %v2056
        %v2107 = vadd.f32 %v1445, %v2061
        %v2108 = vadd.f32 %v1450, %v2066
        %v2109 = vadd.f32 %v1455, %v2071
        %v2110 = vadd.f32 %v1460, %v2076
        %s2111 = scalar_lea.vmem %s2, 768
        %v2112 = vld [vmem:[%s2111] sm:$0xff]
        %v2113 = vld [vmem:[%s2111 + $0x8] sm:$0xff]
        %v2114 = vld [vmem:[%s2111 + $0x10] sm:$0xff]
        %v2115 = vld [vmem:[%s2111 + $0x18] sm:$0xff]
        %v2116 = vld [vmem:[%s2111 + $0x20] sm:$0xff]
        %v2117 = vld [vmem:[%s2111 + $0x28] sm:$0xff]
        %v2118 = vld [vmem:[%s2111 + $0x30] sm:$0xff]
        %v2119 = vld [vmem:[%s2111 + $0x38] sm:$0xff]
        %v2120 = vld [vmem:[%s2111 + $0x40] sm:$0xff]
        %v2121 = vld [vmem:[%s2111 + $0x48] sm:$0xff]
        %v2122 = vld [vmem:[%s2111 + $0x50] sm:$0xff]
        %v2123 = vld [vmem:[%s2111 + $0x58] sm:$0xff]
        %v2124 = vld [vmem:[%s2111 + $0x60] sm:$0xff]
        %v2125 = vld [vmem:[%s2111 + $0x68] sm:$0xff]
        %v2126 = vld [vmem:[%s2111 + $0x70] sm:$0xff]
        %v2127 = vld [vmem:[%s2111 + $0x78] sm:$0xff]
        %v2128 = vld [vmem:[%s2111 + $0x80] sm:$0xff]
        %v2129 = vld [vmem:[%s2111 + $0x88] sm:$0xff]
        %v2130 = vld [vmem:[%s2111 + $0x90] sm:$0xff]
        %v2131 = vld [vmem:[%s2111 + $0x98] sm:$0xff]
        %v2132 = vld [vmem:[%s2111 + $0xa0] sm:$0xff]
        %v2133 = vld [vmem:[%s2111 + $0xa8] sm:$0xff]
        %v2134 = vld [vmem:[%s2111 + $0xb0] sm:$0xff]
        %v2135 = vld [vmem:[%s2111 + $0xb8] sm:$0xff]
        %v2136 = vld [vmem:[%s2111 + $0xc0] sm:$0xff]
        %v2137 = vld [vmem:[%s2111 + $0xc8] sm:$0xff]
        %v2138 = vld [vmem:[%s2111 + $0xd0] sm:$0xff]
        %v2139 = vld [vmem:[%s2111 + $0xd8] sm:$0xff]
        %v2140 = vld [vmem:[%s2111 + $0xe0] sm:$0xff]
        %v2141 = vld [vmem:[%s2111 + $0xe8] sm:$0xff]
        %v2142 = vld [vmem:[%s2111 + $0xf0] sm:$0xff]
        %v2143 = vld [vmem:[%s2111 + $0xf8] sm:$0xff]
        %2145 = vset.pattern.permute.xlu0 0
        %2146 = vperm.xlu0 %2145, %v2112
        %v2147 = vpop.permute.xlu0 %2146
        %2150 = vset.pattern.permute.xlu0 0
        %2151 = vperm.xlu0 %2150, %v2113
        %v2152 = vpop.permute.xlu0 %2151
        %2155 = vset.pattern.permute.xlu0 0
        %2156 = vperm.xlu0 %2155, %v2114
        %v2157 = vpop.permute.xlu0 %2156
        %2160 = vset.pattern.permute.xlu0 0
        %2161 = vperm.xlu0 %2160, %v2115
        %v2162 = vpop.permute.xlu0 %2161
        %2165 = vset.pattern.permute.xlu0 0
        %2166 = vperm.xlu0 %2165, %v2116
        %v2167 = vpop.permute.xlu0 %2166
        %2170 = vset.pattern.permute.xlu0 0
        %2171 = vperm.xlu0 %2170, %v2117
        %v2172 = vpop.permute.xlu0 %2171
        %2175 = vset.pattern.permute.xlu0 0
        %2176 = vperm.xlu0 %2175, %v2118
        %v2177 = vpop.permute.xlu0 %2176
        %2180 = vset.pattern.permute.xlu0 0
        %2181 = vperm.xlu0 %2180, %v2119
        %v2182 = vpop.permute.xlu0 %2181
        %2185 = vset.pattern.permute.xlu0 0
        %2186 = vperm.xlu0 %2185, %v2120
        %v2187 = vpop.permute.xlu0 %2186
        %2190 = vset.pattern.permute.xlu0 0
        %2191 = vperm.xlu0 %2190, %v2121
        %v2192 = vpop.permute.xlu0 %2191
        %2195 = vset.pattern.permute.xlu0 0
        %2196 = vperm.xlu0 %2195, %v2122
        %v2197 = vpop.permute.xlu0 %2196
        %2200 = vset.pattern.permute.xlu0 0
        %2201 = vperm.xlu0 %2200, %v2123
        %v2202 = vpop.permute.xlu0 %2201
        %2205 = vset.pattern.permute.xlu0 0
        %2206 = vperm.xlu0 %2205, %v2124
        %v2207 = vpop.permute.xlu0 %2206
        %2210 = vset.pattern.permute.xlu0 0
        %2211 = vperm.xlu0 %2210, %v2125
        %v2212 = vpop.permute.xlu0 %2211
        %2215 = vset.pattern.permute.xlu0 0
        %2216 = vperm.xlu0 %2215, %v2126
        %v2217 = vpop.permute.xlu0 %2216
        %2220 = vset.pattern.permute.xlu0 0
        %2221 = vperm.xlu0 %2220, %v2127
        %v2222 = vpop.permute.xlu0 %2221
        %2225 = vset.pattern.permute.xlu0 0
        %2226 = vperm.xlu0 %2225, %v2128
        %v2227 = vpop.permute.xlu0 %2226
        %2230 = vset.pattern.permute.xlu0 0
        %2231 = vperm.xlu0 %2230, %v2129
        %v2232 = vpop.permute.xlu0 %2231
        %2235 = vset.pattern.permute.xlu0 0
        %2236 = vperm.xlu0 %2235, %v2130
        %v2237 = vpop.permute.xlu0 %2236
        %2240 = vset.pattern.permute.xlu0 0
        %2241 = vperm.xlu0 %2240, %v2131
        %v2242 = vpop.permute.xlu0 %2241
        %2245 = vset.pattern.permute.xlu0 0
        %2246 = vperm.xlu0 %2245, %v2132
        %v2247 = vpop.permute.xlu0 %2246
        %2250 = vset.pattern.permute.xlu0 0
        %2251 = vperm.xlu0 %2250, %v2133
        %v2252 = vpop.permute.xlu0 %2251
        %2255 = vset.pattern.permute.xlu0 0
        %2256 = vperm.xlu0 %2255, %v2134
        %v2257 = vpop.permute.xlu0 %2256
        %2260 = vset.pattern.permute.xlu0 0
        %2261 = vperm.xlu0 %2260, %v2135
        %v2262 = vpop.permute.xlu0 %2261
        %2265 = vset.pattern.permute.xlu0 0
        %2266 = vperm.xlu0 %2265, %v2136
        %v2267 = vpop.permute.xlu0 %2266
        %2270 = vset.pattern.permute.xlu0 0
        %2271 = vperm.xlu0 %2270, %v2137
        %v2272 = vpop.permute.xlu0 %2271
        %2275 = vset.pattern.permute.xlu0 0
        %2276 = vperm.xlu0 %2275, %v2138
        %v2277 = vpop.permute.xlu0 %2276
        %2280 = vset.pattern.permute.xlu0 0
        %2281 = vperm.xlu0 %2280, %v2139
        %v2282 = vpop.permute.xlu0 %2281
        %2285 = vset.pattern.permute.xlu0 0
        %2286 = vperm.xlu0 %2285, %v2140
        %v2287 = vpop.permute.xlu0 %2286
        %2290 = vset.pattern.permute.xlu0 0
        %2291 = vperm.xlu0 %2290, %v2141
        %v2292 = vpop.permute.xlu0 %2291
        %2295 = vset.pattern.permute.xlu0 0
        %2296 = vperm.xlu0 %2295, %v2142
        %v2297 = vpop.permute.xlu0 %2296
        %2300 = vset.pattern.permute.xlu0 0
        %2301 = vperm.xlu0 %2300, %v2143
        %v2302 = vpop.permute.xlu0 %2301
        %v2304 = vmul.f32 %v360, %v2147
        %v2305 = vmul.f32 %v359, %v2152
        %v2306 = vmul.f32 %v358, %v2157
        %v2307 = vmul.f32 %v357, %v2162
        %v2308 = vmul.f32 %v356, %v2167
        %v2309 = vmul.f32 %v355, %v2172
        %v2310 = vmul.f32 %v354, %v2177
        %v2311 = vmul.f32 %v353, %v2182
        %v2312 = vmul.f32 %v352, %v2187
        %v2313 = vmul.f32 %v351, %v2192
        %v2314 = vmul.f32 %v350, %v2197
        %v2315 = vmul.f32 %v349, %v2202
        %v2316 = vmul.f32 %v348, %v2207
        %v2317 = vmul.f32 %v347, %v2212
        %v2318 = vmul.f32 %v346, %v2217
        %v2319 = vmul.f32 %v345, %v2222
        %v2320 = vmul.f32 %v344, %v2227
        %v2321 = vmul.f32 %v343, %v2232
        %v2322 = vmul.f32 %v342, %v2237
        %v2323 = vmul.f32 %v341, %v2242
        %v2324 = vmul.f32 %v340, %v2247
        %v2325 = vmul.f32 %v339, %v2252
        %v2326 = vmul.f32 %v338, %v2257
        %v2327 = vmul.f32 %v337, %v2262
        %v2328 = vmul.f32 %v336, %v2267
        %v2329 = vmul.f32 %v335, %v2272
        %v2330 = vmul.f32 %v334, %v2277
        %v2331 = vmul.f32 %v333, %v2282
        %v2332 = vmul.f32 %v332, %v2287
        %v2333 = vmul.f32 %v331, %v2292
        %v2334 = vmul.f32 %v330, %v2297
        %v2335 = vmul.f32 %v329, %v2302
        %s2336 = scalar_lea.vmem %s3, 12
        %v2337 = vld [vmem:[%s2336] sm:$0x7]
        %v2339 = vsel %vm813, %v2304, 0
        %v2342 = vsel %vm813, %v2305, 0
        %v2345 = vsel %vm813, %v2306, 0
        %v2348 = vsel %vm813, %v2307, 0
        %v2351 = vsel %vm813, %v2308, 0
        %v2354 = vsel %vm813, %v2309, 0
        %v2357 = vsel %vm813, %v2310, 0
        %v2360 = vsel %vm813, %v2311, 0
        %v2363 = vsel %vm813, %v2312, 0
        %v2366 = vsel %vm813, %v2313, 0
        %v2369 = vsel %vm813, %v2314, 0
        %v2372 = vsel %vm813, %v2315, 0
        %v2375 = vsel %vm813, %v2316, 0
        %v2378 = vsel %vm813, %v2317, 0
        %v2381 = vsel %vm813, %v2318, 0
        %v2384 = vsel %vm813, %v2319, 0
        %v2387 = vsel %vm813, %v2320, 0
        %v2390 = vsel %vm813, %v2321, 0
        %v2393 = vsel %vm813, %v2322, 0
        %v2396 = vsel %vm813, %v2323, 0
        %v2399 = vsel %vm813, %v2324, 0
        %v2402 = vsel %vm813, %v2325, 0
        %v2405 = vsel %vm813, %v2326, 0
        %v2408 = vsel %vm813, %v2327, 0
        %v2411 = vsel %vm813, %v2328, 0
        %v2414 = vsel %vm813, %v2329, 0
        %v2417 = vsel %vm813, %v2330, 0
        %v2420 = vsel %vm813, %v2331, 0
        %v2423 = vsel %vm813, %v2332, 0
        %v2426 = vsel %vm813, %v2333, 0
        %v2429 = vsel %vm813, %v2334, 0
        %v2432 = vsel %vm813, %v2335, 0
        %v2435 = vsel %vm910, %v2337, 0
        %2437 = vmatprep.subr.mxu0 0.0
        %2438 = vmatpush1.msra.mxu0 %v2435
        %2439 = vmatprep.subr.mxu0 0.0
        %2440 = vmatpush1.msra.mxu0 0.0
        %2441 = vmatprep.subr.mxu0 0.0
        %2442 = vmatpush1.msra.mxu0 0.0
        %2443 = vmatprep.subr.mxu0 0.0
        %2444 = vmatpush1.msra.mxu0 0.0
        %2445 = vmatprep.subr.mxu0 0.0
        %2446 = vmatpush1.msra.mxu0 0.0
        %2447 = vmatprep.subr.mxu0 0.0
        %2448 = vmatpush1.msra.mxu0 0.0
        %2449 = vmatprep.subr.mxu0 0.0
        %2450 = vmatpush1.msra.mxu0 0.0
        %2451 = vmatprep.subr.mxu0 0.0
        %2452 = vmatpush1.msra.mxu0 0.0
        %2453 = vmatprep.subr.mxu0 0.0
        %2454 = vmatpush1.msra.mxu0 0.0
        %2455 = vmatprep.subr.mxu0 0.0
        %2456 = vmatpush1.msra.mxu0 0.0
        %2457 = vmatprep.subr.mxu0 0.0
        %2458 = vmatpush1.msra.mxu0 0.0
        %2459 = vmatprep.subr.mxu0 0.0
        %2460 = vmatpush1.msra.mxu0 0.0
        %2461 = vmatprep.subr.mxu0 0.0
        %2462 = vmatpush1.msra.mxu0 0.0
        %2463 = vmatprep.subr.mxu0 0.0
        %2464 = vmatpush1.msra.mxu0 0.0
        %2465 = vmatprep.subr.mxu0 0.0
        %2466 = vmatpush1.msra.mxu0 0.0
        %2467 = vmatprep.subr.mxu0 0.0
        %2468 = vmatpush1.msra.mxu0 0.0
        %2469 = vmatprep.subr.mxu0 0.0
        %2470 = vmatpush1.msra.mxu0 0.0
        %2471 = vmatprep.subr.mxu0 0.0
        %2472 = vmatpush1.msra.mxu0 0.0
        %2473 = vmatprep.subr.mxu0 0.0
        %2474 = vmatpush1.msra.mxu0 0.0
        %2475 = vmatprep.subr.mxu0 0.0
        %2476 = vmatpush1.msra.mxu0 0.0
        %2477 = vmatprep.subr.mxu0 0.0
        %2478 = vmatpush1.msra.mxu0 0.0
        %2479 = vmatprep.subr.mxu0 0.0
        %2480 = vmatpush1.msra.mxu0 0.0
        %2481 = vmatprep.subr.mxu0 0.0
        %2482 = vmatpush1.msra.mxu0 0.0
        %2483 = vmatprep.subr.mxu0 0.0
        %2484 = vmatpush1.msra.mxu0 0.0
        %2485 = vmatprep.subr.mxu0 0.0
        %2486 = vmatpush1.msra.mxu0 0.0
        %2487 = vmatprep.subr.mxu0 0.0
        %2488 = vmatpush1.msra.mxu0 0.0
        %2489 = vmatprep.subr.mxu0 0.0
        %2490 = vmatpush1.msra.mxu0 0.0
        %2491 = vmatprep.subr.mxu0 0.0
        %2492 = vmatpush1.msra.mxu0 0.0
        %2493 = vmatprep.subr.mxu0 0.0
        %2494 = vmatpush1.msra.mxu0 0.0
        %2495 = vmatprep.subr.mxu0 0.0
        %2496 = vmatpush1.msra.mxu0 0.0
        %2497 = vmatprep.subr.mxu0 0.0
        %2498 = vmatpush1.msra.mxu0 0.0
        %2499 = vmatprep.subr.mxu0 0.0
        %2500 = vmatpush1.msra.mxu0 0.0
        %2501 = vmatprep.mubr.f32.mxu0 0.0
        %2502 = vmatmul.mubr.f32.gmra.mrb[0].mxu0 %v2339
        %v2503 = vpop.f32.mrb[0].mxu0
        %v2504 = vadd.f32 0.0, %v2503
        %v2505 = vpop.f32.mrb[0].mxu0
        %2506 = vmatprep.mubr.f32.mxu0 0.0
        %2507 = vmatmul.mubr.f32.gmra.mrb[0].mxu0 %v2342
        %v2508 = vpop.f32.mrb[0].mxu0
        %v2509 = vadd.f32 0.0, %v2508
        %v2510 = vpop.f32.mrb[0].mxu0
        %2511 = vmatprep.mubr.f32.mxu0 0.0
        %2512 = vmatmul.mubr.f32.gmra.mrb[0].mxu0 %v2345
        %v2513 = vpop.f32.mrb[0].mxu0
        %v2514 = vadd.f32 0.0, %v2513
        %v2515 = vpop.f32.mrb[0].mxu0
        %2516 = vmatprep.mubr.f32.mxu0 0.0
        %2517 = vmatmul.mubr.f32.gmra.mrb[0].mxu0 %v2348
        %v2518 = vpop.f32.mrb[0].mxu0
        %v2519 = vadd.f32 0.0, %v2518
        %v2520 = vpop.f32.mrb[0].mxu0
        %2521 = vmatprep.mubr.f32.mxu0 0.0
        %2522 = vmatmul.mubr.f32.gmra.mrb[0].mxu0 %v2351
        %v2523 = vpop.f32.mrb[0].mxu0
        %v2524 = vadd.f32 0.0, %v2523
        %v2525 = vpop.f32.mrb[0].mxu0
        %2526 = vmatprep.mubr.f32.mxu0 0.0
        %2527 = vmatmul.mubr.f32.gmra.mrb[0].mxu0 %v2354
        %v2528 = vpop.f32.mrb[0].mxu0
        %v2529 = vadd.f32 0.0, %v2528
        %v2530 = vpop.f32.mrb[0].mxu0
        %2531 = vmatprep.mubr.f32.mxu0 0.0
        %2532 = vmatmul.mubr.f32.gmra.mrb[0].mxu0 %v2357
        %v2533 = vpop.f32.mrb[0].mxu0
        %v2534 = vadd.f32 0.0, %v2533
        %v2535 = vpop.f32.mrb[0].mxu0
        %2536 = vmatprep.mubr.f32.mxu0 0.0
        %2537 = vmatmul.mubr.f32.gmra.mrb[0].mxu0 %v2360
        %v2538 = vpop.f32.mrb[0].mxu0
        %v2539 = vadd.f32 0.0, %v2538
        %v2540 = vpop.f32.mrb[0].mxu0
        %2541 = vmatprep.mubr.f32.mxu0 0.0
        %2542 = vmatmul.mubr.f32.gmra.mrb[0].mxu0 %v2363
        %v2543 = vpop.f32.mrb[0].mxu0
        %v2544 = vadd.f32 0.0, %v2543
        %v2545 = vpop.f32.mrb[0].mxu0
        %2546 = vmatprep.mubr.f32.mxu0 0.0
        %2547 = vmatmul.mubr.f32.gmra.mrb[0].mxu0 %v2366
        %v2548 = vpop.f32.mrb[0].mxu0
        %v2549 = vadd.f32 0.0, %v2548
        %v2550 = vpop.f32.mrb[0].mxu0
        %2551 = vmatprep.mubr.f32.mxu0 0.0
        %2552 = vmatmul.mubr.f32.gmra.mrb[0].mxu0 %v2369
        %v2553 = vpop.f32.mrb[0].mxu0
        %v2554 = vadd.f32 0.0, %v2553
        %v2555 = vpop.f32.mrb[0].mxu0
        %2556 = vmatprep.mubr.f32.mxu0 0.0
        %2557 = vmatmul.mubr.f32.gmra.mrb[0].mxu0 %v2372
        %v2558 = vpop.f32.mrb[0].mxu0
        %v2559 = vadd.f32 0.0, %v2558
        %v2560 = vpop.f32.mrb[0].mxu0
        %2561 = vmatprep.mubr.f32.mxu0 0.0
        %2562 = vmatmul.mubr.f32.gmra.mrb[0].mxu0 %v2375
        %v2563 = vpop.f32.mrb[0].mxu0
        %v2564 = vadd.f32 0.0, %v2563
        %v2565 = vpop.f32.mrb[0].mxu0
        %2566 = vmatprep.mubr.f32.mxu0 0.0
        %2567 = vmatmul.mubr.f32.gmra.mrb[0].mxu0 %v2378
        %v2568 = vpop.f32.mrb[0].mxu0
        %v2569 = vadd.f32 0.0, %v2568
        %v2570 = vpop.f32.mrb[0].mxu0
        %2571 = vmatprep.mubr.f32.mxu0 0.0
        %2572 = vmatmul.mubr.f32.gmra.mrb[0].mxu0 %v2381
        %v2573 = vpop.f32.mrb[0].mxu0
        %v2574 = vadd.f32 0.0, %v2573
        %v2575 = vpop.f32.mrb[0].mxu0
        %2576 = vmatprep.mubr.f32.mxu0 0.0
        %2577 = vmatmul.mubr.f32.gmra.mrb[0].mxu0 %v2384
        %v2578 = vpop.f32.mrb[0].mxu0
        %v2579 = vadd.f32 0.0, %v2578
        %v2580 = vpop.f32.mrb[0].mxu0
        %2581 = vmatprep.mubr.f32.mxu0 0.0
        %2582 = vmatmul.mubr.f32.gmra.mrb[0].mxu0 %v2387
        %v2583 = vpop.f32.mrb[0].mxu0
        %v2584 = vadd.f32 0.0, %v2583
        %v2585 = vpop.f32.mrb[0].mxu0
        %2586 = vmatprep.mubr.f32.mxu0 0.0
        %2587 = vmatmul.mubr.f32.gmra.mrb[0].mxu0 %v2390
        %v2588 = vpop.f32.mrb[0].mxu0
        %v2589 = vadd.f32 0.0, %v2588
        %v2590 = vpop.f32.mrb[0].mxu0
        %2591 = vmatprep.mubr.f32.mxu0 0.0
        %2592 = vmatmul.mubr.f32.gmra.mrb[0].mxu0 %v2393
        %v2593 = vpop.f32.mrb[0].mxu0
        %v2594 = vadd.f32 0.0, %v2593
        %v2595 = vpop.f32.mrb[0].mxu0
        %2596 = vmatprep.mubr.f32.mxu0 0.0
        %2597 = vmatmul.mubr.f32.gmra.mrb[0].mxu0 %v2396
        %v2598 = vpop.f32.mrb[0].mxu0
        %v2599 = vadd.f32 0.0, %v2598
        %v2600 = vpop.f32.mrb[0].mxu0
        %2601 = vmatprep.mubr.f32.mxu0 0.0
        %2602 = vmatmul.mubr.f32.gmra.mrb[0].mxu0 %v2399
        %v2603 = vpop.f32.mrb[0].mxu0
        %v2604 = vadd.f32 0.0, %v2603
        %v2605 = vpop.f32.mrb[0].mxu0
        %2606 = vmatprep.mubr.f32.mxu0 0.0
        %2607 = vmatmul.mubr.f32.gmra.mrb[0].mxu0 %v2402
        %v2608 = vpop.f32.mrb[0].mxu0
        %v2609 = vadd.f32 0.0, %v2608
        %v2610 = vpop.f32.mrb[0].mxu0
        %2611 = vmatprep.mubr.f32.mxu0 0.0
        %2612 = vmatmul.mubr.f32.gmra.mrb[0].mxu0 %v2405
        %v2613 = vpop.f32.mrb[0].mxu0
        %v2614 = vadd.f32 0.0, %v2613
        %v2615 = vpop.f32.mrb[0].mxu0
        %2616 = vmatprep.mubr.f32.mxu0 0.0
        %2617 = vmatmul.mubr.f32.gmra.mrb[0].mxu0 %v2408
        %v2618 = vpop.f32.mrb[0].mxu0
        %v2619 = vadd.f32 0.0, %v2618
        %v2620 = vpop.f32.mrb[0].mxu0
        %2621 = vmatprep.mubr.f32.mxu0 0.0
        %2622 = vmatmul.mubr.f32.gmra.mrb[0].mxu0 %v2411
        %v2623 = vpop.f32.mrb[0].mxu0
        %v2624 = vadd.f32 0.0, %v2623
        %v2625 = vpop.f32.mrb[0].mxu0
        %2626 = vmatprep.mubr.f32.mxu0 0.0
        %2627 = vmatmul.mubr.f32.gmra.mrb[0].mxu0 %v2414
        %v2628 = vpop.f32.mrb[0].mxu0
        %v2629 = vadd.f32 0.0, %v2628
        %v2630 = vpop.f32.mrb[0].mxu0
        %2631 = vmatprep.mubr.f32.mxu0 0.0
        %2632 = vmatmul.mubr.f32.gmra.mrb[0].mxu0 %v2417
        %v2633 = vpop.f32.mrb[0].mxu0
        %v2634 = vadd.f32 0.0, %v2633
        %v2635 = vpop.f32.mrb[0].mxu0
        %2636 = vmatprep.mubr.f32.mxu0 0.0
        %2637 = vmatmul.mubr.f32.gmra.mrb[0].mxu0 %v2420
        %v2638 = vpop.f32.mrb[0].mxu0
        %v2639 = vadd.f32 0.0, %v2638
        %v2640 = vpop.f32.mrb[0].mxu0
        %2641 = vmatprep.mubr.f32.mxu0 0.0
        %2642 = vmatmul.mubr.f32.gmra.mrb[0].mxu0 %v2423
        %v2643 = vpop.f32.mrb[0].mxu0
        %v2644 = vadd.f32 0.0, %v2643
        %v2645 = vpop.f32.mrb[0].mxu0
        %2646 = vmatprep.mubr.f32.mxu0 0.0
        %2647 = vmatmul.mubr.f32.gmra.mrb[0].mxu0 %v2426
        %v2648 = vpop.f32.mrb[0].mxu0
        %v2649 = vadd.f32 0.0, %v2648
        %v2650 = vpop.f32.mrb[0].mxu0
        %2651 = vmatprep.mubr.f32.mxu0 0.0
        %2652 = vmatmul.mubr.f32.gmra.mrb[0].mxu0 %v2429
        %v2653 = vpop.f32.mrb[0].mxu0
        %v2654 = vadd.f32 0.0, %v2653
        %v2655 = vpop.f32.mrb[0].mxu0
        %2656 = vmatprep.mubr.f32.mxu0 0.0
        %2657 = vmatmul.mubr.f32.gmra.mrb[0].mxu0 %v2432
        %v2658 = vpop.f32.mrb[0].mxu0
        %v2659 = vadd.f32 0.0, %v2658
        %v2660 = vpop.f32.mrb[0].mxu0
        %2661 = vdwg.mxu0
        %v2662 = vadd.f32 %v2079, %v2504
        %v2663 = vadd.f32 %v2080, %v2509
        %v2664 = vadd.f32 %v2081, %v2514
        %v2665 = vadd.f32 %v2082, %v2519
        %v2666 = vadd.f32 %v2083, %v2524
        %v2667 = vadd.f32 %v2084, %v2529
        %v2668 = vadd.f32 %v2085, %v2534
        %v2669 = vadd.f32 %v2086, %v2539
        %v2670 = vadd.f32 %v2087, %v2544
        %v2671 = vadd.f32 %v2088, %v2549
        %v2672 = vadd.f32 %v2089, %v2554
        %v2673 = vadd.f32 %v2090, %v2559
        %v2674 = vadd.f32 %v2091, %v2564
        %v2675 = vadd.f32 %v2092, %v2569
        %v2676 = vadd.f32 %v2093, %v2574
        %v2677 = vadd.f32 %v2094, %v2579
        %v2678 = vadd.f32 %v2095, %v2584
        %v2679 = vadd.f32 %v2096, %v2589
        %v2680 = vadd.f32 %v2097, %v2594
        %v2681 = vadd.f32 %v2098, %v2599
        %v2682 = vadd.f32 %v2099, %v2604
        %v2683 = vadd.f32 %v2100, %v2609
        %v2684 = vadd.f32 %v2101, %v2614
        %v2685 = vadd.f32 %v2102, %v2619
        %v2686 = vadd.f32 %v2103, %v2624
        %v2687 = vadd.f32 %v2104, %v2629
        %v2688 = vadd.f32 %v2105, %v2634
        %v2689 = vadd.f32 %v2106, %v2639
        %v2690 = vadd.f32 %v2107, %v2644
        %v2691 = vadd.f32 %v2108, %v2649
        %v2692 = vadd.f32 %v2109, %v2654
        %v2693 = vadd.f32 %v2110, %v2659
        %s2694 = scalar_lea.vmem %s2, 1024
        %v2695 = vld [vmem:[%s2694] sm:$0xff]
        %v2696 = vld [vmem:[%s2694 + $0x8] sm:$0xff]
        %v2697 = vld [vmem:[%s2694 + $0x10] sm:$0xff]
        %v2698 = vld [vmem:[%s2694 + $0x18] sm:$0xff]
        %v2699 = vld [vmem:[%s2694 + $0x20] sm:$0xff]
        %v2700 = vld [vmem:[%s2694 + $0x28] sm:$0xff]
        %v2701 = vld [vmem:[%s2694 + $0x30] sm:$0xff]
        %v2702 = vld [vmem:[%s2694 + $0x38] sm:$0xff]
        %v2703 = vld [vmem:[%s2694 + $0x40] sm:$0xff]
        %v2704 = vld [vmem:[%s2694 + $0x48] sm:$0xff]
        %v2705 = vld [vmem:[%s2694 + $0x50] sm:$0xff]
        %v2706 = vld [vmem:[%s2694 + $0x58] sm:$0xff]
        %v2707 = vld [vmem:[%s2694 + $0x60] sm:$0xff]
        %v2708 = vld [vmem:[%s2694 + $0x68] sm:$0xff]
        %v2709 = vld [vmem:[%s2694 + $0x70] sm:$0xff]
        %v2710 = vld [vmem:[%s2694 + $0x78] sm:$0xff]
        %v2711 = vld [vmem:[%s2694 + $0x80] sm:$0xff]
        %v2712 = vld [vmem:[%s2694 + $0x88] sm:$0xff]
        %v2713 = vld [vmem:[%s2694 + $0x90] sm:$0xff]
        %v2714 = vld [vmem:[%s2694 + $0x98] sm:$0xff]
        %v2715 = vld [vmem:[%s2694 + $0xa0] sm:$0xff]
        %v2716 = vld [vmem:[%s2694 + $0xa8] sm:$0xff]
        %v2717 = vld [vmem:[%s2694 + $0xb0] sm:$0xff]
        %v2718 = vld [vmem:[%s2694 + $0xb8] sm:$0xff]
        %v2719 = vld [vmem:[%s2694 + $0xc0] sm:$0xff]
        %v2720 = vld [vmem:[%s2694 + $0xc8] sm:$0xff]
        %v2721 = vld [vmem:[%s2694 + $0xd0] sm:$0xff]
        %v2722 = vld [vmem:[%s2694 + $0xd8] sm:$0xff]
        %v2723 = vld [vmem:[%s2694 + $0xe0] sm:$0xff]
        %v2724 = vld [vmem:[%s2694 + $0xe8] sm:$0xff]
        %v2725 = vld [vmem:[%s2694 + $0xf0] sm:$0xff]
        %v2726 = vld [vmem:[%s2694 + $0xf8] sm:$0xff]
        %2728 = vset.pattern.permute.xlu0 0
        %2729 = vperm.xlu0 %2728, %v2695
        %v2730 = vpop.permute.xlu0 %2729
        %2733 = vset.pattern.permute.xlu0 0
        %2734 = vperm.xlu0 %2733, %v2696
        %v2735 = vpop.permute.xlu0 %2734
        %2738 = vset.pattern.permute.xlu0 0
        %2739 = vperm.xlu0 %2738, %v2697
        %v2740 = vpop.permute.xlu0 %2739
        %2743 = vset.pattern.permute.xlu0 0
        %2744 = vperm.xlu0 %2743, %v2698
        %v2745 = vpop.permute.xlu0 %2744
        %2748 = vset.pattern.permute.xlu0 0
        %2749 = vperm.xlu0 %2748, %v2699
        %v2750 = vpop.permute.xlu0 %2749
        %2753 = vset.pattern.permute.xlu0 0
        %2754 = vperm.xlu0 %2753, %v2700
        %v2755 = vpop.permute.xlu0 %2754
        %2758 = vset.pattern.permute.xlu0 0
        %2759 = vperm.xlu0 %2758, %v2701
        %v2760 = vpop.permute.xlu0 %2759
        %2763 = vset.pattern.permute.xlu0 0
        %2764 = vperm.xlu0 %2763, %v2702
        %v2765 = vpop.permute.xlu0 %2764
        %2768 = vset.pattern.permute.xlu0 0
        %2769 = vperm.xlu0 %2768, %v2703
        %v2770 = vpop.permute.xlu0 %2769
        %2773 = vset.pattern.permute.xlu0 0
        %2774 = vperm.xlu0 %2773, %v2704
        %v2775 = vpop.permute.xlu0 %2774
        %2778 = vset.pattern.permute.xlu0 0
        %2779 = vperm.xlu0 %2778, %v2705
        %v2780 = vpop.permute.xlu0 %2779
        %2783 = vset.pattern.permute.xlu0 0
        %2784 = vperm.xlu0 %2783, %v2706
        %v2785 = vpop.permute.xlu0 %2784
        %2788 = vset.pattern.permute.xlu0 0
        %2789 = vperm.xlu0 %2788, %v2707
        %v2790 = vpop.permute.xlu0 %2789
        %2793 = vset.pattern.permute.xlu0 0
        %2794 = vperm.xlu0 %2793, %v2708
        %v2795 = vpop.permute.xlu0 %2794
        %2798 = vset.pattern.permute.xlu0 0
        %2799 = vperm.xlu0 %2798, %v2709
        %v2800 = vpop.permute.xlu0 %2799
        %2803 = vset.pattern.permute.xlu0 0
        %2804 = vperm.xlu0 %2803, %v2710
        %v2805 = vpop.permute.xlu0 %2804
        %2808 = vset.pattern.permute.xlu0 0
        %2809 = vperm.xlu0 %2808, %v2711
        %v2810 = vpop.permute.xlu0 %2809
        %2813 = vset.pattern.permute.xlu0 0
        %2814 = vperm.xlu0 %2813, %v2712
        %v2815 = vpop.permute.xlu0 %2814
        %2818 = vset.pattern.permute.xlu0 0
        %2819 = vperm.xlu0 %2818, %v2713
        %v2820 = vpop.permute.xlu0 %2819
        %2823 = vset.pattern.permute.xlu0 0
        %2824 = vperm.xlu0 %2823, %v2714
        %v2825 = vpop.permute.xlu0 %2824
        %2828 = vset.pattern.permute.xlu0 0
        %2829 = vperm.xlu0 %2828, %v2715
        %v2830 = vpop.permute.xlu0 %2829
        %2833 = vset.pattern.permute.xlu0 0
        %2834 = vperm.xlu0 %2833, %v2716
        %v2835 = vpop.permute.xlu0 %2834
        %2838 = vset.pattern.permute.xlu0 0
        %2839 = vperm.xlu0 %2838, %v2717
        %v2840 = vpop.permute.xlu0 %2839
        %2843 = vset.pattern.permute.xlu0 0
        %2844 = vperm.xlu0 %2843, %v2718
        %v2845 = vpop.permute.xlu0 %2844
        %2848 = vset.pattern.permute.xlu0 0
        %2849 = vperm.xlu0 %2848, %v2719
        %v2850 = vpop.permute.xlu0 %2849
        %2853 = vset.pattern.permute.xlu0 0
        %2854 = vperm.xlu0 %2853, %v2720
        %v2855 = vpop.permute.xlu0 %2854
        %2858 = vset.pattern.permute.xlu0 0
        %2859 = vperm.xlu0 %2858, %v2721
        %v2860 = vpop.permute.xlu0 %2859
        %2863 = vset.pattern.permute.xlu0 0
        %2864 = vperm.xlu0 %2863, %v2722
        %v2865 = vpop.permute.xlu0 %2864
        %2868 = vset.pattern.permute.xlu0 0
        %2869 = vperm.xlu0 %2868, %v2723
        %v2870 = vpop.permute.xlu0 %2869
        %2873 = vset.pattern.permute.xlu0 0
        %2874 = vperm.xlu0 %2873, %v2724
        %v2875 = vpop.permute.xlu0 %2874
        %2878 = vset.pattern.permute.xlu0 0
        %2879 = vperm.xlu0 %2878, %v2725
        %v2880 = vpop.permute.xlu0 %2879
        %2883 = vset.pattern.permute.xlu0 0
        %2884 = vperm.xlu0 %2883, %v2726
        %v2885 = vpop.permute.xlu0 %2884
        %v2887 = vmul.f32 %v262, %v2730
        %v2888 = vmul.f32 %v263, %v2735
        %v2889 = vmul.f32 %v264, %v2740
        %v2890 = vmul.f32 %v265, %v2745
        %v2891 = vmul.f32 %v266, %v2750
        %v2892 = vmul.f32 %v267, %v2755
        %v2893 = vmul.f32 %v268, %v2760
        %v2894 = vmul.f32 %v269, %v2765
        %v2895 = vmul.f32 %v270, %v2770
        %v2896 = vmul.f32 %v271, %v2775
        %v2897 = vmul.f32 %v272, %v2780
        %v2898 = vmul.f32 %v273, %v2785
        %v2899 = vmul.f32 %v274, %v2790
        %v2900 = vmul.f32 %v275, %v2795
        %v2901 = vmul.f32 %v276, %v2800
        %v2902 = vmul.f32 %v277, %v2805
        %v2903 = vmul.f32 %v278, %v2810
        %v2904 = vmul.f32 %v279, %v2815
        %v2905 = vmul.f32 %v280, %v2820
        %v2906 = vmul.f32 %v281, %v2825
        %v2907 = vmul.f32 %v282, %v2830
        %v2908 = vmul.f32 %v283, %v2835
        %v2909 = vmul.f32 %v284, %v2840
        %v2910 = vmul.f32 %v285, %v2845
        %v2911 = vmul.f32 %v286, %v2850
        %v2912 = vmul.f32 %v287, %v2855
        %v2913 = vmul.f32 %v288, %v2860
        %v2914 = vmul.f32 %v289, %v2865
        %v2915 = vmul.f32 %v290, %v2870
        %v2916 = vmul.f32 %v291, %v2875
        %v2917 = vmul.f32 %v292, %v2880
        %v2918 = vmul.f32 %v293, %v2885
        %s2919 = scalar_lea.vmem %s3, 16
        %v2920 = vld [vmem:[%s2919] sm:$0x7]
        %v2922 = vsel %vm813, %v2887, 0
        %v2925 = vsel %vm813, %v2888, 0
        %v2928 = vsel %vm813, %v2889, 0
        %v2931 = vsel %vm813, %v2890, 0
        %v2934 = vsel %vm813, %v2891, 0
        %v2937 = vsel %vm813, %v2892, 0
        %v2940 = vsel %vm813, %v2893, 0
        %v2943 = vsel %vm813, %v2894, 0
        %v2946 = vsel %vm813, %v2895, 0
        %v2949 = vsel %vm813, %v2896, 0
        %v2952 = vsel %vm813, %v2897, 0
        %v2955 = vsel %vm813, %v2898, 0
        %v2958 = vsel %vm813, %v2899, 0
        %v2961 = vsel %vm813, %v2900, 0
        %v2964 = vsel %vm813, %v2901, 0
        %v2967 = vsel %vm813, %v2902, 0
        %v2970 = vsel %vm813, %v2903, 0
        %v2973 = vsel %vm813, %v2904, 0
        %v2976 = vsel %vm813, %v2905, 0
        %v2979 = vsel %vm813, %v2906, 0
        %v2982 = vsel %vm813, %v2907, 0
        %v2985 = vsel %vm813, %v2908, 0
        %v2988 = vsel %vm813, %v2909, 0
        %v2991 = vsel %vm813, %v2910, 0
        %v2994 = vsel %vm813, %v2911, 0
        %v2997 = vsel %vm813, %v2912, 0
        %v3000 = vsel %vm813, %v2913, 0
        %v3003 = vsel %vm813, %v2914, 0
        %v3006 = vsel %vm813, %v2915, 0
        %v3009 = vsel %vm813, %v2916, 0
        %v3012 = vsel %vm813, %v2917, 0
        %v3015 = vsel %vm813, %v2918, 0
        %v3018 = vsel %vm910, %v2920, 0
        %3020 = vmatprep.subr.mxu0 0.0
        %3021 = vmatpush1.msra.mxu0 %v3018
        %3022 = vmatprep.subr.mxu0 0.0
        %3023 = vmatpush1.msra.mxu0 0.0
        %3024 = vmatprep.subr.mxu0 0.0
        %3025 = vmatpush1.msra.mxu0 0.0
        %3026 = vmatprep.subr.mxu0 0.0
        %3027 = vmatpush1.msra.mxu0 0.0
        %3028 = vmatprep.subr.mxu0 0.0
        %3029 = vmatpush1.msra.mxu0 0.0
        %3030 = vmatprep.subr.mxu0 0.0
        %3031 = vmatpush1.msra.mxu0 0.0
        %3032 = vmatprep.subr.mxu0 0.0
        %3033 = vmatpush1.msra.mxu0 0.0
        %3034 = vmatprep.subr.mxu0 0.0
        %3035 = vmatpush1.msra.mxu0 0.0
        %3036 = vmatprep.subr.mxu0 0.0
        %3037 = vmatpush1.msra.mxu0 0.0
        %3038 = vmatprep.subr.mxu0 0.0
        %3039 = vmatpush1.msra.mxu0 0.0
        %3040 = vmatprep.subr.mxu0 0.0
        %3041 = vmatpush1.msra.mxu0 0.0
        %3042 = vmatprep.subr.mxu0 0.0
        %3043 = vmatpush1.msra.mxu0 0.0
        %3044 = vmatprep.subr.mxu0 0.0
        %3045 = vmatpush1.msra.mxu0 0.0
        %3046 = vmatprep.subr.mxu0 0.0
        %3047 = vmatpush1.msra.mxu0 0.0
        %3048 = vmatprep.subr.mxu0 0.0
        %3049 = vmatpush1.msra.mxu0 0.0
        %3050 = vmatprep.subr.mxu0 0.0
        %3051 = vmatpush1.msra.mxu0 0.0
        %3052 = vmatprep.subr.mxu0 0.0
        %3053 = vmatpush1.msra.mxu0 0.0
        %3054 = vmatprep.subr.mxu0 0.0
        %3055 = vmatpush1.msra.mxu0 0.0
        %3056 = vmatprep.subr.mxu0 0.0
        %3057 = vmatpush1.msra.mxu0 0.0
        %3058 = vmatprep.subr.mxu0 0.0
        %3059 = vmatpush1.msra.mxu0 0.0
        %3060 = vmatprep.subr.mxu0 0.0
        %3061 = vmatpush1.msra.mxu0 0.0
        %3062 = vmatprep.subr.mxu0 0.0
        %3063 = vmatpush1.msra.mxu0 0.0
        %3064 = vmatprep.subr.mxu0 0.0
        %3065 = vmatpush1.msra.mxu0 0.0
        %3066 = vmatprep.subr.mxu0 0.0
        %3067 = vmatpush1.msra.mxu0 0.0
        %3068 = vmatprep.subr.mxu0 0.0
        %3069 = vmatpush1.msra.mxu0 0.0
        %3070 = vmatprep.subr.mxu0 0.0
        %3071 = vmatpush1.msra.mxu0 0.0
        %3072 = vmatprep.subr.mxu0 0.0
        %3073 = vmatpush1.msra.mxu0 0.0
        %3074 = vmatprep.subr.mxu0 0.0
        %3075 = vmatpush1.msra.mxu0 0.0
        %3076 = vmatprep.subr.mxu0 0.0
        %3077 = vmatpush1.msra.mxu0 0.0
        %3078 = vmatprep.subr.mxu0 0.0
        %3079 = vmatpush1.msra.mxu0 0.0
        %3080 = vmatprep.subr.mxu0 0.0
        %3081 = vmatpush1.msra.mxu0 0.0
        %3082 = vmatprep.subr.mxu0 0.0
        %3083 = vmatpush1.msra.mxu0 0.0
        %3084 = vmatprep.mubr.f32.mxu0 0.0
        %3085 = vmatmul.mubr.f32.gmra.mrb[0].mxu0 %v2922
        %v3086 = vpop.f32.mrb[0].mxu0
        %v3087 = vadd.f32 0.0, %v3086
        %v3088 = vpop.f32.mrb[0].mxu0
        %3089 = vmatprep.mubr.f32.mxu0 0.0
        %3090 = vmatmul.mubr.f32.gmra.mrb[0].mxu0 %v2925
        %v3091 = vpop.f32.mrb[0].mxu0
        %v3092 = vadd.f32 0.0, %v3091
        %v3093 = vpop.f32.mrb[0].mxu0
        %3094 = vmatprep.mubr.f32.mxu0 0.0
        %3095 = vmatmul.mubr.f32.gmra.mrb[0].mxu0 %v2928
        %v3096 = vpop.f32.mrb[0].mxu0
        %v3097 = vadd.f32 0.0, %v3096
        %v3098 = vpop.f32.mrb[0].mxu0
        %3099 = vmatprep.mubr.f32.mxu0 0.0
        %3100 = vmatmul.mubr.f32.gmra.mrb[0].mxu0 %v2931
        %v3101 = vpop.f32.mrb[0].mxu0
        %v3102 = vadd.f32 0.0, %v3101
        %v3103 = vpop.f32.mrb[0].mxu0
        %3104 = vmatprep.mubr.f32.mxu0 0.0
        %3105 = vmatmul.mubr.f32.gmra.mrb[0].mxu0 %v2934
        %v3106 = vpop.f32.mrb[0].mxu0
        %v3107 = vadd.f32 0.0, %v3106
        %v3108 = vpop.f32.mrb[0].mxu0
        %3109 = vmatprep.mubr.f32.mxu0 0.0
        %3110 = vmatmul.mubr.f32.gmra.mrb[0].mxu0 %v2937
        %v3111 = vpop.f32.mrb[0].mxu0
        %v3112 = vadd.f32 0.0, %v3111
        %v3113 = vpop.f32.mrb[0].mxu0
        %3114 = vmatprep.mubr.f32.mxu0 0.0
        %3115 = vmatmul.mubr.f32.gmra.mrb[0].mxu0 %v2940
        %v3116 = vpop.f32.mrb[0].mxu0
        %v3117 = vadd.f32 0.0, %v3116
        %v3118 = vpop.f32.mrb[0].mxu0
        %3119 = vmatprep.mubr.f32.mxu0 0.0
        %3120 = vmatmul.mubr.f32.gmra.mrb[0].mxu0 %v2943
        %v3121 = vpop.f32.mrb[0].mxu0
        %v3122 = vadd.f32 0.0, %v3121
        %v3123 = vpop.f32.mrb[0].mxu0
        %3124 = vmatprep.mubr.f32.mxu0 0.0
        %3125 = vmatmul.mubr.f32.gmra.mrb[0].mxu0 %v2946
        %v3126 = vpop.f32.mrb[0].mxu0
        %v3127 = vadd.f32 0.0, %v3126
        %v3128 = vpop.f32.mrb[0].mxu0
        %3129 = vmatprep.mubr.f32.mxu0 0.0
        %3130 = vmatmul.mubr.f32.gmra.mrb[0].mxu0 %v2949
        %v3131 = vpop.f32.mrb[0].mxu0
        %v3132 = vadd.f32 0.0, %v3131
        %v3133 = vpop.f32.mrb[0].mxu0
        %3134 = vmatprep.mubr.f32.mxu0 0.0
        %3135 = vmatmul.mubr.f32.gmra.mrb[0].mxu0 %v2952
        %v3136 = vpop.f32.mrb[0].mxu0
        %v3137 = vadd.f32 0.0, %v3136
        %v3138 = vpop.f32.mrb[0].mxu0
        %3139 = vmatprep.mubr.f32.mxu0 0.0
        %3140 = vmatmul.mubr.f32.gmra.mrb[0].mxu0 %v2955
        %v3141 = vpop.f32.mrb[0].mxu0
        %v3142 = vadd.f32 0.0, %v3141
        %v3143 = vpop.f32.mrb[0].mxu0
        %3144 = vmatprep.mubr.f32.mxu0 0.0
        %3145 = vmatmul.mubr.f32.gmra.mrb[0].mxu0 %v2958
        %v3146 = vpop.f32.mrb[0].mxu0
        %v3147 = vadd.f32 0.0, %v3146
        %v3148 = vpop.f32.mrb[0].mxu0
        %3149 = vmatprep.mubr.f32.mxu0 0.0
        %3150 = vmatmul.mubr.f32.gmra.mrb[0].mxu0 %v2961
        %v3151 = vpop.f32.mrb[0].mxu0
        %v3152 = vadd.f32 0.0, %v3151
        %v3153 = vpop.f32.mrb[0].mxu0
        %3154 = vmatprep.mubr.f32.mxu0 0.0
        %3155 = vmatmul.mubr.f32.gmra.mrb[0].mxu0 %v2964
        %v3156 = vpop.f32.mrb[0].mxu0
        %v3157 = vadd.f32 0.0, %v3156
        %v3158 = vpop.f32.mrb[0].mxu0
        %3159 = vmatprep.mubr.f32.mxu0 0.0
        %3160 = vmatmul.mubr.f32.gmra.mrb[0].mxu0 %v2967
        %v3161 = vpop.f32.mrb[0].mxu0
        %v3162 = vadd.f32 0.0, %v3161
        %v3163 = vpop.f32.mrb[0].mxu0
        %3164 = vmatprep.mubr.f32.mxu0 0.0
        %3165 = vmatmul.mubr.f32.gmra.mrb[0].mxu0 %v2970
        %v3166 = vpop.f32.mrb[0].mxu0
        %v3167 = vadd.f32 0.0, %v3166
        %v3168 = vpop.f32.mrb[0].mxu0
        %3169 = vmatprep.mubr.f32.mxu0 0.0
        %3170 = vmatmul.mubr.f32.gmra.mrb[0].mxu0 %v2973
        %v3171 = vpop.f32.mrb[0].mxu0
        %v3172 = vadd.f32 0.0, %v3171
        %v3173 = vpop.f32.mrb[0].mxu0
        %3174 = vmatprep.mubr.f32.mxu0 0.0
        %3175 = vmatmul.mubr.f32.gmra.mrb[0].mxu0 %v2976
        %v3176 = vpop.f32.mrb[0].mxu0
        %v3177 = vadd.f32 0.0, %v3176
        %v3178 = vpop.f32.mrb[0].mxu0
        %3179 = vmatprep.mubr.f32.mxu0 0.0
        %3180 = vmatmul.mubr.f32.gmra.mrb[0].mxu0 %v2979
        %v3181 = vpop.f32.mrb[0].mxu0
        %v3182 = vadd.f32 0.0, %v3181
        %v3183 = vpop.f32.mrb[0].mxu0
        %3184 = vmatprep.mubr.f32.mxu0 0.0
        %3185 = vmatmul.mubr.f32.gmra.mrb[0].mxu0 %v2982
        %v3186 = vpop.f32.mrb[0].mxu0
        %v3187 = vadd.f32 0.0, %v3186
        %v3188 = vpop.f32.mrb[0].mxu0
        %3189 = vmatprep.mubr.f32.mxu0 0.0
        %3190 = vmatmul.mubr.f32.gmra.mrb[0].mxu0 %v2985
        %v3191 = vpop.f32.mrb[0].mxu0
        %v3192 = vadd.f32 0.0, %v3191
        %v3193 = vpop.f32.mrb[0].mxu0
        %3194 = vmatprep.mubr.f32.mxu0 0.0
        %3195 = vmatmul.mubr.f32.gmra.mrb[0].mxu0 %v2988
        %v3196 = vpop.f32.mrb[0].mxu0
        %v3197 = vadd.f32 0.0, %v3196
        %v3198 = vpop.f32.mrb[0].mxu0
        %3199 = vmatprep.mubr.f32.mxu0 0.0
        %3200 = vmatmul.mubr.f32.gmra.mrb[0].mxu0 %v2991
        %v3201 = vpop.f32.mrb[0].mxu0
        %v3202 = vadd.f32 0.0, %v3201
        %v3203 = vpop.f32.mrb[0].mxu0
        %3204 = vmatprep.mubr.f32.mxu0 0.0
        %3205 = vmatmul.mubr.f32.gmra.mrb[0].mxu0 %v2994
        %v3206 = vpop.f32.mrb[0].mxu0
        %v3207 = vadd.f32 0.0, %v3206
        %v3208 = vpop.f32.mrb[0].mxu0
        %3209 = vmatprep.mubr.f32.mxu0 0.0
        %3210 = vmatmul.mubr.f32.gmra.mrb[0].mxu0 %v2997
        %v3211 = vpop.f32.mrb[0].mxu0
        %v3212 = vadd.f32 0.0, %v3211
        %v3213 = vpop.f32.mrb[0].mxu0
        %3214 = vmatprep.mubr.f32.mxu0 0.0
        %3215 = vmatmul.mubr.f32.gmra.mrb[0].mxu0 %v3000
        %v3216 = vpop.f32.mrb[0].mxu0
        %v3217 = vadd.f32 0.0, %v3216
        %v3218 = vpop.f32.mrb[0].mxu0
        %3219 = vmatprep.mubr.f32.mxu0 0.0
        %3220 = vmatmul.mubr.f32.gmra.mrb[0].mxu0 %v3003
        %v3221 = vpop.f32.mrb[0].mxu0
        %v3222 = vadd.f32 0.0, %v3221
        %v3223 = vpop.f32.mrb[0].mxu0
        %3224 = vmatprep.mubr.f32.mxu0 0.0
        %3225 = vmatmul.mubr.f32.gmra.mrb[0].mxu0 %v3006
        %v3226 = vpop.f32.mrb[0].mxu0
        %v3227 = vadd.f32 0.0, %v3226
        %v3228 = vpop.f32.mrb[0].mxu0
        %3229 = vmatprep.mubr.f32.mxu0 0.0
        %3230 = vmatmul.mubr.f32.gmra.mrb[0].mxu0 %v3009
        %v3231 = vpop.f32.mrb[0].mxu0
        %v3232 = vadd.f32 0.0, %v3231
        %v3233 = vpop.f32.mrb[0].mxu0
        %3234 = vmatprep.mubr.f32.mxu0 0.0
        %3235 = vmatmul.mubr.f32.gmra.mrb[0].mxu0 %v3012
        %v3236 = vpop.f32.mrb[0].mxu0
        %v3237 = vadd.f32 0.0, %v3236
        %v3238 = vpop.f32.mrb[0].mxu0
        %3239 = vmatprep.mubr.f32.mxu0 0.0
        %3240 = vmatmul.mubr.f32.gmra.mrb[0].mxu0 %v3015
        %v3241 = vpop.f32.mrb[0].mxu0
        %v3242 = vadd.f32 0.0, %v3241
        %v3243 = vpop.f32.mrb[0].mxu0
        %3244 = vdwg.mxu0
        %v3245 = vadd.f32 %v2662, %v3087
        %v3246 = vadd.f32 %v2663, %v3092
        %v3247 = vadd.f32 %v2664, %v3097
        %v3248 = vadd.f32 %v2665, %v3102
        %v3249 = vadd.f32 %v2666, %v3107
        %v3250 = vadd.f32 %v2667, %v3112
        %v3251 = vadd.f32 %v2668, %v3117
        %v3252 = vadd.f32 %v2669, %v3122
        %v3253 = vadd.f32 %v2670, %v3127
        %v3254 = vadd.f32 %v2671, %v3132
        %v3255 = vadd.f32 %v2672, %v3137
        %v3256 = vadd.f32 %v2673, %v3142
        %v3257 = vadd.f32 %v2674, %v3147
        %v3258 = vadd.f32 %v2675, %v3152
        %v3259 = vadd.f32 %v2676, %v3157
        %v3260 = vadd.f32 %v2677, %v3162
        %v3261 = vadd.f32 %v2678, %v3167
        %v3262 = vadd.f32 %v2679, %v3172
        %v3263 = vadd.f32 %v2680, %v3177
        %v3264 = vadd.f32 %v2681, %v3182
        %v3265 = vadd.f32 %v2682, %v3187
        %v3266 = vadd.f32 %v2683, %v3192
        %v3267 = vadd.f32 %v2684, %v3197
        %v3268 = vadd.f32 %v2685, %v3202
        %v3269 = vadd.f32 %v2686, %v3207
        %v3270 = vadd.f32 %v2687, %v3212
        %v3271 = vadd.f32 %v2688, %v3217
        %v3272 = vadd.f32 %v2689, %v3222
        %v3273 = vadd.f32 %v2690, %v3227
        %v3274 = vadd.f32 %v2691, %v3232
        %v3275 = vadd.f32 %v2692, %v3237
        %v3276 = vadd.f32 %v2693, %v3242
        %s3277 = scalar_lea.vmem %s2, 1280
        %v3278 = vld [vmem:[%s3277] sm:$0xff]
        %v3279 = vld [vmem:[%s3277 + $0x8] sm:$0xff]
        %v3280 = vld [vmem:[%s3277 + $0x10] sm:$0xff]
        %v3281 = vld [vmem:[%s3277 + $0x18] sm:$0xff]
        %v3282 = vld [vmem:[%s3277 + $0x20] sm:$0xff]
        %v3283 = vld [vmem:[%s3277 + $0x28] sm:$0xff]
        %v3284 = vld [vmem:[%s3277 + $0x30] sm:$0xff]
        %v3285 = vld [vmem:[%s3277 + $0x38] sm:$0xff]
        %v3286 = vld [vmem:[%s3277 + $0x40] sm:$0xff]
        %v3287 = vld [vmem:[%s3277 + $0x48] sm:$0xff]
        %v3288 = vld [vmem:[%s3277 + $0x50] sm:$0xff]
        %v3289 = vld [vmem:[%s3277 + $0x58] sm:$0xff]
        %v3290 = vld [vmem:[%s3277 + $0x60] sm:$0xff]
        %v3291 = vld [vmem:[%s3277 + $0x68] sm:$0xff]
        %v3292 = vld [vmem:[%s3277 + $0x70] sm:$0xff]
        %v3293 = vld [vmem:[%s3277 + $0x78] sm:$0xff]
        %v3294 = vld [vmem:[%s3277 + $0x80] sm:$0xff]
        %v3295 = vld [vmem:[%s3277 + $0x88] sm:$0xff]
        %v3296 = vld [vmem:[%s3277 + $0x90] sm:$0xff]
        %v3297 = vld [vmem:[%s3277 + $0x98] sm:$0xff]
        %v3298 = vld [vmem:[%s3277 + $0xa0] sm:$0xff]
        %v3299 = vld [vmem:[%s3277 + $0xa8] sm:$0xff]
        %v3300 = vld [vmem:[%s3277 + $0xb0] sm:$0xff]
        %v3301 = vld [vmem:[%s3277 + $0xb8] sm:$0xff]
        %v3302 = vld [vmem:[%s3277 + $0xc0] sm:$0xff]
        %v3303 = vld [vmem:[%s3277 + $0xc8] sm:$0xff]
        %v3304 = vld [vmem:[%s3277 + $0xd0] sm:$0xff]
        %v3305 = vld [vmem:[%s3277 + $0xd8] sm:$0xff]
        %v3306 = vld [vmem:[%s3277 + $0xe0] sm:$0xff]
        %v3307 = vld [vmem:[%s3277 + $0xe8] sm:$0xff]
        %v3308 = vld [vmem:[%s3277 + $0xf0] sm:$0xff]
        %v3309 = vld [vmem:[%s3277 + $0xf8] sm:$0xff]
        %3311 = vset.pattern.permute.xlu0 0
        %3312 = vperm.xlu0 %3311, %v3278
        %v3313 = vpop.permute.xlu0 %3312
        %3316 = vset.pattern.permute.xlu0 0
        %3317 = vperm.xlu0 %3316, %v3279
        %v3318 = vpop.permute.xlu0 %3317
        %3321 = vset.pattern.permute.xlu0 0
        %3322 = vperm.xlu0 %3321, %v3280
        %v3323 = vpop.permute.xlu0 %3322
        %3326 = vset.pattern.permute.xlu0 0
        %3327 = vperm.xlu0 %3326, %v3281
        %v3328 = vpop.permute.xlu0 %3327
        %3331 = vset.pattern.permute.xlu0 0
        %3332 = vperm.xlu0 %3331, %v3282
        %v3333 = vpop.permute.xlu0 %3332
        %3336 = vset.pattern.permute.xlu0 0
        %3337 = vperm.xlu0 %3336, %v3283
        %v3338 = vpop.permute.xlu0 %3337
        %3341 = vset.pattern.permute.xlu0 0
        %3342 = vperm.xlu0 %3341, %v3284
        %v3343 = vpop.permute.xlu0 %3342
        %3346 = vset.pattern.permute.xlu0 0
        %3347 = vperm.xlu0 %3346, %v3285
        %v3348 = vpop.permute.xlu0 %3347
        %3351 = vset.pattern.permute.xlu0 0
        %3352 = vperm.xlu0 %3351, %v3286
        %v3353 = vpop.permute.xlu0 %3352
        %3356 = vset.pattern.permute.xlu0 0
        %3357 = vperm.xlu0 %3356, %v3287
        %v3358 = vpop.permute.xlu0 %3357
        %3361 = vset.pattern.permute.xlu0 0
        %3362 = vperm.xlu0 %3361, %v3288
        %v3363 = vpop.permute.xlu0 %3362
        %3366 = vset.pattern.permute.xlu0 0
        %3367 = vperm.xlu0 %3366, %v3289
        %v3368 = vpop.permute.xlu0 %3367
        %3371 = vset.pattern.permute.xlu0 0
        %3372 = vperm.xlu0 %3371, %v3290
        %v3373 = vpop.permute.xlu0 %3372
        %3376 = vset.pattern.permute.xlu0 0
        %3377 = vperm.xlu0 %3376, %v3291
        %v3378 = vpop.permute.xlu0 %3377
        %3381 = vset.pattern.permute.xlu0 0
        %3382 = vperm.xlu0 %3381, %v3292
        %v3383 = vpop.permute.xlu0 %3382
        %3386 = vset.pattern.permute.xlu0 0
        %3387 = vperm.xlu0 %3386, %v3293
        %v3388 = vpop.permute.xlu0 %3387
        %3391 = vset.pattern.permute.xlu0 0
        %3392 = vperm.xlu0 %3391, %v3294
        %v3393 = vpop.permute.xlu0 %3392
        %3396 = vset.pattern.permute.xlu0 0
        %3397 = vperm.xlu0 %3396, %v3295
        %v3398 = vpop.permute.xlu0 %3397
        %3401 = vset.pattern.permute.xlu0 0
        %3402 = vperm.xlu0 %3401, %v3296
        %v3403 = vpop.permute.xlu0 %3402
        %3406 = vset.pattern.permute.xlu0 0
        %3407 = vperm.xlu0 %3406, %v3297
        %v3408 = vpop.permute.xlu0 %3407
        %3411 = vset.pattern.permute.xlu0 0
        %3412 = vperm.xlu0 %3411, %v3298
        %v3413 = vpop.permute.xlu0 %3412
        %3416 = vset.pattern.permute.xlu0 0
        %3417 = vperm.xlu0 %3416, %v3299
        %v3418 = vpop.permute.xlu0 %3417
        %3421 = vset.pattern.permute.xlu0 0
        %3422 = vperm.xlu0 %3421, %v3300
        %v3423 = vpop.permute.xlu0 %3422
        %3426 = vset.pattern.permute.xlu0 0
        %3427 = vperm.xlu0 %3426, %v3301
        %v3428 = vpop.permute.xlu0 %3427
        %3431 = vset.pattern.permute.xlu0 0
        %3432 = vperm.xlu0 %3431, %v3302
        %v3433 = vpop.permute.xlu0 %3432
        %3436 = vset.pattern.permute.xlu0 0
        %3437 = vperm.xlu0 %3436, %v3303
        %v3438 = vpop.permute.xlu0 %3437
        %3441 = vset.pattern.permute.xlu0 0
        %3442 = vperm.xlu0 %3441, %v3304
        %v3443 = vpop.permute.xlu0 %3442
        %3446 = vset.pattern.permute.xlu0 0
        %3447 = vperm.xlu0 %3446, %v3305
        %v3448 = vpop.permute.xlu0 %3447
        %3451 = vset.pattern.permute.xlu0 0
        %3452 = vperm.xlu0 %3451, %v3306
        %v3453 = vpop.permute.xlu0 %3452
        %3456 = vset.pattern.permute.xlu0 0
        %3457 = vperm.xlu0 %3456, %v3307
        %v3458 = vpop.permute.xlu0 %3457
        %3461 = vset.pattern.permute.xlu0 0
        %3462 = vperm.xlu0 %3461, %v3308
        %v3463 = vpop.permute.xlu0 %3462
        %3466 = vset.pattern.permute.xlu0 0
        %3467 = vperm.xlu0 %3466, %v3309
        %v3468 = vpop.permute.xlu0 %3467
        %v3470 = vmul.f32 %v1526, %v3313
        %v3471 = vmul.f32 %v1525, %v3318
        %v3472 = vmul.f32 %v1524, %v3323
        %v3473 = vmul.f32 %v1523, %v3328
        %v3474 = vmul.f32 %v1522, %v3333
        %v3475 = vmul.f32 %v1521, %v3338
        %v3476 = vmul.f32 %v1520, %v3343
        %v3477 = vmul.f32 %v1519, %v3348
        %v3478 = vmul.f32 %v1518, %v3353
        %v3479 = vmul.f32 %v1517, %v3358
        %v3480 = vmul.f32 %v1516, %v3363
        %v3481 = vmul.f32 %v1515, %v3368
        %v3482 = vmul.f32 %v1514, %v3373
        %v3483 = vmul.f32 %v1513, %v3378
        %v3484 = vmul.f32 %v1512, %v3383
        %v3485 = vmul.f32 %v1511, %v3388
        %v3486 = vmul.f32 %v1510, %v3393
        %v3487 = vmul.f32 %v1509, %v3398
        %v3488 = vmul.f32 %v1508, %v3403
        %v3489 = vmul.f32 %v1507, %v3408
        %v3490 = vmul.f32 %v1506, %v3413
        %v3491 = vmul.f32 %v1505, %v3418
        %v3492 = vmul.f32 %v1504, %v3423
        %v3493 = vmul.f32 %v1503, %v3428
        %v3494 = vmul.f32 %v1502, %v3433
        %v3495 = vmul.f32 %v1501, %v3438
        %v3496 = vmul.f32 %v1500, %v3443
        %v3497 = vmul.f32 %v1499, %v3448
        %v3498 = vmul.f32 %v1498, %v3453
        %v3499 = vmul.f32 %v1497, %v3458
        %v3500 = vmul.f32 %v1496, %v3463
        %v3501 = vmul.f32 %v1527, %v3468
        %s3502 = scalar_lea.vmem %s3, 20
        %v3503 = vld [vmem:[%s3502] sm:$0x7]
        %v3505 = vsel %vm813, %v3470, 0
        %v3508 = vsel %vm813, %v3471, 0
        %v3511 = vsel %vm813, %v3472, 0
        %v3514 = vsel %vm813, %v3473, 0
        %v3517 = vsel %vm813, %v3474, 0
        %v3520 = vsel %vm813, %v3475, 0
        %v3523 = vsel %vm813, %v3476, 0
        %v3526 = vsel %vm813, %v3477, 0
        %v3529 = vsel %vm813, %v3478, 0
        %v3532 = vsel %vm813, %v3479, 0
        %v3535 = vsel %vm813, %v3480, 0
        %v3538 = vsel %vm813, %v3481, 0
        %v3541 = vsel %vm813, %v3482, 0
        %v3544 = vsel %vm813, %v3483, 0
        %v3547 = vsel %vm813, %v3484, 0
        %v3550 = vsel %vm813, %v3485, 0
        %v3553 = vsel %vm813, %v3486, 0
        %v3556 = vsel %vm813, %v3487, 0
        %v3559 = vsel %vm813, %v3488, 0
        %v3562 = vsel %vm813, %v3489, 0
        %v3565 = vsel %vm813, %v3490, 0
        %v3568 = vsel %vm813, %v3491, 0
        %v3571 = vsel %vm813, %v3492, 0
        %v3574 = vsel %vm813, %v3493, 0
        %v3577 = vsel %vm813, %v3494, 0
        %v3580 = vsel %vm813, %v3495, 0
        %v3583 = vsel %vm813, %v3496, 0
        %v3586 = vsel %vm813, %v3497, 0
        %v3589 = vsel %vm813, %v3498, 0
        %v3592 = vsel %vm813, %v3499, 0
        %v3595 = vsel %vm813, %v3500, 0
        %v3598 = vsel %vm813, %v3501, 0
        %v3601 = vsel %vm910, %v3503, 0
        %3603 = vmatprep.subr.mxu0 0.0
        %3604 = vmatpush1.msra.mxu0 %v3601
        %3605 = vmatprep.subr.mxu0 0.0
        %3606 = vmatpush1.msra.mxu0 0.0
        %3607 = vmatprep.subr.mxu0 0.0
        %3608 = vmatpush1.msra.mxu0 0.0
        %3609 = vmatprep.subr.mxu0 0.0
        %3610 = vmatpush1.msra.mxu0 0.0
        %3611 = vmatprep.subr.mxu0 0.0
        %3612 = vmatpush1.msra.mxu0 0.0
        %3613 = vmatprep.subr.mxu0 0.0
        %3614 = vmatpush1.msra.mxu0 0.0
        %3615 = vmatprep.subr.mxu0 0.0
        %3616 = vmatpush1.msra.mxu0 0.0
        %3617 = vmatprep.subr.mxu0 0.0
        %3618 = vmatpush1.msra.mxu0 0.0
        %3619 = vmatprep.subr.mxu0 0.0
        %3620 = vmatpush1.msra.mxu0 0.0
        %3621 = vmatprep.subr.mxu0 0.0
        %3622 = vmatpush1.msra.mxu0 0.0
        %3623 = vmatprep.subr.mxu0 0.0
        %3624 = vmatpush1.msra.mxu0 0.0
        %3625 = vmatprep.subr.mxu0 0.0
        %3626 = vmatpush1.msra.mxu0 0.0
        %3627 = vmatprep.subr.mxu0 0.0
        %3628 = vmatpush1.msra.mxu0 0.0
        %3629 = vmatprep.subr.mxu0 0.0
        %3630 = vmatpush1.msra.mxu0 0.0
        %3631 = vmatprep.subr.mxu0 0.0
        %3632 = vmatpush1.msra.mxu0 0.0
        %3633 = vmatprep.subr.mxu0 0.0
        %3634 = vmatpush1.msra.mxu0 0.0
        %3635 = vmatprep.subr.mxu0 0.0
        %3636 = vmatpush1.msra.mxu0 0.0
        %3637 = vmatprep.subr.mxu0 0.0
        %3638 = vmatpush1.msra.mxu0 0.0
        %3639 = vmatprep.subr.mxu0 0.0
        %3640 = vmatpush1.msra.mxu0 0.0
        %3641 = vmatprep.subr.mxu0 0.0
        %3642 = vmatpush1.msra.mxu0 0.0
        %3643 = vmatprep.subr.mxu0 0.0
        %3644 = vmatpush1.msra.mxu0 0.0
        %3645 = vmatprep.subr.mxu0 0.0
        %3646 = vmatpush1.msra.mxu0 0.0
        %3647 = vmatprep.subr.mxu0 0.0
        %3648 = vmatpush1.msra.mxu0 0.0
        %3649 = vmatprep.subr.mxu0 0.0
        %3650 = vmatpush1.msra.mxu0 0.0
        %3651 = vmatprep.subr.mxu0 0.0
        %3652 = vmatpush1.msra.mxu0 0.0
        %3653 = vmatprep.subr.mxu0 0.0
        %3654 = vmatpush1.msra.mxu0 0.0
        %3655 = vmatprep.subr.mxu0 0.0
        %3656 = vmatpush1.msra.mxu0 0.0
        %3657 = vmatprep.subr.mxu0 0.0
        %3658 = vmatpush1.msra.mxu0 0.0
        %3659 = vmatprep.subr.mxu0 0.0
        %3660 = vmatpush1.msra.mxu0 0.0
        %3661 = vmatprep.subr.mxu0 0.0
        %3662 = vmatpush1.msra.mxu0 0.0
        %3663 = vmatprep.subr.mxu0 0.0
        %3664 = vmatpush1.msra.mxu0 0.0
        %3665 = vmatprep.subr.mxu0 0.0
        %3666 = vmatpush1.msra.mxu0 0.0
        %3667 = vmatprep.mubr.f32.mxu0 0.0
        %3668 = vmatmul.mubr.f32.gmra.mrb[0].mxu0 %v3505
        %v3669 = vpop.f32.mrb[0].mxu0
        %v3670 = vadd.f32 0.0, %v3669
        %v3671 = vpop.f32.mrb[0].mxu0
        %3672 = vmatprep.mubr.f32.mxu0 0.0
        %3673 = vmatmul.mubr.f32.gmra.mrb[0].mxu0 %v3508
        %v3674 = vpop.f32.mrb[0].mxu0
        %v3675 = vadd.f32 0.0, %v3674
        %v3676 = vpop.f32.mrb[0].mxu0
        %3677 = vmatprep.mubr.f32.mxu0 0.0
        %3678 = vmatmul.mubr.f32.gmra.mrb[0].mxu0 %v3511
        %v3679 = vpop.f32.mrb[0].mxu0
        %v3680 = vadd.f32 0.0, %v3679
        %v3681 = vpop.f32.mrb[0].mxu0
        %3682 = vmatprep.mubr.f32.mxu0 0.0
        %3683 = vmatmul.mubr.f32.gmra.mrb[0].mxu0 %v3514
        %v3684 = vpop.f32.mrb[0].mxu0
        %v3685 = vadd.f32 0.0, %v3684
        %v3686 = vpop.f32.mrb[0].mxu0
        %3687 = vmatprep.mubr.f32.mxu0 0.0
        %3688 = vmatmul.mubr.f32.gmra.mrb[0].mxu0 %v3517
        %v3689 = vpop.f32.mrb[0].mxu0
        %v3690 = vadd.f32 0.0, %v3689
        %v3691 = vpop.f32.mrb[0].mxu0
        %3692 = vmatprep.mubr.f32.mxu0 0.0
        %3693 = vmatmul.mubr.f32.gmra.mrb[0].mxu0 %v3520
        %v3694 = vpop.f32.mrb[0].mxu0
        %v3695 = vadd.f32 0.0, %v3694
        %v3696 = vpop.f32.mrb[0].mxu0
        %3697 = vmatprep.mubr.f32.mxu0 0.0
        %3698 = vmatmul.mubr.f32.gmra.mrb[0].mxu0 %v3523
        %v3699 = vpop.f32.mrb[0].mxu0
        %v3700 = vadd.f32 0.0, %v3699
        %v3701 = vpop.f32.mrb[0].mxu0
        %3702 = vmatprep.mubr.f32.mxu0 0.0
        %3703 = vmatmul.mubr.f32.gmra.mrb[0].mxu0 %v3526
        %v3704 = vpop.f32.mrb[0].mxu0
        %v3705 = vadd.f32 0.0, %v3704
        %v3706 = vpop.f32.mrb[0].mxu0
        %3707 = vmatprep.mubr.f32.mxu0 0.0
        %3708 = vmatmul.mubr.f32.gmra.mrb[0].mxu0 %v3529
        %v3709 = vpop.f32.mrb[0].mxu0
        %v3710 = vadd.f32 0.0, %v3709
        %v3711 = vpop.f32.mrb[0].mxu0
        %3712 = vmatprep.mubr.f32.mxu0 0.0
        %3713 = vmatmul.mubr.f32.gmra.mrb[0].mxu0 %v3532
        %v3714 = vpop.f32.mrb[0].mxu0
        %v3715 = vadd.f32 0.0, %v3714
        %v3716 = vpop.f32.mrb[0].mxu0
        %3717 = vmatprep.mubr.f32.mxu0 0.0
        %3718 = vmatmul.mubr.f32.gmra.mrb[0].mxu0 %v3535
        %v3719 = vpop.f32.mrb[0].mxu0
        %v3720 = vadd.f32 0.0, %v3719
        %v3721 = vpop.f32.mrb[0].mxu0
        %3722 = vmatprep.mubr.f32.mxu0 0.0
        %3723 = vmatmul.mubr.f32.gmra.mrb[0].mxu0 %v3538
        %v3724 = vpop.f32.mrb[0].mxu0
        %v3725 = vadd.f32 0.0, %v3724
        %v3726 = vpop.f32.mrb[0].mxu0
        %3727 = vmatprep.mubr.f32.mxu0 0.0
        %3728 = vmatmul.mubr.f32.gmra.mrb[0].mxu0 %v3541
        %v3729 = vpop.f32.mrb[0].mxu0
        %v3730 = vadd.f32 0.0, %v3729
        %v3731 = vpop.f32.mrb[0].mxu0
        %3732 = vmatprep.mubr.f32.mxu0 0.0
        %3733 = vmatmul.mubr.f32.gmra.mrb[0].mxu0 %v3544
        %v3734 = vpop.f32.mrb[0].mxu0
        %v3735 = vadd.f32 0.0, %v3734
        %v3736 = vpop.f32.mrb[0].mxu0
        %3737 = vmatprep.mubr.f32.mxu0 0.0
        %3738 = vmatmul.mubr.f32.gmra.mrb[0].mxu0 %v3547
        %v3739 = vpop.f32.mrb[0].mxu0
        %v3740 = vadd.f32 0.0, %v3739
        %v3741 = vpop.f32.mrb[0].mxu0
        %3742 = vmatprep.mubr.f32.mxu0 0.0
        %3743 = vmatmul.mubr.f32.gmra.mrb[0].mxu0 %v3550
        %v3744 = vpop.f32.mrb[0].mxu0
        %v3745 = vadd.f32 0.0, %v3744
        %v3746 = vpop.f32.mrb[0].mxu0
        %3747 = vmatprep.mubr.f32.mxu0 0.0
        %3748 = vmatmul.mubr.f32.gmra.mrb[0].mxu0 %v3553
        %v3749 = vpop.f32.mrb[0].mxu0
        %v3750 = vadd.f32 0.0, %v3749
        %v3751 = vpop.f32.mrb[0].mxu0
        %3752 = vmatprep.mubr.f32.mxu0 0.0
        %3753 = vmatmul.mubr.f32.gmra.mrb[0].mxu0 %v3556
        %v3754 = vpop.f32.mrb[0].mxu0
        %v3755 = vadd.f32 0.0, %v3754
        %v3756 = vpop.f32.mrb[0].mxu0
        %3757 = vmatprep.mubr.f32.mxu0 0.0
        %3758 = vmatmul.mubr.f32.gmra.mrb[0].mxu0 %v3559
        %v3759 = vpop.f32.mrb[0].mxu0
        %v3760 = vadd.f32 0.0, %v3759
        %v3761 = vpop.f32.mrb[0].mxu0
        %3762 = vmatprep.mubr.f32.mxu0 0.0
        %3763 = vmatmul.mubr.f32.gmra.mrb[0].mxu0 %v3562
        %v3764 = vpop.f32.mrb[0].mxu0
        %v3765 = vadd.f32 0.0, %v3764
        %v3766 = vpop.f32.mrb[0].mxu0
        %3767 = vmatprep.mubr.f32.mxu0 0.0
        %3768 = vmatmul.mubr.f32.gmra.mrb[0].mxu0 %v3565
        %v3769 = vpop.f32.mrb[0].mxu0
        %v3770 = vadd.f32 0.0, %v3769
        %v3771 = vpop.f32.mrb[0].mxu0
        %3772 = vmatprep.mubr.f32.mxu0 0.0
        %3773 = vmatmul.mubr.f32.gmra.mrb[0].mxu0 %v3568
        %v3774 = vpop.f32.mrb[0].mxu0
        %v3775 = vadd.f32 0.0, %v3774
        %v3776 = vpop.f32.mrb[0].mxu0
        %3777 = vmatprep.mubr.f32.mxu0 0.0
        %3778 = vmatmul.mubr.f32.gmra.mrb[0].mxu0 %v3571
        %v3779 = vpop.f32.mrb[0].mxu0
        %v3780 = vadd.f32 0.0, %v3779
        %v3781 = vpop.f32.mrb[0].mxu0
        %3782 = vmatprep.mubr.f32.mxu0 0.0
        %3783 = vmatmul.mubr.f32.gmra.mrb[0].mxu0 %v3574
        %v3784 = vpop.f32.mrb[0].mxu0
        %v3785 = vadd.f32 0.0, %v3784
        %v3786 = vpop.f32.mrb[0].mxu0
        %3787 = vmatprep.mubr.f32.mxu0 0.0
        %3788 = vmatmul.mubr.f32.gmra.mrb[0].mxu0 %v3577
        %v3789 = vpop.f32.mrb[0].mxu0
        %v3790 = vadd.f32 0.0, %v3789
        %v3791 = vpop.f32.mrb[0].mxu0
        %3792 = vmatprep.mubr.f32.mxu0 0.0
        %3793 = vmatmul.mubr.f32.gmra.mrb[0].mxu0 %v3580
        %v3794 = vpop.f32.mrb[0].mxu0
        %v3795 = vadd.f32 0.0, %v3794
        %v3796 = vpop.f32.mrb[0].mxu0
        %3797 = vmatprep.mubr.f32.mxu0 0.0
        %3798 = vmatmul.mubr.f32.gmra.mrb[0].mxu0 %v3583
        %v3799 = vpop.f32.mrb[0].mxu0
        %v3800 = vadd.f32 0.0, %v3799
        %v3801 = vpop.f32.mrb[0].mxu0
        %3802 = vmatprep.mubr.f32.mxu0 0.0
        %3803 = vmatmul.mubr.f32.gmra.mrb[0].mxu0 %v3586
        %v3804 = vpop.f32.mrb[0].mxu0
        %v3805 = vadd.f32 0.0, %v3804
        %v3806 = vpop.f32.mrb[0].mxu0
        %3807 = vmatprep.mubr.f32.mxu0 0.0
        %3808 = vmatmul.mubr.f32.gmra.mrb[0].mxu0 %v3589
        %v3809 = vpop.f32.mrb[0].mxu0
        %v3810 = vadd.f32 0.0, %v3809
        %v3811 = vpop.f32.mrb[0].mxu0
        %3812 = vmatprep.mubr.f32.mxu0 0.0
        %3813 = vmatmul.mubr.f32.gmra.mrb[0].mxu0 %v3592
        %v3814 = vpop.f32.mrb[0].mxu0
        %v3815 = vadd.f32 0.0, %v3814
        %v3816 = vpop.f32.mrb[0].mxu0
        %3817 = vmatprep.mubr.f32.mxu0 0.0
        %3818 = vmatmul.mubr.f32.gmra.mrb[0].mxu0 %v3595
        %v3819 = vpop.f32.mrb[0].mxu0
        %v3820 = vadd.f32 0.0, %v3819
        %v3821 = vpop.f32.mrb[0].mxu0
        %3822 = vmatprep.mubr.f32.mxu0 0.0
        %3823 = vmatmul.mubr.f32.gmra.mrb[0].mxu0 %v3598
        %v3824 = vpop.f32.mrb[0].mxu0
        %v3825 = vadd.f32 0.0, %v3824
        %v3826 = vpop.f32.mrb[0].mxu0
        %3827 = vdwg.mxu0
        %v3828 = vadd.f32 %v3245, %v3670
        %v3829 = vadd.f32 %v3246, %v3675
        %v3830 = vadd.f32 %v3247, %v3680
        %v3831 = vadd.f32 %v3248, %v3685
        %v3832 = vadd.f32 %v3249, %v3690
        %v3833 = vadd.f32 %v3250, %v3695
        %v3834 = vadd.f32 %v3251, %v3700
        %v3835 = vadd.f32 %v3252, %v3705
        %v3836 = vadd.f32 %v3253, %v3710
        %v3837 = vadd.f32 %v3254, %v3715
        %v3838 = vadd.f32 %v3255, %v3720
        %v3839 = vadd.f32 %v3256, %v3725
        %v3840 = vadd.f32 %v3257, %v3730
        %v3841 = vadd.f32 %v3258, %v3735
        %v3842 = vadd.f32 %v3259, %v3740
        %v3843 = vadd.f32 %v3260, %v3745
        %v3844 = vadd.f32 %v3261, %v3750
        %v3845 = vadd.f32 %v3262, %v3755
        %v3846 = vadd.f32 %v3263, %v3760
        %v3847 = vadd.f32 %v3264, %v3765
        %v3848 = vadd.f32 %v3265, %v3770
        %v3849 = vadd.f32 %v3266, %v3775
        %v3850 = vadd.f32 %v3267, %v3780
        %v3851 = vadd.f32 %v3268, %v3785
        %v3852 = vadd.f32 %v3269, %v3790
        %v3853 = vadd.f32 %v3270, %v3795
        %v3854 = vadd.f32 %v3271, %v3800
        %v3855 = vadd.f32 %v3272, %v3805
        %v3856 = vadd.f32 %v3273, %v3810
        %v3857 = vadd.f32 %v3274, %v3815
        %v3858 = vadd.f32 %v3275, %v3820
        %v3859 = vadd.f32 %v3276, %v3825
        %s3860 = scalar_lea.vmem %s2, 1536
        %v3861 = vld [vmem:[%s3860] sm:$0xff]
        %v3862 = vld [vmem:[%s3860 + $0x8] sm:$0xff]
        %v3863 = vld [vmem:[%s3860 + $0x10] sm:$0xff]
        %v3864 = vld [vmem:[%s3860 + $0x18] sm:$0xff]
        %v3865 = vld [vmem:[%s3860 + $0x20] sm:$0xff]
        %v3866 = vld [vmem:[%s3860 + $0x28] sm:$0xff]
        %v3867 = vld [vmem:[%s3860 + $0x30] sm:$0xff]
        %v3868 = vld [vmem:[%s3860 + $0x38] sm:$0xff]
        %v3869 = vld [vmem:[%s3860 + $0x40] sm:$0xff]
        %v3870 = vld [vmem:[%s3860 + $0x48] sm:$0xff]
        %v3871 = vld [vmem:[%s3860 + $0x50] sm:$0xff]
        %v3872 = vld [vmem:[%s3860 + $0x58] sm:$0xff]
        %v3873 = vld [vmem:[%s3860 + $0x60] sm:$0xff]
        %v3874 = vld [vmem:[%s3860 + $0x68] sm:$0xff]
        %v3875 = vld [vmem:[%s3860 + $0x70] sm:$0xff]
        %v3876 = vld [vmem:[%s3860 + $0x78] sm:$0xff]
        %v3877 = vld [vmem:[%s3860 + $0x80] sm:$0xff]
        %v3878 = vld [vmem:[%s3860 + $0x88] sm:$0xff]
        %v3879 = vld [vmem:[%s3860 + $0x90] sm:$0xff]
        %v3880 = vld [vmem:[%s3860 + $0x98] sm:$0xff]
        %v3881 = vld [vmem:[%s3860 + $0xa0] sm:$0xff]
        %v3882 = vld [vmem:[%s3860 + $0xa8] sm:$0xff]
        %v3883 = vld [vmem:[%s3860 + $0xb0] sm:$0xff]
        %v3884 = vld [vmem:[%s3860 + $0xb8] sm:$0xff]
        %v3885 = vld [vmem:[%s3860 + $0xc0] sm:$0xff]
        %v3886 = vld [vmem:[%s3860 + $0xc8] sm:$0xff]
        %v3887 = vld [vmem:[%s3860 + $0xd0] sm:$0xff]
        %v3888 = vld [vmem:[%s3860 + $0xd8] sm:$0xff]
        %v3889 = vld [vmem:[%s3860 + $0xe0] sm:$0xff]
        %v3890 = vld [vmem:[%s3860 + $0xe8] sm:$0xff]
        %v3891 = vld [vmem:[%s3860 + $0xf0] sm:$0xff]
        %v3892 = vld [vmem:[%s3860 + $0xf8] sm:$0xff]
        %3894 = vset.pattern.permute.xlu0 0
        %3895 = vperm.xlu0 %3894, %v3861
        %v3896 = vpop.permute.xlu0 %3895
        %3899 = vset.pattern.permute.xlu0 0
        %3900 = vperm.xlu0 %3899, %v3862
        %v3901 = vpop.permute.xlu0 %3900
        %3904 = vset.pattern.permute.xlu0 0
        %3905 = vperm.xlu0 %3904, %v3863
        %v3906 = vpop.permute.xlu0 %3905
        %3909 = vset.pattern.permute.xlu0 0
        %3910 = vperm.xlu0 %3909, %v3864
        %v3911 = vpop.permute.xlu0 %3910
        %3914 = vset.pattern.permute.xlu0 0
        %3915 = vperm.xlu0 %3914, %v3865
        %v3916 = vpop.permute.xlu0 %3915
        %3919 = vset.pattern.permute.xlu0 0
        %3920 = vperm.xlu0 %3919, %v3866
        %v3921 = vpop.permute.xlu0 %3920
        %3924 = vset.pattern.permute.xlu0 0
        %3925 = vperm.xlu0 %3924, %v3867
        %v3926 = vpop.permute.xlu0 %3925
        %3929 = vset.pattern.permute.xlu0 0
        %3930 = vperm.xlu0 %3929, %v3868
        %v3931 = vpop.permute.xlu0 %3930
        %3934 = vset.pattern.permute.xlu0 0
        %3935 = vperm.xlu0 %3934, %v3869
        %v3936 = vpop.permute.xlu0 %3935
        %3939 = vset.pattern.permute.xlu0 0
        %3940 = vperm.xlu0 %3939, %v3870
        %v3941 = vpop.permute.xlu0 %3940
        %3944 = vset.pattern.permute.xlu0 0
        %3945 = vperm.xlu0 %3944, %v3871
        %v3946 = vpop.permute.xlu0 %3945
        %3949 = vset.pattern.permute.xlu0 0
        %3950 = vperm.xlu0 %3949, %v3872
        %v3951 = vpop.permute.xlu0 %3950
        %3954 = vset.pattern.permute.xlu0 0
        %3955 = vperm.xlu0 %3954, %v3873
        %v3956 = vpop.permute.xlu0 %3955
        %3959 = vset.pattern.permute.xlu0 0
        %3960 = vperm.xlu0 %3959, %v3874
        %v3961 = vpop.permute.xlu0 %3960
        %3964 = vset.pattern.permute.xlu0 0
        %3965 = vperm.xlu0 %3964, %v3875
        %v3966 = vpop.permute.xlu0 %3965
        %3969 = vset.pattern.permute.xlu0 0
        %3970 = vperm.xlu0 %3969, %v3876
        %v3971 = vpop.permute.xlu0 %3970
        %3974 = vset.pattern.permute.xlu0 0
        %3975 = vperm.xlu0 %3974, %v3877
        %v3976 = vpop.permute.xlu0 %3975
        %3979 = vset.pattern.permute.xlu0 0
        %3980 = vperm.xlu0 %3979, %v3878
        %v3981 = vpop.permute.xlu0 %3980
        %3984 = vset.pattern.permute.xlu0 0
        %3985 = vperm.xlu0 %3984, %v3879
        %v3986 = vpop.permute.xlu0 %3985
        %3989 = vset.pattern.permute.xlu0 0
        %3990 = vperm.xlu0 %3989, %v3880
        %v3991 = vpop.permute.xlu0 %3990
        %3994 = vset.pattern.permute.xlu0 0
        %3995 = vperm.xlu0 %3994, %v3881
        %v3996 = vpop.permute.xlu0 %3995
        %3999 = vset.pattern.permute.xlu0 0
        %4000 = vperm.xlu0 %3999, %v3882
        %v4001 = vpop.permute.xlu0 %4000
        %4004 = vset.pattern.permute.xlu0 0
        %4005 = vperm.xlu0 %4004, %v3883
        %v4006 = vpop.permute.xlu0 %4005
        %4009 = vset.pattern.permute.xlu0 0
        %4010 = vperm.xlu0 %4009, %v3884
        %v4011 = vpop.permute.xlu0 %4010
        %4014 = vset.pattern.permute.xlu0 0
        %4015 = vperm.xlu0 %4014, %v3885
        %v4016 = vpop.permute.xlu0 %4015
        %4019 = vset.pattern.permute.xlu0 0
        %4020 = vperm.xlu0 %4019, %v3886
        %v4021 = vpop.permute.xlu0 %4020
        %4024 = vset.pattern.permute.xlu0 0
        %4025 = vperm.xlu0 %4024, %v3887
        %v4026 = vpop.permute.xlu0 %4025
        %4029 = vset.pattern.permute.xlu0 0
        %4030 = vperm.xlu0 %4029, %v3888
        %v4031 = vpop.permute.xlu0 %4030
        %4034 = vset.pattern.permute.xlu0 0
        %4035 = vperm.xlu0 %4034, %v3889
        %v4036 = vpop.permute.xlu0 %4035
        %4039 = vset.pattern.permute.xlu0 0
        %4040 = vperm.xlu0 %4039, %v3890
        %v4041 = vpop.permute.xlu0 %4040
        %4044 = vset.pattern.permute.xlu0 0
        %4045 = vperm.xlu0 %4044, %v3891
        %v4046 = vpop.permute.xlu0 %4045
        %4049 = vset.pattern.permute.xlu0 0
        %4050 = vperm.xlu0 %4049, %v3892
        %v4051 = vpop.permute.xlu0 %4050
        %v4053 = vmul.f32 %v358, %v3896
        %v4054 = vmul.f32 %v357, %v3901
        %v4055 = vmul.f32 %v356, %v3906
        %v4056 = vmul.f32 %v355, %v3911
        %v4057 = vmul.f32 %v354, %v3916
        %v4058 = vmul.f32 %v353, %v3921
        %v4059 = vmul.f32 %v352, %v3926
        %v4060 = vmul.f32 %v351, %v3931
        %v4061 = vmul.f32 %v350, %v3936
        %v4062 = vmul.f32 %v349, %v3941
        %v4063 = vmul.f32 %v348, %v3946
        %v4064 = vmul.f32 %v347, %v3951
        %v4065 = vmul.f32 %v346, %v3956
        %v4066 = vmul.f32 %v345, %v3961
        %v4067 = vmul.f32 %v344, %v3966
        %v4068 = vmul.f32 %v343, %v3971
        %v4069 = vmul.f32 %v342, %v3976
        %v4070 = vmul.f32 %v341, %v3981
        %v4071 = vmul.f32 %v340, %v3986
        %v4072 = vmul.f32 %v339, %v3991
        %v4073 = vmul.f32 %v338, %v3996
        %v4074 = vmul.f32 %v337, %v4001
        %v4075 = vmul.f32 %v336, %v4006
        %v4076 = vmul.f32 %v335, %v4011
        %v4077 = vmul.f32 %v334, %v4016
        %v4078 = vmul.f32 %v333, %v4021
        %v4079 = vmul.f32 %v332, %v4026
        %v4080 = vmul.f32 %v331, %v4031
        %v4081 = vmul.f32 %v330, %v4036
        %v4082 = vmul.f32 %v329, %v4041
        %v4083 = vmul.f32 %v360, %v4046
        %v4084 = vmul.f32 %v359, %v4051
        %s4085 = scalar_lea.vmem %s3, 24
        %v4086 = vld [vmem:[%s4085] sm:$0x7]
        %v4088 = vsel %vm813, %v4053, 0
        %v4091 = vsel %vm813, %v4054, 0
        %v4094 = vsel %vm813, %v4055, 0
        %v4097 = vsel %vm813, %v4056, 0
        %v4100 = vsel %vm813, %v4057, 0
        %v4103 = vsel %vm813, %v4058, 0
        %v4106 = vsel %vm813, %v4059, 0
        %v4109 = vsel %vm813, %v4060, 0
        %v4112 = vsel %vm813, %v4061, 0
        %v4115 = vsel %vm813, %v4062, 0
        %v4118 = vsel %vm813, %v4063, 0
        %v4121 = vsel %vm813, %v4064, 0
        %v4124 = vsel %vm813, %v4065, 0
        %v4127 = vsel %vm813, %v4066, 0
        %v4130 = vsel %vm813, %v4067, 0
        %v4133 = vsel %vm813, %v4068, 0
        %v4136 = vsel %vm813, %v4069, 0
        %v4139 = vsel %vm813, %v4070, 0
        %v4142 = vsel %vm813, %v4071, 0
        %v4145 = vsel %vm813, %v4072, 0
        %v4148 = vsel %vm813, %v4073, 0
        %v4151 = vsel %vm813, %v4074, 0
        %v4154 = vsel %vm813, %v4075, 0
        %v4157 = vsel %vm813, %v4076, 0
        %v4160 = vsel %vm813, %v4077, 0
        %v4163 = vsel %vm813, %v4078, 0
        %v4166 = vsel %vm813, %v4079, 0
        %v4169 = vsel %vm813, %v4080, 0
        %v4172 = vsel %vm813, %v4081, 0
        %v4175 = vsel %vm813, %v4082, 0
        %v4178 = vsel %vm813, %v4083, 0
        %v4181 = vsel %vm813, %v4084, 0
        %v4184 = vsel %vm910, %v4086, 0
        %4186 = vmatprep.subr.mxu0 0.0
        %4187 = vmatpush1.msra.mxu0 %v4184
        %4188 = vmatprep.subr.mxu0 0.0
        %4189 = vmatpush1.msra.mxu0 0.0
        %4190 = vmatprep.subr.mxu0 0.0
        %4191 = vmatpush1.msra.mxu0 0.0
        %4192 = vmatprep.subr.mxu0 0.0
        %4193 = vmatpush1.msra.mxu0 0.0
        %4194 = vmatprep.subr.mxu0 0.0
        %4195 = vmatpush1.msra.mxu0 0.0
        %4196 = vmatprep.subr.mxu0 0.0
        %4197 = vmatpush1.msra.mxu0 0.0
        %4198 = vmatprep.subr.mxu0 0.0
        %4199 = vmatpush1.msra.mxu0 0.0
        %4200 = vmatprep.subr.mxu0 0.0
        %4201 = vmatpush1.msra.mxu0 0.0
        %4202 = vmatprep.subr.mxu0 0.0
        %4203 = vmatpush1.msra.mxu0 0.0
        %4204 = vmatprep.subr.mxu0 0.0
        %4205 = vmatpush1.msra.mxu0 0.0
        %4206 = vmatprep.subr.mxu0 0.0
        %4207 = vmatpush1.msra.mxu0 0.0
        %4208 = vmatprep.subr.mxu0 0.0
        %4209 = vmatpush1.msra.mxu0 0.0
        %4210 = vmatprep.subr.mxu0 0.0
        %4211 = vmatpush1.msra.mxu0 0.0
        %4212 = vmatprep.subr.mxu0 0.0
        %4213 = vmatpush1.msra.mxu0 0.0
        %4214 = vmatprep.subr.mxu0 0.0
        %4215 = vmatpush1.msra.mxu0 0.0
        %4216 = vmatprep.subr.mxu0 0.0
        %4217 = vmatpush1.msra.mxu0 0.0
        %4218 = vmatprep.subr.mxu0 0.0
        %4219 = vmatpush1.msra.mxu0 0.0
        %4220 = vmatprep.subr.mxu0 0.0
        %4221 = vmatpush1.msra.mxu0 0.0
        %4222 = vmatprep.subr.mxu0 0.0
        %4223 = vmatpush1.msra.mxu0 0.0
        %4224 = vmatprep.subr.mxu0 0.0
        %4225 = vmatpush1.msra.mxu0 0.0
        %4226 = vmatprep.subr.mxu0 0.0
        %4227 = vmatpush1.msra.mxu0 0.0
        %4228 = vmatprep.subr.mxu0 0.0
        %4229 = vmatpush1.msra.mxu0 0.0
        %4230 = vmatprep.subr.mxu0 0.0
        %4231 = vmatpush1.msra.mxu0 0.0
        %4232 = vmatprep.subr.mxu0 0.0
        %4233 = vmatpush1.msra.mxu0 0.0
        %4234 = vmatprep.subr.mxu0 0.0
        %4235 = vmatpush1.msra.mxu0 0.0
        %4236 = vmatprep.subr.mxu0 0.0
        %4237 = vmatpush1.msra.mxu0 0.0
        %4238 = vmatprep.subr.mxu0 0.0
        %4239 = vmatpush1.msra.mxu0 0.0
        %4240 = vmatprep.subr.mxu0 0.0
        %4241 = vmatpush1.msra.mxu0 0.0
        %4242 = vmatprep.subr.mxu0 0.0
        %4243 = vmatpush1.msra.mxu0 0.0
        %4244 = vmatprep.subr.mxu0 0.0
        %4245 = vmatpush1.msra.mxu0 0.0
        %4246 = vmatprep.subr.mxu0 0.0
        %4247 = vmatpush1.msra.mxu0 0.0
        %4248 = vmatprep.subr.mxu0 0.0
        %4249 = vmatpush1.msra.mxu0 0.0
        %4250 = vmatprep.mubr.f32.mxu0 0.0
        %4251 = vmatmul.mubr.f32.gmra.mrb[0].mxu0 %v4088
        %v4252 = vpop.f32.mrb[0].mxu0
        %v4253 = vadd.f32 0.0, %v4252
        %v4254 = vpop.f32.mrb[0].mxu0
        %4255 = vmatprep.mubr.f32.mxu0 0.0
        %4256 = vmatmul.mubr.f32.gmra.mrb[0].mxu0 %v4091
        %v4257 = vpop.f32.mrb[0].mxu0
        %v4258 = vadd.f32 0.0, %v4257
        %v4259 = vpop.f32.mrb[0].mxu0
        %4260 = vmatprep.mubr.f32.mxu0 0.0
        %4261 = vmatmul.mubr.f32.gmra.mrb[0].mxu0 %v4094
        %v4262 = vpop.f32.mrb[0].mxu0
        %v4263 = vadd.f32 0.0, %v4262
        %v4264 = vpop.f32.mrb[0].mxu0
        %4265 = vmatprep.mubr.f32.mxu0 0.0
        %4266 = vmatmul.mubr.f32.gmra.mrb[0].mxu0 %v4097
        %v4267 = vpop.f32.mrb[0].mxu0
        %v4268 = vadd.f32 0.0, %v4267
        %v4269 = vpop.f32.mrb[0].mxu0
        %4270 = vmatprep.mubr.f32.mxu0 0.0
        %4271 = vmatmul.mubr.f32.gmra.mrb[0].mxu0 %v4100
        %v4272 = vpop.f32.mrb[0].mxu0
        %v4273 = vadd.f32 0.0, %v4272
        %v4274 = vpop.f32.mrb[0].mxu0
        %4275 = vmatprep.mubr.f32.mxu0 0.0
        %4276 = vmatmul.mubr.f32.gmra.mrb[0].mxu0 %v4103
        %v4277 = vpop.f32.mrb[0].mxu0
        %v4278 = vadd.f32 0.0, %v4277
        %v4279 = vpop.f32.mrb[0].mxu0
        %4280 = vmatprep.mubr.f32.mxu0 0.0
        %4281 = vmatmul.mubr.f32.gmra.mrb[0].mxu0 %v4106
        %v4282 = vpop.f32.mrb[0].mxu0
        %v4283 = vadd.f32 0.0, %v4282
        %v4284 = vpop.f32.mrb[0].mxu0
        %4285 = vmatprep.mubr.f32.mxu0 0.0
        %4286 = vmatmul.mubr.f32.gmra.mrb[0].mxu0 %v4109
        %v4287 = vpop.f32.mrb[0].mxu0
        %v4288 = vadd.f32 0.0, %v4287
        %v4289 = vpop.f32.mrb[0].mxu0
        %4290 = vmatprep.mubr.f32.mxu0 0.0
        %4291 = vmatmul.mubr.f32.gmra.mrb[0].mxu0 %v4112
        %v4292 = vpop.f32.mrb[0].mxu0
        %v4293 = vadd.f32 0.0, %v4292
        %v4294 = vpop.f32.mrb[0].mxu0
        %4295 = vmatprep.mubr.f32.mxu0 0.0
        %4296 = vmatmul.mubr.f32.gmra.mrb[0].mxu0 %v4115
        %v4297 = vpop.f32.mrb[0].mxu0
        %v4298 = vadd.f32 0.0, %v4297
        %v4299 = vpop.f32.mrb[0].mxu0
        %4300 = vmatprep.mubr.f32.mxu0 0.0
        %4301 = vmatmul.mubr.f32.gmra.mrb[0].mxu0 %v4118
        %v4302 = vpop.f32.mrb[0].mxu0
        %v4303 = vadd.f32 0.0, %v4302
        %v4304 = vpop.f32.mrb[0].mxu0
        %4305 = vmatprep.mubr.f32.mxu0 0.0
        %4306 = vmatmul.mubr.f32.gmra.mrb[0].mxu0 %v4121
        %v4307 = vpop.f32.mrb[0].mxu0
        %v4308 = vadd.f32 0.0, %v4307
        %v4309 = vpop.f32.mrb[0].mxu0
        %4310 = vmatprep.mubr.f32.mxu0 0.0
        %4311 = vmatmul.mubr.f32.gmra.mrb[0].mxu0 %v4124
        %v4312 = vpop.f32.mrb[0].mxu0
        %v4313 = vadd.f32 0.0, %v4312
        %v4314 = vpop.f32.mrb[0].mxu0
        %4315 = vmatprep.mubr.f32.mxu0 0.0
        %4316 = vmatmul.mubr.f32.gmra.mrb[0].mxu0 %v4127
        %v4317 = vpop.f32.mrb[0].mxu0
        %v4318 = vadd.f32 0.0, %v4317
        %v4319 = vpop.f32.mrb[0].mxu0
        %4320 = vmatprep.mubr.f32.mxu0 0.0
        %4321 = vmatmul.mubr.f32.gmra.mrb[0].mxu0 %v4130
        %v4322 = vpop.f32.mrb[0].mxu0
        %v4323 = vadd.f32 0.0, %v4322
        %v4324 = vpop.f32.mrb[0].mxu0
        %4325 = vmatprep.mubr.f32.mxu0 0.0
        %4326 = vmatmul.mubr.f32.gmra.mrb[0].mxu0 %v4133
        %v4327 = vpop.f32.mrb[0].mxu0
        %v4328 = vadd.f32 0.0, %v4327
        %v4329 = vpop.f32.mrb[0].mxu0
        %4330 = vmatprep.mubr.f32.mxu0 0.0
        %4331 = vmatmul.mubr.f32.gmra.mrb[0].mxu0 %v4136
        %v4332 = vpop.f32.mrb[0].mxu0
        %v4333 = vadd.f32 0.0, %v4332
        %v4334 = vpop.f32.mrb[0].mxu0
        %4335 = vmatprep.mubr.f32.mxu0 0.0
        %4336 = vmatmul.mubr.f32.gmra.mrb[0].mxu0 %v4139
        %v4337 = vpop.f32.mrb[0].mxu0
        %v4338 = vadd.f32 0.0, %v4337
        %v4339 = vpop.f32.mrb[0].mxu0
        %4340 = vmatprep.mubr.f32.mxu0 0.0
        %4341 = vmatmul.mubr.f32.gmra.mrb[0].mxu0 %v4142
        %v4342 = vpop.f32.mrb[0].mxu0
        %v4343 = vadd.f32 0.0, %v4342
        %v4344 = vpop.f32.mrb[0].mxu0
        %4345 = vmatprep.mubr.f32.mxu0 0.0
        %4346 = vmatmul.mubr.f32.gmra.mrb[0].mxu0 %v4145
        %v4347 = vpop.f32.mrb[0].mxu0
        %v4348 = vadd.f32 0.0, %v4347
        %v4349 = vpop.f32.mrb[0].mxu0
        %4350 = vmatprep.mubr.f32.mxu0 0.0
        %4351 = vmatmul.mubr.f32.gmra.mrb[0].mxu0 %v4148
        %v4352 = vpop.f32.mrb[0].mxu0
        %v4353 = vadd.f32 0.0, %v4352
        %v4354 = vpop.f32.mrb[0].mxu0
        %4355 = vmatprep.mubr.f32.mxu0 0.0
        %4356 = vmatmul.mubr.f32.gmra.mrb[0].mxu0 %v4151
        %v4357 = vpop.f32.mrb[0].mxu0
        %v4358 = vadd.f32 0.0, %v4357
        %v4359 = vpop.f32.mrb[0].mxu0
        %4360 = vmatprep.mubr.f32.mxu0 0.0
        %4361 = vmatmul.mubr.f32.gmra.mrb[0].mxu0 %v4154
        %v4362 = vpop.f32.mrb[0].mxu0
        %v4363 = vadd.f32 0.0, %v4362
        %v4364 = vpop.f32.mrb[0].mxu0
        %4365 = vmatprep.mubr.f32.mxu0 0.0
        %4366 = vmatmul.mubr.f32.gmra.mrb[0].mxu0 %v4157
        %v4367 = vpop.f32.mrb[0].mxu0
        %v4368 = vadd.f32 0.0, %v4367
        %v4369 = vpop.f32.mrb[0].mxu0
        %4370 = vmatprep.mubr.f32.mxu0 0.0
        %4371 = vmatmul.mubr.f32.gmra.mrb[0].mxu0 %v4160
        %v4372 = vpop.f32.mrb[0].mxu0
        %v4373 = vadd.f32 0.0, %v4372
        %v4374 = vpop.f32.mrb[0].mxu0
        %4375 = vmatprep.mubr.f32.mxu0 0.0
        %4376 = vmatmul.mubr.f32.gmra.mrb[0].mxu0 %v4163
        %v4377 = vpop.f32.mrb[0].mxu0
        %v4378 = vadd.f32 0.0, %v4377
        %v4379 = vpop.f32.mrb[0].mxu0
        %4380 = vmatprep.mubr.f32.mxu0 0.0
        %4381 = vmatmul.mubr.f32.gmra.mrb[0].mxu0 %v4166
        %v4382 = vpop.f32.mrb[0].mxu0
        %v4383 = vadd.f32 0.0, %v4382
        %v4384 = vpop.f32.mrb[0].mxu0
        %4385 = vmatprep.mubr.f32.mxu0 0.0
        %4386 = vmatmul.mubr.f32.gmra.mrb[0].mxu0 %v4169
        %v4387 = vpop.f32.mrb[0].mxu0
        %v4388 = vadd.f32 0.0, %v4387
        %v4389 = vpop.f32.mrb[0].mxu0
        %4390 = vmatprep.mubr.f32.mxu0 0.0
        %4391 = vmatmul.mubr.f32.gmra.mrb[0].mxu0 %v4172
        %v4392 = vpop.f32.mrb[0].mxu0
        %v4393 = vadd.f32 0.0, %v4392
        %v4394 = vpop.f32.mrb[0].mxu0
        %4395 = vmatprep.mubr.f32.mxu0 0.0
        %4396 = vmatmul.mubr.f32.gmra.mrb[0].mxu0 %v4175
        %v4397 = vpop.f32.mrb[0].mxu0
        %v4398 = vadd.f32 0.0, %v4397
        %v4399 = vpop.f32.mrb[0].mxu0
        %4400 = vmatprep.mubr.f32.mxu0 0.0
        %4401 = vmatmul.mubr.f32.gmra.mrb[0].mxu0 %v4178
        %v4402 = vpop.f32.mrb[0].mxu0
        %v4403 = vadd.f32 0.0, %v4402
        %v4404 = vpop.f32.mrb[0].mxu0
        %4405 = vmatprep.mubr.f32.mxu0 0.0
        %4406 = vmatmul.mubr.f32.gmra.mrb[0].mxu0 %v4181
        %v4407 = vpop.f32.mrb[0].mxu0
        %v4408 = vadd.f32 0.0, %v4407
        %v4409 = vpop.f32.mrb[0].mxu0
        %4410 = vdwg.mxu0
        %v4411 = vadd.f32 %v3828, %v4253
        %v4412 = vadd.f32 %v3829, %v4258
        %v4413 = vadd.f32 %v3830, %v4263
        %v4414 = vadd.f32 %v3831, %v4268
        %v4415 = vadd.f32 %v3832, %v4273
        %v4416 = vadd.f32 %v3833, %v4278
        %v4417 = vadd.f32 %v3834, %v4283
        %v4418 = vadd.f32 %v3835, %v4288
        %v4419 = vadd.f32 %v3836, %v4293
        %v4420 = vadd.f32 %v3837, %v4298
        %v4421 = vadd.f32 %v3838, %v4303
        %v4422 = vadd.f32 %v3839, %v4308
        %v4423 = vadd.f32 %v3840, %v4313
        %v4424 = vadd.f32 %v3841, %v4318
        %v4425 = vadd.f32 %v3842, %v4323
        %v4426 = vadd.f32 %v3843, %v4328
        %v4427 = vadd.f32 %v3844, %v4333
        %v4428 = vadd.f32 %v3845, %v4338
        %v4429 = vadd.f32 %v3846, %v4343
        %v4430 = vadd.f32 %v3847, %v4348
        %v4431 = vadd.f32 %v3848, %v4353
        %v4432 = vadd.f32 %v3849, %v4358
        %v4433 = vadd.f32 %v3850, %v4363
        %v4434 = vadd.f32 %v3851, %v4368
        %v4435 = vadd.f32 %v3852, %v4373
        %v4436 = vadd.f32 %v3853, %v4378
        %v4437 = vadd.f32 %v3854, %v4383
        %v4438 = vadd.f32 %v3855, %v4388
        %v4439 = vadd.f32 %v3856, %v4393
        %v4440 = vadd.f32 %v3857, %v4398
        %v4441 = vadd.f32 %v3858, %v4403
        %v4442 = vadd.f32 %v3859, %v4408
        %s4443 = scalar_lea.vmem %s2, 1792
        %v4444 = vld [vmem:[%s4443] sm:$0xff]
        %v4445 = vld [vmem:[%s4443 + $0x8] sm:$0xff]
        %v4446 = vld [vmem:[%s4443 + $0x10] sm:$0xff]
        %v4447 = vld [vmem:[%s4443 + $0x18] sm:$0xff]
        %v4448 = vld [vmem:[%s4443 + $0x20] sm:$0xff]
        %v4449 = vld [vmem:[%s4443 + $0x28] sm:$0xff]
        %v4450 = vld [vmem:[%s4443 + $0x30] sm:$0xff]
        %v4451 = vld [vmem:[%s4443 + $0x38] sm:$0xff]
        %v4452 = vld [vmem:[%s4443 + $0x40] sm:$0xff]
        %v4453 = vld [vmem:[%s4443 + $0x48] sm:$0xff]
        %v4454 = vld [vmem:[%s4443 + $0x50] sm:$0xff]
        %v4455 = vld [vmem:[%s4443 + $0x58] sm:$0xff]
        %v4456 = vld [vmem:[%s4443 + $0x60] sm:$0xff]
        %v4457 = vld [vmem:[%s4443 + $0x68] sm:$0xff]
        %v4458 = vld [vmem:[%s4443 + $0x70] sm:$0xff]
        %v4459 = vld [vmem:[%s4443 + $0x78] sm:$0xff]
        %v4460 = vld [vmem:[%s4443 + $0x80] sm:$0xff]
        %v4461 = vld [vmem:[%s4443 + $0x88] sm:$0xff]
        %v4462 = vld [vmem:[%s4443 + $0x90] sm:$0xff]
        %v4463 = vld [vmem:[%s4443 + $0x98] sm:$0xff]
        %v4464 = vld [vmem:[%s4443 + $0xa0] sm:$0xff]
        %v4465 = vld [vmem:[%s4443 + $0xa8] sm:$0xff]
        %v4466 = vld [vmem:[%s4443 + $0xb0] sm:$0xff]
        %v4467 = vld [vmem:[%s4443 + $0xb8] sm:$0xff]
        %v4468 = vld [vmem:[%s4443 + $0xc0] sm:$0xff]
        %v4469 = vld [vmem:[%s4443 + $0xc8] sm:$0xff]
        %v4470 = vld [vmem:[%s4443 + $0xd0] sm:$0xff]
        %v4471 = vld [vmem:[%s4443 + $0xd8] sm:$0xff]
        %v4472 = vld [vmem:[%s4443 + $0xe0] sm:$0xff]
        %v4473 = vld [vmem:[%s4443 + $0xe8] sm:$0xff]
        %v4474 = vld [vmem:[%s4443 + $0xf0] sm:$0xff]
        %v4475 = vld [vmem:[%s4443 + $0xf8] sm:$0xff]
        %4477 = vset.pattern.permute.xlu0 0
        %4478 = vperm.xlu0 %4477, %v4444
        %v4479 = vpop.permute.xlu0 %4478
        %4482 = vset.pattern.permute.xlu0 0
        %4483 = vperm.xlu0 %4482, %v4445
        %v4484 = vpop.permute.xlu0 %4483
        %4487 = vset.pattern.permute.xlu0 0
        %4488 = vperm.xlu0 %4487, %v4446
        %v4489 = vpop.permute.xlu0 %4488
        %4492 = vset.pattern.permute.xlu0 0
        %4493 = vperm.xlu0 %4492, %v4447
        %v4494 = vpop.permute.xlu0 %4493
        %4497 = vset.pattern.permute.xlu0 0
        %4498 = vperm.xlu0 %4497, %v4448
        %v4499 = vpop.permute.xlu0 %4498
        %4502 = vset.pattern.permute.xlu0 0
        %4503 = vperm.xlu0 %4502, %v4449
        %v4504 = vpop.permute.xlu0 %4503
        %4507 = vset.pattern.permute.xlu0 0
        %4508 = vperm.xlu0 %4507, %v4450
        %v4509 = vpop.permute.xlu0 %4508
        %4512 = vset.pattern.permute.xlu0 0
        %4513 = vperm.xlu0 %4512, %v4451
        %v4514 = vpop.permute.xlu0 %4513
        %4517 = vset.pattern.permute.xlu0 0
        %4518 = vperm.xlu0 %4517, %v4452
        %v4519 = vpop.permute.xlu0 %4518
        %4522 = vset.pattern.permute.xlu0 0
        %4523 = vperm.xlu0 %4522, %v4453
        %v4524 = vpop.permute.xlu0 %4523
        %4527 = vset.pattern.permute.xlu0 0
        %4528 = vperm.xlu0 %4527, %v4454
        %v4529 = vpop.permute.xlu0 %4528
        %4532 = vset.pattern.permute.xlu0 0
        %4533 = vperm.xlu0 %4532, %v4455
        %v4534 = vpop.permute.xlu0 %4533
        %4537 = vset.pattern.permute.xlu0 0
        %4538 = vperm.xlu0 %4537, %v4456
        %v4539 = vpop.permute.xlu0 %4538
        %4542 = vset.pattern.permute.xlu0 0
        %4543 = vperm.xlu0 %4542, %v4457
        %v4544 = vpop.permute.xlu0 %4543
        %4547 = vset.pattern.permute.xlu0 0
        %4548 = vperm.xlu0 %4547, %v4458
        %v4549 = vpop.permute.xlu0 %4548
        %4552 = vset.pattern.permute.xlu0 0
        %4553 = vperm.xlu0 %4552, %v4459
        %v4554 = vpop.permute.xlu0 %4553
        %4557 = vset.pattern.permute.xlu0 0
        %4558 = vperm.xlu0 %4557, %v4460
        %v4559 = vpop.permute.xlu0 %4558
        %4562 = vset.pattern.permute.xlu0 0
        %4563 = vperm.xlu0 %4562, %v4461
        %v4564 = vpop.permute.xlu0 %4563
        %4567 = vset.pattern.permute.xlu0 0
        %4568 = vperm.xlu0 %4567, %v4462
        %v4569 = vpop.permute.xlu0 %4568
        %4572 = vset.pattern.permute.xlu0 0
        %4573 = vperm.xlu0 %4572, %v4463
        %v4574 = vpop.permute.xlu0 %4573
        %4577 = vset.pattern.permute.xlu0 0
        %4578 = vperm.xlu0 %4577, %v4464
        %v4579 = vpop.permute.xlu0 %4578
        %4582 = vset.pattern.permute.xlu0 0
        %4583 = vperm.xlu0 %4582, %v4465
        %v4584 = vpop.permute.xlu0 %4583
        %4587 = vset.pattern.permute.xlu0 0
        %4588 = vperm.xlu0 %4587, %v4466
        %v4589 = vpop.permute.xlu0 %4588
        %4592 = vset.pattern.permute.xlu0 0
        %4593 = vperm.xlu0 %4592, %v4467
        %v4594 = vpop.permute.xlu0 %4593
        %4597 = vset.pattern.permute.xlu0 0
        %4598 = vperm.xlu0 %4597, %v4468
        %v4599 = vpop.permute.xlu0 %4598
        %4602 = vset.pattern.permute.xlu0 0
        %4603 = vperm.xlu0 %4602, %v4469
        %v4604 = vpop.permute.xlu0 %4603
        %4607 = vset.pattern.permute.xlu0 0
        %4608 = vperm.xlu0 %4607, %v4470
        %v4609 = vpop.permute.xlu0 %4608
        %4612 = vset.pattern.permute.xlu0 0
        %4613 = vperm.xlu0 %4612, %v4471
        %v4614 = vpop.permute.xlu0 %4613
        %4617 = vset.pattern.permute.xlu0 0
        %4618 = vperm.xlu0 %4617, %v4472
        %v4619 = vpop.permute.xlu0 %4618
        %4622 = vset.pattern.permute.xlu0 0
        %4623 = vperm.xlu0 %4622, %v4473
        %v4624 = vpop.permute.xlu0 %4623
        %4627 = vset.pattern.permute.xlu0 0
        %4628 = vperm.xlu0 %4627, %v4474
        %v4629 = vpop.permute.xlu0 %4628
        %4632 = vset.pattern.permute.xlu0 0
        %4633 = vperm.xlu0 %4632, %v4475
        %v4634 = vpop.permute.xlu0 %4633
        %v4636 = vmul.f32 %v264, %v4479
        %v4637 = vmul.f32 %v265, %v4484
        %v4638 = vmul.f32 %v266, %v4489
        %v4639 = vmul.f32 %v267, %v4494
        %v4640 = vmul.f32 %v268, %v4499
        %v4641 = vmul.f32 %v269, %v4504
        %v4642 = vmul.f32 %v270, %v4509
        %v4643 = vmul.f32 %v271, %v4514
        %v4644 = vmul.f32 %v272, %v4519
        %v4645 = vmul.f32 %v273, %v4524
        %v4646 = vmul.f32 %v274, %v4529
        %v4647 = vmul.f32 %v275, %v4534
        %v4648 = vmul.f32 %v276, %v4539
        %v4649 = vmul.f32 %v277, %v4544
        %v4650 = vmul.f32 %v278, %v4549
        %v4651 = vmul.f32 %v279, %v4554
        %v4652 = vmul.f32 %v280, %v4559
        %v4653 = vmul.f32 %v281, %v4564
        %v4654 = vmul.f32 %v282, %v4569
        %v4655 = vmul.f32 %v283, %v4574
        %v4656 = vmul.f32 %v284, %v4579
        %v4657 = vmul.f32 %v285, %v4584
        %v4658 = vmul.f32 %v286, %v4589
        %v4659 = vmul.f32 %v287, %v4594
        %v4660 = vmul.f32 %v288, %v4599
        %v4661 = vmul.f32 %v289, %v4604
        %v4662 = vmul.f32 %v290, %v4609
        %v4663 = vmul.f32 %v291, %v4614
        %v4664 = vmul.f32 %v292, %v4619
        %v4665 = vmul.f32 %v293, %v4624
        %v4666 = vmul.f32 %v262, %v4629
        %v4667 = vmul.f32 %v263, %v4634
        %s4668 = scalar_lea.vmem %s3, 28
        %v4669 = vld [vmem:[%s4668] sm:$0x7]
        %v4671 = vsel %vm813, %v4636, 0
        %v4674 = vsel %vm813, %v4637, 0
        %v4677 = vsel %vm813, %v4638, 0
        %v4680 = vsel %vm813, %v4639, 0
        %v4683 = vsel %vm813, %v4640, 0
        %v4686 = vsel %vm813, %v4641, 0
        %v4689 = vsel %vm813, %v4642, 0
        %v4692 = vsel %vm813, %v4643, 0
        %v4695 = vsel %vm813, %v4644, 0
        %v4698 = vsel %vm813, %v4645, 0
        %v4701 = vsel %vm813, %v4646, 0
        %v4704 = vsel %vm813, %v4647, 0
        %v4707 = vsel %vm813, %v4648, 0
        %v4710 = vsel %vm813, %v4649, 0
        %v4713 = vsel %vm813, %v4650, 0
        %v4716 = vsel %vm813, %v4651, 0
        %v4719 = vsel %vm813, %v4652, 0
        %v4722 = vsel %vm813, %v4653, 0
        %v4725 = vsel %vm813, %v4654, 0
        %v4728 = vsel %vm813, %v4655, 0
        %v4731 = vsel %vm813, %v4656, 0
        %v4734 = vsel %vm813, %v4657, 0
        %v4737 = vsel %vm813, %v4658, 0
        %v4740 = vsel %vm813, %v4659, 0
        %v4743 = vsel %vm813, %v4660, 0
        %v4746 = vsel %vm813, %v4661, 0
        %v4749 = vsel %vm813, %v4662, 0
        %v4752 = vsel %vm813, %v4663, 0
        %v4755 = vsel %vm813, %v4664, 0
        %v4758 = vsel %vm813, %v4665, 0
        %v4761 = vsel %vm813, %v4666, 0
        %v4764 = vsel %vm813, %v4667, 0
        %v4767 = vsel %vm910, %v4669, 0
        %4769 = vmatprep.subr.mxu0 0.0
        %4770 = vmatpush1.msra.mxu0 %v4767
        %4771 = vmatprep.subr.mxu0 0.0
        %4772 = vmatpush1.msra.mxu0 0.0
        %4773 = vmatprep.subr.mxu0 0.0
        %4774 = vmatpush1.msra.mxu0 0.0
        %4775 = vmatprep.subr.mxu0 0.0
        %4776 = vmatpush1.msra.mxu0 0.0
        %4777 = vmatprep.subr.mxu0 0.0
        %4778 = vmatpush1.msra.mxu0 0.0
        %4779 = vmatprep.subr.mxu0 0.0
        %4780 = vmatpush1.msra.mxu0 0.0
        %4781 = vmatprep.subr.mxu0 0.0
        %4782 = vmatpush1.msra.mxu0 0.0
        %4783 = vmatprep.subr.mxu0 0.0
        %4784 = vmatpush1.msra.mxu0 0.0
        %4785 = vmatprep.subr.mxu0 0.0
        %4786 = vmatpush1.msra.mxu0 0.0
        %4787 = vmatprep.subr.mxu0 0.0
        %4788 = vmatpush1.msra.mxu0 0.0
        %4789 = vmatprep.subr.mxu0 0.0
        %4790 = vmatpush1.msra.mxu0 0.0
        %4791 = vmatprep.subr.mxu0 0.0
        %4792 = vmatpush1.msra.mxu0 0.0
        %4793 = vmatprep.subr.mxu0 0.0
        %4794 = vmatpush1.msra.mxu0 0.0
        %4795 = vmatprep.subr.mxu0 0.0
        %4796 = vmatpush1.msra.mxu0 0.0
        %4797 = vmatprep.subr.mxu0 0.0
        %4798 = vmatpush1.msra.mxu0 0.0
        %4799 = vmatprep.subr.mxu0 0.0
        %4800 = vmatpush1.msra.mxu0 0.0
        %4801 = vmatprep.subr.mxu0 0.0
        %4802 = vmatpush1.msra.mxu0 0.0
        %4803 = vmatprep.subr.mxu0 0.0
        %4804 = vmatpush1.msra.mxu0 0.0
        %4805 = vmatprep.subr.mxu0 0.0
        %4806 = vmatpush1.msra.mxu0 0.0
        %4807 = vmatprep.subr.mxu0 0.0
        %4808 = vmatpush1.msra.mxu0 0.0
        %4809 = vmatprep.subr.mxu0 0.0
        %4810 = vmatpush1.msra.mxu0 0.0
        %4811 = vmatprep.subr.mxu0 0.0
        %4812 = vmatpush1.msra.mxu0 0.0
        %4813 = vmatprep.subr.mxu0 0.0
        %4814 = vmatpush1.msra.mxu0 0.0
        %4815 = vmatprep.subr.mxu0 0.0
        %4816 = vmatpush1.msra.mxu0 0.0
        %4817 = vmatprep.subr.mxu0 0.0
        %4818 = vmatpush1.msra.mxu0 0.0
        %4819 = vmatprep.subr.mxu0 0.0
        %4820 = vmatpush1.msra.mxu0 0.0
        %4821 = vmatprep.subr.mxu0 0.0
        %4822 = vmatpush1.msra.mxu0 0.0
        %4823 = vmatprep.subr.mxu0 0.0
        %4824 = vmatpush1.msra.mxu0 0.0
        %4825 = vmatprep.subr.mxu0 0.0
        %4826 = vmatpush1.msra.mxu0 0.0
        %4827 = vmatprep.subr.mxu0 0.0
        %4828 = vmatpush1.msra.mxu0 0.0
        %4829 = vmatprep.subr.mxu0 0.0
        %4830 = vmatpush1.msra.mxu0 0.0
        %4831 = vmatprep.subr.mxu0 0.0
        %4832 = vmatpush1.msra.mxu0 0.0
        %4833 = vmatprep.mubr.f32.mxu0 0.0
        %4834 = vmatmul.mubr.f32.gmra.mrb[0].mxu0 %v4671
        %v4835 = vpop.f32.mrb[0].mxu0
        %v4836 = vadd.f32 0.0, %v4835
        %v4837 = vpop.f32.mrb[0].mxu0
        %4838 = vmatprep.mubr.f32.mxu0 0.0
        %4839 = vmatmul.mubr.f32.gmra.mrb[0].mxu0 %v4674
        %v4840 = vpop.f32.mrb[0].mxu0
        %v4841 = vadd.f32 0.0, %v4840
        %v4842 = vpop.f32.mrb[0].mxu0
        %4843 = vmatprep.mubr.f32.mxu0 0.0
        %4844 = vmatmul.mubr.f32.gmra.mrb[0].mxu0 %v4677
        %v4845 = vpop.f32.mrb[0].mxu0
        %v4846 = vadd.f32 0.0, %v4845
        %v4847 = vpop.f32.mrb[0].mxu0
        %4848 = vmatprep.mubr.f32.mxu0 0.0
        %4849 = vmatmul.mubr.f32.gmra.mrb[0].mxu0 %v4680
        %v4850 = vpop.f32.mrb[0].mxu0
        %v4851 = vadd.f32 0.0, %v4850
        %v4852 = vpop.f32.mrb[0].mxu0
        %4853 = vmatprep.mubr.f32.mxu0 0.0
        %4854 = vmatmul.mubr.f32.gmra.mrb[0].mxu0 %v4683
        %v4855 = vpop.f32.mrb[0].mxu0
        %v4856 = vadd.f32 0.0, %v4855
        %v4857 = vpop.f32.mrb[0].mxu0
        %4858 = vmatprep.mubr.f32.mxu0 0.0
        %4859 = vmatmul.mubr.f32.gmra.mrb[0].mxu0 %v4686
        %v4860 = vpop.f32.mrb[0].mxu0
        %v4861 = vadd.f32 0.0, %v4860
        %v4862 = vpop.f32.mrb[0].mxu0
        %4863 = vmatprep.mubr.f32.mxu0 0.0
        %4864 = vmatmul.mubr.f32.gmra.mrb[0].mxu0 %v4689
        %v4865 = vpop.f32.mrb[0].mxu0
        %v4866 = vadd.f32 0.0, %v4865
        %v4867 = vpop.f32.mrb[0].mxu0
        %4868 = vmatprep.mubr.f32.mxu0 0.0
        %4869 = vmatmul.mubr.f32.gmra.mrb[0].mxu0 %v4692
        %v4870 = vpop.f32.mrb[0].mxu0
        %v4871 = vadd.f32 0.0, %v4870
        %v4872 = vpop.f32.mrb[0].mxu0
        %4873 = vmatprep.mubr.f32.mxu0 0.0
        %4874 = vmatmul.mubr.f32.gmra.mrb[0].mxu0 %v4695
        %v4875 = vpop.f32.mrb[0].mxu0
        %v4876 = vadd.f32 0.0, %v4875
        %v4877 = vpop.f32.mrb[0].mxu0
        %4878 = vmatprep.mubr.f32.mxu0 0.0
        %4879 = vmatmul.mubr.f32.gmra.mrb[0].mxu0 %v4698
        %v4880 = vpop.f32.mrb[0].mxu0
        %v4881 = vadd.f32 0.0, %v4880
        %v4882 = vpop.f32.mrb[0].mxu0
        %4883 = vmatprep.mubr.f32.mxu0 0.0
        %4884 = vmatmul.mubr.f32.gmra.mrb[0].mxu0 %v4701
        %v4885 = vpop.f32.mrb[0].mxu0
        %v4886 = vadd.f32 0.0, %v4885
        %v4887 = vpop.f32.mrb[0].mxu0
        %4888 = vmatprep.mubr.f32.mxu0 0.0
        %4889 = vmatmul.mubr.f32.gmra.mrb[0].mxu0 %v4704
        %v4890 = vpop.f32.mrb[0].mxu0
        %v4891 = vadd.f32 0.0, %v4890
        %v4892 = vpop.f32.mrb[0].mxu0
        %4893 = vmatprep.mubr.f32.mxu0 0.0
        %4894 = vmatmul.mubr.f32.gmra.mrb[0].mxu0 %v4707
        %v4895 = vpop.f32.mrb[0].mxu0
        %v4896 = vadd.f32 0.0, %v4895
        %v4897 = vpop.f32.mrb[0].mxu0
        %4898 = vmatprep.mubr.f32.mxu0 0.0
        %4899 = vmatmul.mubr.f32.gmra.mrb[0].mxu0 %v4710
        %v4900 = vpop.f32.mrb[0].mxu0
        %v4901 = vadd.f32 0.0, %v4900
        %v4902 = vpop.f32.mrb[0].mxu0
        %4903 = vmatprep.mubr.f32.mxu0 0.0
        %4904 = vmatmul.mubr.f32.gmra.mrb[0].mxu0 %v4713
        %v4905 = vpop.f32.mrb[0].mxu0
        %v4906 = vadd.f32 0.0, %v4905
        %v4907 = vpop.f32.mrb[0].mxu0
        %4908 = vmatprep.mubr.f32.mxu0 0.0
        %4909 = vmatmul.mubr.f32.gmra.mrb[0].mxu0 %v4716
        %v4910 = vpop.f32.mrb[0].mxu0
        %v4911 = vadd.f32 0.0, %v4910
        %v4912 = vpop.f32.mrb[0].mxu0
        %4913 = vmatprep.mubr.f32.mxu0 0.0
        %4914 = vmatmul.mubr.f32.gmra.mrb[0].mxu0 %v4719
        %v4915 = vpop.f32.mrb[0].mxu0
        %v4916 = vadd.f32 0.0, %v4915
        %v4917 = vpop.f32.mrb[0].mxu0
        %4918 = vmatprep.mubr.f32.mxu0 0.0
        %4919 = vmatmul.mubr.f32.gmra.mrb[0].mxu0 %v4722
        %v4920 = vpop.f32.mrb[0].mxu0
        %v4921 = vadd.f32 0.0, %v4920
        %v4922 = vpop.f32.mrb[0].mxu0
        %4923 = vmatprep.mubr.f32.mxu0 0.0
        %4924 = vmatmul.mubr.f32.gmra.mrb[0].mxu0 %v4725
        %v4925 = vpop.f32.mrb[0].mxu0
        %v4926 = vadd.f32 0.0, %v4925
        %v4927 = vpop.f32.mrb[0].mxu0
        %4928 = vmatprep.mubr.f32.mxu0 0.0
        %4929 = vmatmul.mubr.f32.gmra.mrb[0].mxu0 %v4728
        %v4930 = vpop.f32.mrb[0].mxu0
        %v4931 = vadd.f32 0.0, %v4930
        %v4932 = vpop.f32.mrb[0].mxu0
        %4933 = vmatprep.mubr.f32.mxu0 0.0
        %4934 = vmatmul.mubr.f32.gmra.mrb[0].mxu0 %v4731
        %v4935 = vpop.f32.mrb[0].mxu0
        %v4936 = vadd.f32 0.0, %v4935
        %v4937 = vpop.f32.mrb[0].mxu0
        %4938 = vmatprep.mubr.f32.mxu0 0.0
        %4939 = vmatmul.mubr.f32.gmra.mrb[0].mxu0 %v4734
        %v4940 = vpop.f32.mrb[0].mxu0
        %v4941 = vadd.f32 0.0, %v4940
        %v4942 = vpop.f32.mrb[0].mxu0
        %4943 = vmatprep.mubr.f32.mxu0 0.0
        %4944 = vmatmul.mubr.f32.gmra.mrb[0].mxu0 %v4737
        %v4945 = vpop.f32.mrb[0].mxu0
        %v4946 = vadd.f32 0.0, %v4945
        %v4947 = vpop.f32.mrb[0].mxu0
        %4948 = vmatprep.mubr.f32.mxu0 0.0
        %4949 = vmatmul.mubr.f32.gmra.mrb[0].mxu0 %v4740
        %v4950 = vpop.f32.mrb[0].mxu0
        %v4951 = vadd.f32 0.0, %v4950
        %v4952 = vpop.f32.mrb[0].mxu0
        %4953 = vmatprep.mubr.f32.mxu0 0.0
        %4954 = vmatmul.mubr.f32.gmra.mrb[0].mxu0 %v4743
        %v4955 = vpop.f32.mrb[0].mxu0
        %v4956 = vadd.f32 0.0, %v4955
        %v4957 = vpop.f32.mrb[0].mxu0
        %4958 = vmatprep.mubr.f32.mxu0 0.0
        %4959 = vmatmul.mubr.f32.gmra.mrb[0].mxu0 %v4746
        %v4960 = vpop.f32.mrb[0].mxu0
        %v4961 = vadd.f32 0.0, %v4960
        %v4962 = vpop.f32.mrb[0].mxu0
        %4963 = vmatprep.mubr.f32.mxu0 0.0
        %4964 = vmatmul.mubr.f32.gmra.mrb[0].mxu0 %v4749
        %v4965 = vpop.f32.mrb[0].mxu0
        %v4966 = vadd.f32 0.0, %v4965
        %v4967 = vpop.f32.mrb[0].mxu0
        %4968 = vmatprep.mubr.f32.mxu0 0.0
        %4969 = vmatmul.mubr.f32.gmra.mrb[0].mxu0 %v4752
        %v4970 = vpop.f32.mrb[0].mxu0
        %v4971 = vadd.f32 0.0, %v4970
        %v4972 = vpop.f32.mrb[0].mxu0
        %4973 = vmatprep.mubr.f32.mxu0 0.0
        %4974 = vmatmul.mubr.f32.gmra.mrb[0].mxu0 %v4755
        %v4975 = vpop.f32.mrb[0].mxu0
        %v4976 = vadd.f32 0.0, %v4975
        %v4977 = vpop.f32.mrb[0].mxu0
        %4978 = vmatprep.mubr.f32.mxu0 0.0
        %4979 = vmatmul.mubr.f32.gmra.mrb[0].mxu0 %v4758
        %v4980 = vpop.f32.mrb[0].mxu0
        %v4981 = vadd.f32 0.0, %v4980
        %v4982 = vpop.f32.mrb[0].mxu0
        %4983 = vmatprep.mubr.f32.mxu0 0.0
        %4984 = vmatmul.mubr.f32.gmra.mrb[0].mxu0 %v4761
        %v4985 = vpop.f32.mrb[0].mxu0
        %v4986 = vadd.f32 0.0, %v4985
        %v4987 = vpop.f32.mrb[0].mxu0
        %4988 = vmatprep.mubr.f32.mxu0 0.0
        %4989 = vmatmul.mubr.f32.gmra.mrb[0].mxu0 %v4764
        %v4990 = vpop.f32.mrb[0].mxu0
        %v4991 = vadd.f32 0.0, %v4990
        %v4992 = vpop.f32.mrb[0].mxu0
        %4993 = vdwg.mxu0
        %v4994 = vadd.f32 %v4411, %v4836
        %v4995 = vadd.f32 %v4412, %v4841
        %v4996 = vadd.f32 %v4413, %v4846
        %v4997 = vadd.f32 %v4414, %v4851
        %v4998 = vadd.f32 %v4415, %v4856
        %v4999 = vadd.f32 %v4416, %v4861
        %v5000 = vadd.f32 %v4417, %v4866
        %v5001 = vadd.f32 %v4418, %v4871
        %v5002 = vadd.f32 %v4419, %v4876
        %v5003 = vadd.f32 %v4420, %v4881
        %v5004 = vadd.f32 %v4421, %v4886
        %v5005 = vadd.f32 %v4422, %v4891
        %v5006 = vadd.f32 %v4423, %v4896
        %v5007 = vadd.f32 %v4424, %v4901
        %v5008 = vadd.f32 %v4425, %v4906
        %v5009 = vadd.f32 %v4426, %v4911
        %v5010 = vadd.f32 %v4427, %v4916
        %v5011 = vadd.f32 %v4428, %v4921
        %v5012 = vadd.f32 %v4429, %v4926
        %v5013 = vadd.f32 %v4430, %v4931
        %v5014 = vadd.f32 %v4431, %v4936
        %v5015 = vadd.f32 %v4432, %v4941
        %v5016 = vadd.f32 %v4433, %v4946
        %v5017 = vadd.f32 %v4434, %v4951
        %v5018 = vadd.f32 %v4435, %v4956
        %v5019 = vadd.f32 %v4436, %v4961
        %v5020 = vadd.f32 %v4437, %v4966
        %v5021 = vadd.f32 %v4438, %v4971
        %v5022 = vadd.f32 %v4439, %v4976
        %v5023 = vadd.f32 %v4440, %v4981
        %v5024 = vadd.f32 %v4441, %v4986
        %v5025 = vadd.f32 %v4442, %v4991
        %s5026 = scalar_lea.vmem %s2, 2048
        %v5027 = vld [vmem:[%s5026] sm:$0xff]
        %v5028 = vld [vmem:[%s5026 + $0x8] sm:$0xff]
        %v5029 = vld [vmem:[%s5026 + $0x10] sm:$0xff]
        %v5030 = vld [vmem:[%s5026 + $0x18] sm:$0xff]
        %v5031 = vld [vmem:[%s5026 + $0x20] sm:$0xff]
        %v5032 = vld [vmem:[%s5026 + $0x28] sm:$0xff]
        %v5033 = vld [vmem:[%s5026 + $0x30] sm:$0xff]
        %v5034 = vld [vmem:[%s5026 + $0x38] sm:$0xff]
        %v5035 = vld [vmem:[%s5026 + $0x40] sm:$0xff]
        %v5036 = vld [vmem:[%s5026 + $0x48] sm:$0xff]
        %v5037 = vld [vmem:[%s5026 + $0x50] sm:$0xff]
        %v5038 = vld [vmem:[%s5026 + $0x58] sm:$0xff]
        %v5039 = vld [vmem:[%s5026 + $0x60] sm:$0xff]
        %v5040 = vld [vmem:[%s5026 + $0x68] sm:$0xff]
        %v5041 = vld [vmem:[%s5026 + $0x70] sm:$0xff]
        %v5042 = vld [vmem:[%s5026 + $0x78] sm:$0xff]
        %v5043 = vld [vmem:[%s5026 + $0x80] sm:$0xff]
        %v5044 = vld [vmem:[%s5026 + $0x88] sm:$0xff]
        %v5045 = vld [vmem:[%s5026 + $0x90] sm:$0xff]
        %v5046 = vld [vmem:[%s5026 + $0x98] sm:$0xff]
        %v5047 = vld [vmem:[%s5026 + $0xa0] sm:$0xff]
        %v5048 = vld [vmem:[%s5026 + $0xa8] sm:$0xff]
        %v5049 = vld [vmem:[%s5026 + $0xb0] sm:$0xff]
        %v5050 = vld [vmem:[%s5026 + $0xb8] sm:$0xff]
        %v5051 = vld [vmem:[%s5026 + $0xc0] sm:$0xff]
        %v5052 = vld [vmem:[%s5026 + $0xc8] sm:$0xff]
        %v5053 = vld [vmem:[%s5026 + $0xd0] sm:$0xff]
        %v5054 = vld [vmem:[%s5026 + $0xd8] sm:$0xff]
        %v5055 = vld [vmem:[%s5026 + $0xe0] sm:$0xff]
        %v5056 = vld [vmem:[%s5026 + $0xe8] sm:$0xff]
        %v5057 = vld [vmem:[%s5026 + $0xf0] sm:$0xff]
        %v5058 = vld [vmem:[%s5026 + $0xf8] sm:$0xff]
        %5060 = vset.pattern.permute.xlu0 0
        %5061 = vperm.xlu0 %5060, %v5027
        %v5062 = vpop.permute.xlu0 %5061
        %5065 = vset.pattern.permute.xlu0 0
        %5066 = vperm.xlu0 %5065, %v5028
        %v5067 = vpop.permute.xlu0 %5066
        %5070 = vset.pattern.permute.xlu0 0
        %5071 = vperm.xlu0 %5070, %v5029
        %v5072 = vpop.permute.xlu0 %5071
        %5075 = vset.pattern.permute.xlu0 0
        %5076 = vperm.xlu0 %5075, %v5030
        %v5077 = vpop.permute.xlu0 %5076
        %5080 = vset.pattern.permute.xlu0 0
        %5081 = vperm.xlu0 %5080, %v5031
        %v5082 = vpop.permute.xlu0 %5081
        %5085 = vset.pattern.permute.xlu0 0
        %5086 = vperm.xlu0 %5085, %v5032
        %v5087 = vpop.permute.xlu0 %5086
        %5090 = vset.pattern.permute.xlu0 0
        %5091 = vperm.xlu0 %5090, %v5033
        %v5092 = vpop.permute.xlu0 %5091
        %5095 = vset.pattern.permute.xlu0 0
        %5096 = vperm.xlu0 %5095, %v5034
        %v5097 = vpop.permute.xlu0 %5096
        %5100 = vset.pattern.permute.xlu0 0
        %5101 = vperm.xlu0 %5100, %v5035
        %v5102 = vpop.permute.xlu0 %5101
        %5105 = vset.pattern.permute.xlu0 0
        %5106 = vperm.xlu0 %5105, %v5036
        %v5107 = vpop.permute.xlu0 %5106
        %5110 = vset.pattern.permute.xlu0 0
        %5111 = vperm.xlu0 %5110, %v5037
        %v5112 = vpop.permute.xlu0 %5111
        %5115 = vset.pattern.permute.xlu0 0
        %5116 = vperm.xlu0 %5115, %v5038
        %v5117 = vpop.permute.xlu0 %5116
        %5120 = vset.pattern.permute.xlu0 0
        %5121 = vperm.xlu0 %5120, %v5039
        %v5122 = vpop.permute.xlu0 %5121
        %5125 = vset.pattern.permute.xlu0 0
        %5126 = vperm.xlu0 %5125, %v5040
        %v5127 = vpop.permute.xlu0 %5126
        %5130 = vset.pattern.permute.xlu0 0
        %5131 = vperm.xlu0 %5130, %v5041
        %v5132 = vpop.permute.xlu0 %5131
        %5135 = vset.pattern.permute.xlu0 0
        %5136 = vperm.xlu0 %5135, %v5042
        %v5137 = vpop.permute.xlu0 %5136
        %5140 = vset.pattern.permute.xlu0 0
        %5141 = vperm.xlu0 %5140, %v5043
        %v5142 = vpop.permute.xlu0 %5141
        %5145 = vset.pattern.permute.xlu0 0
        %5146 = vperm.xlu0 %5145, %v5044
        %v5147 = vpop.permute.xlu0 %5146
        %5150 = vset.pattern.permute.xlu0 0
        %5151 = vperm.xlu0 %5150, %v5045
        %v5152 = vpop.permute.xlu0 %5151
        %5155 = vset.pattern.permute.xlu0 0
        %5156 = vperm.xlu0 %5155, %v5046
        %v5157 = vpop.permute.xlu0 %5156
        %5160 = vset.pattern.permute.xlu0 0
        %5161 = vperm.xlu0 %5160, %v5047
        %v5162 = vpop.permute.xlu0 %5161
        %5165 = vset.pattern.permute.xlu0 0
        %5166 = vperm.xlu0 %5165, %v5048
        %v5167 = vpop.permute.xlu0 %5166
        %5170 = vset.pattern.permute.xlu0 0
        %5171 = vperm.xlu0 %5170, %v5049
        %v5172 = vpop.permute.xlu0 %5171
        %5175 = vset.pattern.permute.xlu0 0
        %5176 = vperm.xlu0 %5175, %v5050
        %v5177 = vpop.permute.xlu0 %5176
        %5180 = vset.pattern.permute.xlu0 0
        %5181 = vperm.xlu0 %5180, %v5051
        %v5182 = vpop.permute.xlu0 %5181
        %5185 = vset.pattern.permute.xlu0 0
        %5186 = vperm.xlu0 %5185, %v5052
        %v5187 = vpop.permute.xlu0 %5186
        %5190 = vset.pattern.permute.xlu0 0
        %5191 = vperm.xlu0 %5190, %v5053
        %v5192 = vpop.permute.xlu0 %5191
        %5195 = vset.pattern.permute.xlu0 0
        %5196 = vperm.xlu0 %5195, %v5054
        %v5197 = vpop.permute.xlu0 %5196
        %5200 = vset.pattern.permute.xlu0 0
        %5201 = vperm.xlu0 %5200, %v5055
        %v5202 = vpop.permute.xlu0 %5201
        %5205 = vset.pattern.permute.xlu0 0
        %5206 = vperm.xlu0 %5205, %v5056
        %v5207 = vpop.permute.xlu0 %5206
        %5210 = vset.pattern.permute.xlu0 0
        %5211 = vperm.xlu0 %5210, %v5057
        %v5212 = vpop.permute.xlu0 %5211
        %5215 = vset.pattern.permute.xlu0 0
        %5216 = vperm.xlu0 %5215, %v5058
        %v5217 = vpop.permute.xlu0 %5216
        %v5219 = vmul.f32 %v1524, %v5062
        %v5220 = vmul.f32 %v1523, %v5067
        %v5221 = vmul.f32 %v1522, %v5072
        %v5222 = vmul.f32 %v1521, %v5077
        %v5223 = vmul.f32 %v1520, %v5082
        %v5224 = vmul.f32 %v1519, %v5087
        %v5225 = vmul.f32 %v1518, %v5092
        %v5226 = vmul.f32 %v1517, %v5097
        %v5227 = vmul.f32 %v1516, %v5102
        %v5228 = vmul.f32 %v1515, %v5107
        %v5229 = vmul.f32 %v1514, %v5112
        %v5230 = vmul.f32 %v1513, %v5117
        %v5231 = vmul.f32 %v1512, %v5122
        %v5232 = vmul.f32 %v1511, %v5127
        %v5233 = vmul.f32 %v1510, %v5132
        %v5234 = vmul.f32 %v1509, %v5137
        %v5235 = vmul.f32 %v1508, %v5142
        %v5236 = vmul.f32 %v1507, %v5147
        %v5237 = vmul.f32 %v1506, %v5152
        %v5238 = vmul.f32 %v1505, %v5157
        %v5239 = vmul.f32 %v1504, %v5162
        %v5240 = vmul.f32 %v1503, %v5167
        %v5241 = vmul.f32 %v1502, %v5172
        %v5242 = vmul.f32 %v1501, %v5177
        %v5243 = vmul.f32 %v1500, %v5182
        %v5244 = vmul.f32 %v1499, %v5187
        %v5245 = vmul.f32 %v1498, %v5192
        %v5246 = vmul.f32 %v1497, %v5197
        %v5247 = vmul.f32 %v1496, %v5202
        %v5248 = vmul.f32 %v1527, %v5207
        %v5249 = vmul.f32 %v1526, %v5212
        %v5250 = vmul.f32 %v1525, %v5217
        %s5251 = scalar_lea.vmem %s3, 32
        %v5252 = vld [vmem:[%s5251] sm:$0x7]
        %v5254 = vsel %vm813, %v5219, 0
        %v5257 = vsel %vm813, %v5220, 0
        %v5260 = vsel %vm813, %v5221, 0
        %v5263 = vsel %vm813, %v5222, 0
        %v5266 = vsel %vm813, %v5223, 0
        %v5269 = vsel %vm813, %v5224, 0
        %v5272 = vsel %vm813, %v5225, 0
        %v5275 = vsel %vm813, %v5226, 0
        %v5278 = vsel %vm813, %v5227, 0
        %v5281 = vsel %vm813, %v5228, 0
        %v5284 = vsel %vm813, %v5229, 0
        %v5287 = vsel %vm813, %v5230, 0
        %v5290 = vsel %vm813, %v5231, 0
        %v5293 = vsel %vm813, %v5232, 0
        %v5296 = vsel %vm813, %v5233, 0
        %v5299 = vsel %vm813, %v5234, 0
        %v5302 = vsel %vm813, %v5235, 0
        %v5305 = vsel %vm813, %v5236, 0
        %v5308 = vsel %vm813, %v5237, 0
        %v5311 = vsel %vm813, %v5238, 0
        %v5314 = vsel %vm813, %v5239, 0
        %v5317 = vsel %vm813, %v5240, 0
        %v5320 = vsel %vm813, %v5241, 0
        %v5323 = vsel %vm813, %v5242, 0
        %v5326 = vsel %vm813, %v5243, 0
        %v5329 = vsel %vm813, %v5244, 0
        %v5332 = vsel %vm813, %v5245, 0
        %v5335 = vsel %vm813, %v5246, 0
        %v5338 = vsel %vm813, %v5247, 0
        %v5341 = vsel %vm813, %v5248, 0
        %v5344 = vsel %vm813, %v5249, 0
        %v5347 = vsel %vm813, %v5250, 0
        %v5350 = vsel %vm910, %v5252, 0
        %5352 = vmatprep.subr.mxu0 0.0
        %5353 = vmatpush1.msra.mxu0 %v5350
        %5354 = vmatprep.subr.mxu0 0.0
        %5355 = vmatpush1.msra.mxu0 0.0
        %5356 = vmatprep.subr.mxu0 0.0
        %5357 = vmatpush1.msra.mxu0 0.0
        %5358 = vmatprep.subr.mxu0 0.0
        %5359 = vmatpush1.msra.mxu0 0.0
        %5360 = vmatprep.subr.mxu0 0.0
        %5361 = vmatpush1.msra.mxu0 0.0
        %5362 = vmatprep.subr.mxu0 0.0
        %5363 = vmatpush1.msra.mxu0 0.0
        %5364 = vmatprep.subr.mxu0 0.0
        %5365 = vmatpush1.msra.mxu0 0.0
        %5366 = vmatprep.subr.mxu0 0.0
        %5367 = vmatpush1.msra.mxu0 0.0
        %5368 = vmatprep.subr.mxu0 0.0
        %5369 = vmatpush1.msra.mxu0 0.0
        %5370 = vmatprep.subr.mxu0 0.0
        %5371 = vmatpush1.msra.mxu0 0.0
        %5372 = vmatprep.subr.mxu0 0.0
        %5373 = vmatpush1.msra.mxu0 0.0
        %5374 = vmatprep.subr.mxu0 0.0
        %5375 = vmatpush1.msra.mxu0 0.0
        %5376 = vmatprep.subr.mxu0 0.0
        %5377 = vmatpush1.msra.mxu0 0.0
        %5378 = vmatprep.subr.mxu0 0.0
        %5379 = vmatpush1.msra.mxu0 0.0
        %5380 = vmatprep.subr.mxu0 0.0
        %5381 = vmatpush1.msra.mxu0 0.0
        %5382 = vmatprep.subr.mxu0 0.0
        %5383 = vmatpush1.msra.mxu0 0.0
        %5384 = vmatprep.subr.mxu0 0.0
        %5385 = vmatpush1.msra.mxu0 0.0
        %5386 = vmatprep.subr.mxu0 0.0
        %5387 = vmatpush1.msra.mxu0 0.0
        %5388 = vmatprep.subr.mxu0 0.0
        %5389 = vmatpush1.msra.mxu0 0.0
        %5390 = vmatprep.subr.mxu0 0.0
        %5391 = vmatpush1.msra.mxu0 0.0
        %5392 = vmatprep.subr.mxu0 0.0
        %5393 = vmatpush1.msra.mxu0 0.0
        %5394 = vmatprep.subr.mxu0 0.0
        %5395 = vmatpush1.msra.mxu0 0.0
        %5396 = vmatprep.subr.mxu0 0.0
        %5397 = vmatpush1.msra.mxu0 0.0
        %5398 = vmatprep.subr.mxu0 0.0
        %5399 = vmatpush1.msra.mxu0 0.0
        %5400 = vmatprep.subr.mxu0 0.0
        %5401 = vmatpush1.msra.mxu0 0.0
        %5402 = vmatprep.subr.mxu0 0.0
        %5403 = vmatpush1.msra.mxu0 0.0
        %5404 = vmatprep.subr.mxu0 0.0
        %5405 = vmatpush1.msra.mxu0 0.0
        %5406 = vmatprep.subr.mxu0 0.0
        %5407 = vmatpush1.msra.mxu0 0.0
        %5408 = vmatprep.subr.mxu0 0.0
        %5409 = vmatpush1.msra.mxu0 0.0
        %5410 = vmatprep.subr.mxu0 0.0
        %5411 = vmatpush1.msra.mxu0 0.0
        %5412 = vmatprep.subr.mxu0 0.0
        %5413 = vmatpush1.msra.mxu0 0.0
        %5414 = vmatprep.subr.mxu0 0.0
        %5415 = vmatpush1.msra.mxu0 0.0
        %5416 = vmatprep.mubr.f32.mxu0 0.0
        %5417 = vmatmul.mubr.f32.gmra.mrb[0].mxu0 %v5254
        %v5418 = vpop.f32.mrb[0].mxu0
        %v5419 = vadd.f32 0.0, %v5418
        %v5420 = vpop.f32.mrb[0].mxu0
        %5421 = vmatprep.mubr.f32.mxu0 0.0
        %5422 = vmatmul.mubr.f32.gmra.mrb[0].mxu0 %v5257
        %v5423 = vpop.f32.mrb[0].mxu0
        %v5424 = vadd.f32 0.0, %v5423
        %v5425 = vpop.f32.mrb[0].mxu0
        %5426 = vmatprep.mubr.f32.mxu0 0.0
        %5427 = vmatmul.mubr.f32.gmra.mrb[0].mxu0 %v5260
        %v5428 = vpop.f32.mrb[0].mxu0
        %v5429 = vadd.f32 0.0, %v5428
        %v5430 = vpop.f32.mrb[0].mxu0
        %5431 = vmatprep.mubr.f32.mxu0 0.0
        %5432 = vmatmul.mubr.f32.gmra.mrb[0].mxu0 %v5263
        %v5433 = vpop.f32.mrb[0].mxu0
        %v5434 = vadd.f32 0.0, %v5433
        %v5435 = vpop.f32.mrb[0].mxu0
        %5436 = vmatprep.mubr.f32.mxu0 0.0
        %5437 = vmatmul.mubr.f32.gmra.mrb[0].mxu0 %v5266
        %v5438 = vpop.f32.mrb[0].mxu0
        %v5439 = vadd.f32 0.0, %v5438
        %v5440 = vpop.f32.mrb[0].mxu0
        %5441 = vmatprep.mubr.f32.mxu0 0.0
        %5442 = vmatmul.mubr.f32.gmra.mrb[0].mxu0 %v5269
        %v5443 = vpop.f32.mrb[0].mxu0
        %v5444 = vadd.f32 0.0, %v5443
        %v5445 = vpop.f32.mrb[0].mxu0
        %5446 = vmatprep.mubr.f32.mxu0 0.0
        %5447 = vmatmul.mubr.f32.gmra.mrb[0].mxu0 %v5272
        %v5448 = vpop.f32.mrb[0].mxu0
        %v5449 = vadd.f32 0.0, %v5448
        %v5450 = vpop.f32.mrb[0].mxu0
        %5451 = vmatprep.mubr.f32.mxu0 0.0
        %5452 = vmatmul.mubr.f32.gmra.mrb[0].mxu0 %v5275
        %v5453 = vpop.f32.mrb[0].mxu0
        %v5454 = vadd.f32 0.0, %v5453
        %v5455 = vpop.f32.mrb[0].mxu0
        %5456 = vmatprep.mubr.f32.mxu0 0.0
        %5457 = vmatmul.mubr.f32.gmra.mrb[0].mxu0 %v5278
        %v5458 = vpop.f32.mrb[0].mxu0
        %v5459 = vadd.f32 0.0, %v5458
        %v5460 = vpop.f32.mrb[0].mxu0
        %5461 = vmatprep.mubr.f32.mxu0 0.0
        %5462 = vmatmul.mubr.f32.gmra.mrb[0].mxu0 %v5281
        %v5463 = vpop.f32.mrb[0].mxu0
        %v5464 = vadd.f32 0.0, %v5463
        %v5465 = vpop.f32.mrb[0].mxu0
        %5466 = vmatprep.mubr.f32.mxu0 0.0
        %5467 = vmatmul.mubr.f32.gmra.mrb[0].mxu0 %v5284
        %v5468 = vpop.f32.mrb[0].mxu0
        %v5469 = vadd.f32 0.0, %v5468
        %v5470 = vpop.f32.mrb[0].mxu0
        %5471 = vmatprep.mubr.f32.mxu0 0.0
        %5472 = vmatmul.mubr.f32.gmra.mrb[0].mxu0 %v5287
        %v5473 = vpop.f32.mrb[0].mxu0
        %v5474 = vadd.f32 0.0, %v5473
        %v5475 = vpop.f32.mrb[0].mxu0
        %5476 = vmatprep.mubr.f32.mxu0 0.0
        %5477 = vmatmul.mubr.f32.gmra.mrb[0].mxu0 %v5290
        %v5478 = vpop.f32.mrb[0].mxu0
        %v5479 = vadd.f32 0.0, %v5478
        %v5480 = vpop.f32.mrb[0].mxu0
        %5481 = vmatprep.mubr.f32.mxu0 0.0
        %5482 = vmatmul.mubr.f32.gmra.mrb[0].mxu0 %v5293
        %v5483 = vpop.f32.mrb[0].mxu0
        %v5484 = vadd.f32 0.0, %v5483
        %v5485 = vpop.f32.mrb[0].mxu0
        %5486 = vmatprep.mubr.f32.mxu0 0.0
        %5487 = vmatmul.mubr.f32.gmra.mrb[0].mxu0 %v5296
        %v5488 = vpop.f32.mrb[0].mxu0
        %v5489 = vadd.f32 0.0, %v5488
        %v5490 = vpop.f32.mrb[0].mxu0
        %5491 = vmatprep.mubr.f32.mxu0 0.0
        %5492 = vmatmul.mubr.f32.gmra.mrb[0].mxu0 %v5299
        %v5493 = vpop.f32.mrb[0].mxu0
        %v5494 = vadd.f32 0.0, %v5493
        %v5495 = vpop.f32.mrb[0].mxu0
        %5496 = vmatprep.mubr.f32.mxu0 0.0
        %5497 = vmatmul.mubr.f32.gmra.mrb[0].mxu0 %v5302
        %v5498 = vpop.f32.mrb[0].mxu0
        %v5499 = vadd.f32 0.0, %v5498
        %v5500 = vpop.f32.mrb[0].mxu0
        %5501 = vmatprep.mubr.f32.mxu0 0.0
        %5502 = vmatmul.mubr.f32.gmra.mrb[0].mxu0 %v5305
        %v5503 = vpop.f32.mrb[0].mxu0
        %v5504 = vadd.f32 0.0, %v5503
        %v5505 = vpop.f32.mrb[0].mxu0
        %5506 = vmatprep.mubr.f32.mxu0 0.0
        %5507 = vmatmul.mubr.f32.gmra.mrb[0].mxu0 %v5308
        %v5508 = vpop.f32.mrb[0].mxu0
        %v5509 = vadd.f32 0.0, %v5508
        %v5510 = vpop.f32.mrb[0].mxu0
        %5511 = vmatprep.mubr.f32.mxu0 0.0
        %5512 = vmatmul.mubr.f32.gmra.mrb[0].mxu0 %v5311
        %v5513 = vpop.f32.mrb[0].mxu0
        %v5514 = vadd.f32 0.0, %v5513
        %v5515 = vpop.f32.mrb[0].mxu0
        %5516 = vmatprep.mubr.f32.mxu0 0.0
        %5517 = vmatmul.mubr.f32.gmra.mrb[0].mxu0 %v5314
        %v5518 = vpop.f32.mrb[0].mxu0
        %v5519 = vadd.f32 0.0, %v5518
        %v5520 = vpop.f32.mrb[0].mxu0
        %5521 = vmatprep.mubr.f32.mxu0 0.0
        %5522 = vmatmul.mubr.f32.gmra.mrb[0].mxu0 %v5317
        %v5523 = vpop.f32.mrb[0].mxu0
        %v5524 = vadd.f32 0.0, %v5523
        %v5525 = vpop.f32.mrb[0].mxu0
        %5526 = vmatprep.mubr.f32.mxu0 0.0
        %5527 = vmatmul.mubr.f32.gmra.mrb[0].mxu0 %v5320
        %v5528 = vpop.f32.mrb[0].mxu0
        %v5529 = vadd.f32 0.0, %v5528
        %v5530 = vpop.f32.mrb[0].mxu0
        %5531 = vmatprep.mubr.f32.mxu0 0.0
        %5532 = vmatmul.mubr.f32.gmra.mrb[0].mxu0 %v5323
        %v5533 = vpop.f32.mrb[0].mxu0
        %v5534 = vadd.f32 0.0, %v5533
        %v5535 = vpop.f32.mrb[0].mxu0
        %5536 = vmatprep.mubr.f32.mxu0 0.0
        %5537 = vmatmul.mubr.f32.gmra.mrb[0].mxu0 %v5326
        %v5538 = vpop.f32.mrb[0].mxu0
        %v5539 = vadd.f32 0.0, %v5538
        %v5540 = vpop.f32.mrb[0].mxu0
        %5541 = vmatprep.mubr.f32.mxu0 0.0
        %5542 = vmatmul.mubr.f32.gmra.mrb[0].mxu0 %v5329
        %v5543 = vpop.f32.mrb[0].mxu0
        %v5544 = vadd.f32 0.0, %v5543
        %v5545 = vpop.f32.mrb[0].mxu0
        %5546 = vmatprep.mubr.f32.mxu0 0.0
        %5547 = vmatmul.mubr.f32.gmra.mrb[0].mxu0 %v5332
        %v5548 = vpop.f32.mrb[0].mxu0
        %v5549 = vadd.f32 0.0, %v5548
        %v5550 = vpop.f32.mrb[0].mxu0
        %5551 = vmatprep.mubr.f32.mxu0 0.0
        %5552 = vmatmul.mubr.f32.gmra.mrb[0].mxu0 %v5335
        %v5553 = vpop.f32.mrb[0].mxu0
        %v5554 = vadd.f32 0.0, %v5553
        %v5555 = vpop.f32.mrb[0].mxu0
        %5556 = vmatprep.mubr.f32.mxu0 0.0
        %5557 = vmatmul.mubr.f32.gmra.mrb[0].mxu0 %v5338
        %v5558 = vpop.f32.mrb[0].mxu0
        %v5559 = vadd.f32 0.0, %v5558
        %v5560 = vpop.f32.mrb[0].mxu0
        %5561 = vmatprep.mubr.f32.mxu0 0.0
        %5562 = vmatmul.mubr.f32.gmra.mrb[0].mxu0 %v5341
        %v5563 = vpop.f32.mrb[0].mxu0
        %v5564 = vadd.f32 0.0, %v5563
        %v5565 = vpop.f32.mrb[0].mxu0
        %5566 = vmatprep.mubr.f32.mxu0 0.0
        %5567 = vmatmul.mubr.f32.gmra.mrb[0].mxu0 %v5344
        %v5568 = vpop.f32.mrb[0].mxu0
        %v5569 = vadd.f32 0.0, %v5568
        %v5570 = vpop.f32.mrb[0].mxu0
        %5571 = vmatprep.mubr.f32.mxu0 0.0
        %5572 = vmatmul.mubr.f32.gmra.mrb[0].mxu0 %v5347
        %v5573 = vpop.f32.mrb[0].mxu0
        %v5574 = vadd.f32 0.0, %v5573
        %v5575 = vpop.f32.mrb[0].mxu0
        %5576 = vdwg.mxu0
        %v5577 = vadd.f32 %v4994, %v5419
        %v5578 = vadd.f32 %v4995, %v5424
        %v5579 = vadd.f32 %v4996, %v5429
        %v5580 = vadd.f32 %v4997, %v5434
        %v5581 = vadd.f32 %v4998, %v5439
        %v5582 = vadd.f32 %v4999, %v5444
        %v5583 = vadd.f32 %v5000, %v5449
        %v5584 = vadd.f32 %v5001, %v5454
        %v5585 = vadd.f32 %v5002, %v5459
        %v5586 = vadd.f32 %v5003, %v5464
        %v5587 = vadd.f32 %v5004, %v5469
        %v5588 = vadd.f32 %v5005, %v5474
        %v5589 = vadd.f32 %v5006, %v5479
        %v5590 = vadd.f32 %v5007, %v5484
        %v5591 = vadd.f32 %v5008, %v5489
        %v5592 = vadd.f32 %v5009, %v5494
        %v5593 = vadd.f32 %v5010, %v5499
        %v5594 = vadd.f32 %v5011, %v5504
        %v5595 = vadd.f32 %v5012, %v5509
        %v5596 = vadd.f32 %v5013, %v5514
        %v5597 = vadd.f32 %v5014, %v5519
        %v5598 = vadd.f32 %v5015, %v5524
        %v5599 = vadd.f32 %v5016, %v5529
        %v5600 = vadd.f32 %v5017, %v5534
        %v5601 = vadd.f32 %v5018, %v5539
        %v5602 = vadd.f32 %v5019, %v5544
        %v5603 = vadd.f32 %v5020, %v5549
        %v5604 = vadd.f32 %v5021, %v5554
        %v5605 = vadd.f32 %v5022, %v5559
        %v5606 = vadd.f32 %v5023, %v5564
        %v5607 = vadd.f32 %v5024, %v5569
        %v5608 = vadd.f32 %v5025, %v5574
        %v5609 = vld [vmem:[%s4] sm:$0x1]
        %v5611 = vlaneseq
        %v5612 = vshrl.u32 %v5611, 7
        %v5613 = vsub.s32 0, %v5612
        %v5614 = vrot.slane %v5609, %v5613
        %v5616 = vadd.f32 %v5577, %v5614
        %v5617 = vadd.f32 %v5578, %v5614
        %v5618 = vadd.f32 %v5579, %v5614
        %v5619 = vadd.f32 %v5580, %v5614
        %v5620 = vadd.f32 %v5581, %v5614
        %v5621 = vadd.f32 %v5582, %v5614
        %v5622 = vadd.f32 %v5583, %v5614
        %v5623 = vadd.f32 %v5584, %v5614
        %v5624 = vadd.f32 %v5585, %v5614
        %v5625 = vadd.f32 %v5586, %v5614
        %v5626 = vadd.f32 %v5587, %v5614
        %v5627 = vadd.f32 %v5588, %v5614
        %v5628 = vadd.f32 %v5589, %v5614
        %v5629 = vadd.f32 %v5590, %v5614
        %v5630 = vadd.f32 %v5591, %v5614
        %v5631 = vadd.f32 %v5592, %v5614
        %v5632 = vadd.f32 %v5593, %v5614
        %v5633 = vadd.f32 %v5594, %v5614
        %v5634 = vadd.f32 %v5595, %v5614
        %v5635 = vadd.f32 %v5596, %v5614
        %v5636 = vadd.f32 %v5597, %v5614
        %v5637 = vadd.f32 %v5598, %v5614
        %v5638 = vadd.f32 %v5599, %v5614
        %v5639 = vadd.f32 %v5600, %v5614
        %v5640 = vadd.f32 %v5601, %v5614
        %v5641 = vadd.f32 %v5602, %v5614
        %v5642 = vadd.f32 %v5603, %v5614
        %v5643 = vadd.f32 %v5604, %v5614
        %v5644 = vadd.f32 %v5605, %v5614
        %v5645 = vadd.f32 %v5606, %v5614
        %v5646 = vadd.f32 %v5607, %v5614
        %v5647 = vadd.f32 %v5608, %v5614
        %v5648 = vmax.f32 %v5616, 0.0
        %v5649 = vmax.f32 %v5617, 0.0
        %v5650 = vmax.f32 %v5618, 0.0
        %v5651 = vmax.f32 %v5619, 0.0
        %v5652 = vmax.f32 %v5620, 0.0
        %v5653 = vmax.f32 %v5621, 0.0
        %v5654 = vmax.f32 %v5622, 0.0
        %v5655 = vmax.f32 %v5623, 0.0
        %v5656 = vmax.f32 %v5624, 0.0
        %v5657 = vmax.f32 %v5625, 0.0
        %v5658 = vmax.f32 %v5626, 0.0
        %v5659 = vmax.f32 %v5627, 0.0
        %v5660 = vmax.f32 %v5628, 0.0
        %v5661 = vmax.f32 %v5629, 0.0
        %v5662 = vmax.f32 %v5630, 0.0
        %v5663 = vmax.f32 %v5631, 0.0
        %v5664 = vmax.f32 %v5632, 0.0
        %v5665 = vmax.f32 %v5633, 0.0
        %v5666 = vmax.f32 %v5634, 0.0
        %v5667 = vmax.f32 %v5635, 0.0
        %v5668 = vmax.f32 %v5636, 0.0
        %v5669 = vmax.f32 %v5637, 0.0
        %v5670 = vmax.f32 %v5638, 0.0
        %v5671 = vmax.f32 %v5639, 0.0
        %v5672 = vmax.f32 %v5640, 0.0
        %v5673 = vmax.f32 %v5641, 0.0
        %v5674 = vmax.f32 %v5642, 0.0
        %v5675 = vmax.f32 %v5643, 0.0
        %v5676 = vmax.f32 %v5644, 0.0
        %v5677 = vmax.f32 %v5645, 0.0
        %v5678 = vmax.f32 %v5646, 0.0
        %v5679 = vmax.f32 %v5647, 0.0
        %5680 = vst [vmem:[%s217] sm:$0xff] %v5648
        %5681 = vst [vmem:[%s217 + $0x8] sm:$0xff] %v5649
        %5682 = vst [vmem:[%s217 + $0x10] sm:$0xff] %v5650
        %5683 = vst [vmem:[%s217 + $0x18] sm:$0xff] %v5651
        %5684 = vst [vmem:[%s217 + $0x20] sm:$0xff] %v5652
        %5685 = vst [vmem:[%s217 + $0x28] sm:$0xff] %v5653
        %5686 = vst [vmem:[%s217 + $0x30] sm:$0xff] %v5654
        %5687 = vst [vmem:[%s217 + $0x38] sm:$0xff] %v5655
        %5688 = vst [vmem:[%s217 + $0x40] sm:$0xff] %v5656
        %5689 = vst [vmem:[%s217 + $0x48] sm:$0xff] %v5657
        %5690 = vst [vmem:[%s217 + $0x50] sm:$0xff] %v5658
        %5691 = vst [vmem:[%s217 + $0x58] sm:$0xff] %v5659
        %5692 = vst [vmem:[%s217 + $0x60] sm:$0xff] %v5660
        %5693 = vst [vmem:[%s217 + $0x68] sm:$0xff] %v5661
        %5694 = vst [vmem:[%s217 + $0x70] sm:$0xff] %v5662
        %5695 = vst [vmem:[%s217 + $0x78] sm:$0xff] %v5663
        %5696 = vst [vmem:[%s217 + $0x80] sm:$0xff] %v5664
        %5697 = vst [vmem:[%s217 + $0x88] sm:$0xff] %v5665
        %5698 = vst [vmem:[%s217 + $0x90] sm:$0xff] %v5666
        %5699 = vst [vmem:[%s217 + $0x98] sm:$0xff] %v5667
        %5700 = vst [vmem:[%s217 + $0xa0] sm:$0xff] %v5668
        %5701 = vst [vmem:[%s217 + $0xa8] sm:$0xff] %v5669
        %5702 = vst [vmem:[%s217 + $0xb0] sm:$0xff] %v5670
        %5703 = vst [vmem:[%s217 + $0xb8] sm:$0xff] %v5671
        %5704 = vst [vmem:[%s217 + $0xc0] sm:$0xff] %v5672
        %5705 = vst [vmem:[%s217 + $0xc8] sm:$0xff] %v5673
        %5706 = vst [vmem:[%s217 + $0xd0] sm:$0xff] %v5674
        %5707 = vst [vmem:[%s217 + $0xd8] sm:$0xff] %v5675
        %5708 = vst [vmem:[%s217 + $0xe0] sm:$0xff] %v5676
        %5709 = vst [vmem:[%s217 + $0xe8] sm:$0xff] %v5677
        %5710 = vst [vmem:[%s217 + $0xf0] sm:$0xff] %v5678
        %5711 = vst [vmem:[%s217 + $0xf8] sm:$0xff] %v5679
        %s5712 = sand.u32 %s137, 1
        %s5713 = scalar_lea.sflag [#allocation3], %s5712
        %s5714 = sand.u32 %s137, 1
        %s5715 = smul.addr %s5714, 256
        %s5716 = scalar_lea.vmem [#allocation2], %s5715
        // Predicated region
        $region41: #{tpu_custom_call.1} parent=39 // pred_check
          %p5717 = pneg %p147
        $region42: #{tpu_custom_call.1} parent=39 // pred_check_branch
          %5719 = sbr.rel (%p5717) target = $region44
        $region43: #{tpu_custom_call.1} parent=39 // pred_region
          %s5721 = ssub.s32 4096, 4096
          %5722 = vsyncadd %s5713, %s5721
          %s5723 = smul.addr %s19, 32
          %s5724 = smul.addr %s5723, 128
          %s5725 = scalar_lea.hbm %s5, %s5724
          %s5726 = sshll.u32 %s5716, 4
          %s5727 = int_to_ptr.vmem [resolvable:$true] %s5726
          %5732 = dma.vmem_to_hbm [thread:$0]  %s5727, 4096, %s5725, %s5713, 128, 128, 8
        $region44: #{tpu_custom_call.1} parent=39 // pred_fallthru
          _
      $region40: #{tpu_custom_call.1} parent=5 // pred_fallthru
        _
      %p5733 = scmp.le.s32.totalorder 2, %s14
      // Predicated region
      $region45: #{tpu_custom_call.1} parent=5 // pred_check
        %p5734 = pneg %p5733
      $region46: #{tpu_custom_call.1} parent=5 // pred_check_branch
        %5736 = sbr.rel (%p5734) target = $region48
      $region47: #{tpu_custom_call.1} parent=5 // pred_region
        %s5737 = ssub.s32 %s14, 2
        // Predicated region
        $region49: #{tpu_custom_call.1} parent=47 // pred_check
          %p5738 = pneg %p153
        $region50: #{tpu_custom_call.1} parent=47 // pred_check_branch
          %5740 = sbr.rel (%p5738) target = $region52
        $region51: #{tpu_custom_call.1} parent=47 // pred_region
          %s5741 = sand.u32 %s138, 1
          %s5742 = scalar_lea.sflag [#allocation3], %s5741
          %s5743 = sand.u32 %s138, 1
          %s5744 = smul.addr %s5743, 256
          %s5745 = scalar_lea.vmem [#allocation2], %s5744
          %5746 = dma.done %s5742, 4096
        $region52: #{tpu_custom_call.1} parent=47 // pred_fallthru
          _
      $region48: #{tpu_custom_call.1} parent=5 // pred_fallthru
        _
    $region6: #{tpu_custom_call.1} parent=1 // loop_footer
      %s18 = sadd.s32 1, %s14
    $region7: #{tpu_custom_call.1} parent=1 // loop_footer_branch
      %13 = sbr.rel target = $region3
    $region8: #{tpu_custom_call.1} parent=1 // loop_exit
      _
    %5747 = vsyncpa [#allocation3], 1
    %s5748 = scalar_lea.sflag [#allocation3], 1
    %5749 = vsyncpa %s5748, 1

</llo_original>
